<compile_context>
chip_gen: v5e
topology: v5e:2x2
jax: 0.10.0
libtpu: 0.0.40
codegen_flags: <defaults>
</compile_context>

<pallas_src>
import functools

import jax
import jax.numpy as jnp
from jax.experimental import pallas as pl
from jax.experimental.pallas import tpu as pltpu


def _round_up(x, m):
    return (x + m - 1) // m * m


# ----------------------------------------------------------------------------
# Kernel
# ----------------------------------------------------------------------------
def _seblock_kernel(x_ref, w_ref, b_ref, o_ref, qkv_ref, *, tn, cq, l, l_pad):
    """One grid step handles TN local blocks of Lp positions each.

    x_ref  : (Cq, TN*Lp)  f32  zero-padded channels / positions
    w_ref  : (3Cq, Cq)    f32  fused [q; k; v] 1x1-conv weights (8-aligned rows)
    b_ref  : (3Cq, 1)     f32  fused biases
    o_ref  : (Cq, TN*Lp)  f32
    qkv_ref: (3Cq, TN*Lp) f32  VMEM scratch
    """
    # Batched q/k/v projection for every block of this grid step: one MXU call,
    # bias broadcast once (outside the per-block loop).
    qkv_ref[...] = (
        jnp.dot(w_ref[...], x_ref[...], preferred_element_type=jnp.float32)
        + b_ref[...]
    )

    if l_pad != l:
        # Padded key positions must receive zero attention weight.
        col = jax.lax.broadcasted_iota(jnp.int32, (l_pad, l_pad), 1)
        key_bias = jnp.where(col < l, 0.0, -1e30).astype(jnp.float32)
    else:
        key_bias = None

    def one_block(t, carry):
        base = pl.multiple_of(t * l_pad, 128)
        q = qkv_ref[pl.ds(0 * cq, cq), pl.ds(base, l_pad)].astype(jnp.bfloat16)
        k = qkv_ref[pl.ds(1 * cq, cq), pl.ds(base, l_pad)].astype(jnp.bfloat16)
        v = qkv_ref[pl.ds(2 * cq, cq), pl.ds(base, l_pad)].astype(jnp.bfloat16)

        # sim[i, j] = sum_c q[c, i] * k[c, j]   (bf16 operands, f32 accumulate)
        sim = jax.lax.dot_general(q, k, (((0,), (0,)), ((), ())),
                                  preferred_element_type=jnp.float32)
        if key_bias is not None:
            sim = sim + key_bias

        # f32 softmax: normalize p before the bf16 value matmul.
        p = jnp.exp(sim - jnp.max(sim, axis=-1, keepdims=True))
        inv = pl.reciprocal(jnp.sum(p, axis=-1, keepdims=True))
        p = (p * inv).astype(jnp.bfloat16)

        # ctx[c, i] = sum_j v[c, j] * p[i, j]
        ctx = jax.lax.dot_general(v, p, (((1,), (1,)), ((), ())),
                                  preferred_element_type=jnp.float32)

        out = ctx + x_ref[:, pl.ds(base, l_pad)]          # exact f32 residual
        o_ref[:, pl.ds(base, l_pad)] = out.astype(o_ref.dtype)
        return carry

    # Bounded unroll: keeps at most two (Lp, Lp) intermediates live.
    unroll = tn if tn <= 2 else (2 if tn % 2 == 0 else 1)
    jax.lax.fori_loop(0, tn, one_block, 0, unroll=unroll)


# ----------------------------------------------------------------------------
# Generation-aware tiling policy
# ----------------------------------------------------------------------------
def _vmem_policy():
    """(tiling budget, vmem_limit_bytes, min grid steps) per TPU generation."""
    budget, limit, min_steps = 20 << 20, 40 << 20, 4        # safe on v7x (64 MiB)
    try:
        cap = int(getattr(pltpu.get_tpu_info(), "vmem_capacity_bytes", 0))
        if cap >= 100 << 20:                                # v5e / v6e (128 MiB)
            budget, limit, min_steps = 48 << 20, 96 << 20, 2
    except Exception:
        pass
    return budget, limit, min_steps


def _vmem_estimate(tn, cq, l_pad, unroll):
    f32, bf16 = 4, 2
    io = 2 * 2 * cq * tn * l_pad * f32          # double-buffered x + out blocks
    qkv = 3 * cq * tn * l_pad * f32             # projection scratch
    per_blk = l_pad * l_pad * (2 * f32 + bf16)  # sim / p f32 + bf16 p
    wgt = (3 * cq * cq + 3 * cq) * f32
    return io + qkv + unroll * per_blk + wgt


def _choose_tn(n, cq, l_pad, budget, min_steps):
    target = min(min_steps, n)
    best = 1
    for tn in range(1, n + 1):
        if n % tn:
            continue
        if n // tn < target:
            continue
        if _vmem_estimate(tn, cq, l_pad, min(tn, 2)) > budget:
            continue
        best = max(best, tn)
    return best


def _attention_pallas(x2d, w_fused, b_fused, *, cq, l, l_pad, n):
    budget, limit, min_steps = _vmem_policy()
    tn = _choose_tn(n, cq, l_pad, budget, min_steps)

    cost = pl.CostEstimate(
        flops=2 * n * (3 * cq * cq * l_pad + 2 * cq * l_pad * l_pad),
        transcendentals=n * l_pad * l_pad,
        bytes_accessed=4 * (2 * cq * n * l_pad + 3 * cq * cq + 3 * cq),
    )
    kernel = functools.partial(_seblock_kernel, tn=tn, cq=cq, l=l, l_pad=l_pad)

    return pl.pallas_call(
        kernel,
        out_shape=jax.ShapeDtypeStruct((cq, n * l_pad), jnp.float32),
        grid_spec=pltpu.PrefetchScalarGridSpec(
            num_scalar_prefetch=0,
            grid=(n // tn,),
            in_specs=[
                pl.BlockSpec((cq, tn * l_pad), lambda g: (0, g)),
                pl.BlockSpec((3 * cq, cq), lambda g: (0, 0)),
                pl.BlockSpec((3 * cq, 1), lambda g: (0, 0)),
            ],
            out_specs=pl.BlockSpec((cq, tn * l_pad), lambda g: (0, g)),
            scratch_shapes=[pltpu.VMEM((3 * cq, tn * l_pad), jnp.float32)],
        ),
        compiler_params=pltpu.CompilerParams(
            dimension_semantics=("parallel",),
            vmem_limit_bytes=int(limit)),
        cost_estimate=cost,
    )(x2d, w_fused, b_fused)


# ----------------------------------------------------------------------------
# Forward wrapper.  The per-block attention (row-softmax(Q^T K), V @ P^T,
# + residual) is invariant to any fixed permutation of its L tokens, so the
# token layout only needs to group the right (b, h-block, w-block, half)
# elements contiguously; a single transpose each way replaces the torch
# stack/split/cat chain.
# ----------------------------------------------------------------------------
@functools.partial(jax.jit, static_argnames=("scale",))
def seblock_forward(x, wq, bq, wk, bk, wv, bv, scale=1):
    """x: (B, C, H, W) NCHW with W = 2*w_half; H, w_half divisible by H//scale."""
    B, C, H, W = x.shape
    w_half = W // 2
    bs = H // scale
    sh = H // bs                       # number of h-blocks (== scale)
    sw = w_half // bs                  # number of w-blocks
    n = B * sh * sw                    # local attention blocks
    l = bs * bs * 2                    # tokens per block
    cq = _round_up(C, 8)
    l_pad = _round_up(l, 128)

    # Fused, 8-row-aligned projection weights: rows [0,Cq)=q, [Cq,2Cq)=k,
    # [2Cq,3Cq)=v; padded rows / cols are zero (mathematically inert).
    def pad_wb(wm, bvec):
        wp = jnp.zeros((cq, cq), wm.dtype).at[:C, :C].set(wm)
        bp = jnp.zeros((cq,), bvec.dtype).at[:C].set(bvec)
        return wp, bp

    wqp, bqp = pad_wb(wq, bq)
    wkp, bkp = pad_wb(wk, bk)
    wvp, bvp = pad_wb(wv, bv)
    w_fused = jnp.concatenate([wqp, wkp, wvp], axis=0)            # (3Cq, Cq)
    b_fused = jnp.concatenate([bqp, bkp, bvp], axis=0)[:, None]   # (3Cq, 1)

    # Channels-major, block-contiguous token layout (lane-dense for the kernel).
    x7 = x.reshape(B, C, sh, bs, 2, sw, bs)            # (b,c,hb,hl,half,wb,wl)
    xcm = jnp.transpose(x7, (1, 0, 2, 5, 3, 4, 6))     # (c,b,hb,wb,hl,half,wl)
    x_blk = xcm.reshape(C, n, l)
    x_blk = jnp.pad(x_blk, ((0, cq - C), (0, 0), (0, l_pad - l)))
    x2d = x_blk.reshape(cq, n * l_pad)

    out2d = _attention_pallas(x2d, w_fused, b_fused, cq=cq, l=l, l_pad=l_pad, n=n)

    out_blk = out2d.reshape(cq, n, l_pad)[:C, :, :l]
    out7 = out_blk.reshape(C, B, sh, sw, bs, 2, bs)    # (c,b,hb,wb,hl,half,wl)
    out = jnp.transpose(out7, (1, 0, 2, 4, 5, 3, 6))   # (b,c,hb,hl,half,wb,wl)
    return out.reshape(B, C, H, W)


# ----------------------------------------------------------------------------
# Pure-JAX reference (mirrors the torch code op-for-op) for validation
# ----------------------------------------------------------------------------
def seblock_reference(x, wq, bq, wk, bk, wv, bv, scale=1):
    B, C, H, W = x.shape
    w = W // 2
    bs = H // scale
    hp = jax.lax.Precision.HIGHEST

    def conv1x1(t, wgt, b):
        return jnp.einsum("oc,bchw->bohw", wgt, t, precision=hp) + b[None, :, None, None]

    value = conv1x1(x, wv, bv)
    query = conv1x1(x, wq, bq)
    key = conv1x1(x, wk, bk)

    def stack_halves(t):
        return jnp.stack([t[:, :, :, :w], t[:, :, :, w:]], axis=4)

    def locals_torch(t):
        t = jnp.concatenate(jnp.split(t, t.shape[2] // bs, axis=2), axis=0)
        t = jnp.concatenate(jnp.split(t, t.shape[3] // bs, axis=3), axis=0)
        return t

    vl = locals_torch(stack_halves(value))
    ql = locals_torch(stack_halves(query))
    kl = locals_torch(stack_halves(key))

    n = vl.shape[0]
    vlf = vl.reshape(n, C, -1)
    qlf = ql.reshape(n, C, -1).transpose(0, 2, 1)
    klf = kl.reshape(n, C, -1)
    sim = jnp.einsum("nlc,ncm->nlm", qlf, klf, precision=hp)
    sim = jax.nn.softmax(sim, axis=-1)
    ctx = jnp.einsum("ncm,nlm->ncl", vlf, sim, precision=hp)
    ctx = ctx.reshape(n, C, bs, bs, 2)

    b_new = ctx.shape[0]
    ctx = jnp.concatenate(jnp.split(ctx, b_new // (b_new // scale), axis=0), axis=3)
    ctx = jnp.concatenate(jnp.split(ctx, scale, axis=0), axis=2)
    ctx = jnp.concatenate([ctx[..., 0], ctx[..., 1]], axis=3)
    return ctx + x


# ----------------------------------------------------------------------------
if __name__ == "__main__":
    B, C, H, W = 2, 4, 16, 32          # NCHW, W = 2 * w_half, w_half == H

    key = jax.random.PRNGKey(0)
    kx, kq, kk, kv, kbq, kbk, kbv = jax.random.split(key, 7)

    x = jax.random.normal(kx, (B, C, H, W), dtype=jnp.float32)
    # Conv2d(in_dim, in_dim, kernel_size=1) weights, squeezed to (C_out, C_in)
    wq = 0.1 * jax.random.normal(kq, (C, C), dtype=jnp.float32)
    wk = 0.1 * jax.random.normal(kk, (C, C), dtype=jnp.float32)
    wv = 0.1 * jax.random.normal(kv, (C, C), dtype=jnp.float32)
    bq = 0.1 * jax.random.normal(kbq, (C,), dtype=jnp.float32)
    bk = 0.1 * jax.random.normal(kbk, (C,), dtype=jnp.float32)
    bv = 0.1 * jax.random.normal(kbv, (C,), dtype=jnp.float32)

    # scale=1/2 use naturally 128-aligned block sizes; scale=4 exercises the
    # padded/masked key-axis path (L=32 -> Lp=128).
    for scale in (1, 2, 4):
        out = seblock_forward(x, wq, bq, wk, bk, wv, bv, scale=scale)
        out = jax.block_until_ready(out)
        ref = seblock_reference(x, wq, bq, wk, bk, wv, bv, scale=scale)
        assert out.shape == (B, C, H, W)
        err = float(jnp.max(jnp.abs(out - ref)))
        # bf16 MXU operands (f32 accumulation) -> allow a few 1e-3 of error.
        assert err < 5e-3, f"mismatch at scale={scale}: max abs err {err}"

    print("KERNEL_OK")
</pallas_src>

<mosaic_0001>
module attributes {stable_mosaic.version = 11 : i64} {
  func.func @_seblock_kernel(%arg0: i32, %arg1: memref<8x512xf32, #tpu.memory_space<vmem>>, %arg2: memref<24x8xf32, #tpu.memory_space<vmem>>, %arg3: memref<24x1xf32, #tpu.memory_space<vmem>>, %arg4: memref<8x512xf32, #tpu.memory_space<vmem>>, %arg5: memref<24x512xf32, #tpu.memory_space<vmem>>) attributes {dimension_semantics = [#tpu.dimension_semantics<parallel>], iteration_bounds = array<i64: 2>, scalar_prefetch = 0 : i64, scratch_operands = 1 : i64, tpu.core_type = #tpu.core_type<tc>, window_params = [{transform_indices = @transform_0, window_bounds = array<i64: 8, 512>}, {pipeline_mode = #tpu.pipeline_mode<synchronous>, transform_indices = @transform_1, window_bounds = array<i64: 24, 8>}, {pipeline_mode = #tpu.pipeline_mode<synchronous>, transform_indices = @transform_2, window_bounds = array<i64: 24, 1>}, {transform_indices = @transform_3, window_bounds = array<i64: 8, 512>}]} {
    %c0 = arith.constant 0 : index
    %c0_0 = arith.constant 0 : index
    %0 = vector.load %arg2[%c0, %c0_0] : memref<24x8xf32, #tpu.memory_space<vmem>>, vector<24x8xf32>
    %c0_1 = arith.constant 0 : index
    %c0_2 = arith.constant 0 : index
    %1 = vector.load %arg1[%c0_1, %c0_2] : memref<8x512xf32, #tpu.memory_space<vmem>>, vector<8x512xf32>
    %cst = arith.constant dense<0.000000e+00> : vector<24x512xf32>
    %2 = tpu.matmul %0, %1, %cst {dimension_numbers = #tpu.dot_dimension_numbers<[1], [0], [0], [1], [0, 0, 1, 1], [], []>} : vector<24x8xf32>, vector<8x512xf32>, vector<24x512xf32> -> vector<24x512xf32>
    %c0_3 = arith.constant 0 : index
    %c0_4 = arith.constant 0 : index
    %3 = vector.load %arg3[%c0_3, %c0_4] : memref<24x1xf32, #tpu.memory_space<vmem>>, vector<24x1xf32>
    %4 = vector.broadcast %3 : vector<24x1xf32> to vector<24x512xf32>
    %5 = arith.addf %2, %4 : vector<24x512xf32>
    %c0_5 = arith.constant 0 : index
    %c0_6 = arith.constant 0 : index
    %6 = vector.load %arg5[%c0_5, %c0_6] : memref<24x512xf32, #tpu.memory_space<vmem>>, vector<24x512xf32>
    tpu.vector_store %arg5[%c0_5, %c0_6], %5 {strides = array<i32>} : memref<24x512xf32, #tpu.memory_space<vmem>>, vector<24x512xf32>,
    %c0_i32 = arith.constant 0 : i32
    %c512_i32 = arith.constant 512 : i32
    %7 = arith.muli %c0_i32, %c512_i32 : i32
    %8 = tpu.assume_multiple %7, 128 : i32
    %c0_7 = arith.constant 0 : index
    %9 = arith.index_cast %8 : i32 to index
    %10 = vector.load %arg5[%c0_7, %9] : memref<24x512xf32, #tpu.memory_space<vmem>>, vector<8x512xf32>
    %11 = arith.truncf %10 : vector<8x512xf32> to vector<8x512xbf16>
    %c8 = arith.constant 8 : index
    %12 = arith.index_cast %8 : i32 to index
    %13 = vector.load %arg5[%c8, %12] : memref<24x512xf32, #tpu.memory_space<vmem>>, vector<8x512xf32>
    %14 = arith.truncf %13 : vector<8x512xf32> to vector<8x512xbf16>
    %c16 = arith.constant 16 : index
    %15 = arith.index_cast %8 : i32 to index
    %16 = vector.load %arg5[%c16, %15] : memref<24x512xf32, #tpu.memory_space<vmem>>, vector<8x512xf32>
    %17 = arith.truncf %16 : vector<8x512xf32> to vector<8x512xbf16>
    %cst_8 = arith.constant dense<0.000000e+00> : vector<512x512xf32>
    %18 = tpu.matmul %11, %14, %cst_8 {dimension_numbers = #tpu.dot_dimension_numbers<[0], [0], [1], [1], [0, 1, 1, 1], [], []>} : vector<8x512xbf16>, vector<8x512xbf16>, vector<512x512xf32> -> vector<512x512xf32>
    %cst_9 = arith.constant dense<0xFF800000> : vector<512xf32>
    %19 = vector.multi_reduction <maximumf>, %18, %cst_9 [1] : vector<512x512xf32> to vector<512xf32>
    %20 = vector.shape_cast %19 : vector<512xf32> to vector<512x1xf32>
    %21 = vector.broadcast %20 : vector<512x1xf32> to vector<512x512xf32>
    %22 = arith.subf %18, %21 : vector<512x512xf32>
    %23 = math.exp %22 : vector<512x512xf32>
    %cst_10 = arith.constant dense<0.000000e+00> : vector<512xf32>
    %24 = vector.multi_reduction <add>, %23, %cst_10 [1] : vector<512x512xf32> to vector<512xf32>
    %25 = vector.shape_cast %24 : vector<512xf32> to vector<512x1xf32>
    %26 = tpu.reciprocal %25 : vector<512x1xf32> -> vector<512x1xf32>
    %27 = vector.broadcast %26 : vector<512x1xf32> to vector<512x512xf32>
    %28 = arith.mulf %23, %27 : vector<512x512xf32>
    %29 = arith.truncf %28 : vector<512x512xf32> to vector<512x512xbf16>
    %cst_11 = arith.constant dense<0.000000e+00> : vector<8x512xf32>
    %30 = tpu.matmul %17, %29, %cst_11 {dimension_numbers = #tpu.dot_dimension_numbers<[1], [1], [0], [0], [0, 0, 1, 0], [], []>} : vector<8x512xbf16>, vector<512x512xbf16>, vector<8x512xf32> -> vector<8x512xf32>
    %c0_12 = arith.constant 0 : index
    %31 = arith.index_cast %8 : i32 to index
    %32 = vector.load %arg1[%c0_12, %31] : memref<8x512xf32, #tpu.memory_space<vmem>>, vector<8x512xf32>
    %33 = arith.addf %30, %32 : vector<8x512xf32>
    %c0_13 = arith.constant 0 : index
    %34 = arith.index_cast %8 : i32 to index
    %35 = vector.load %arg4[%c0_13, %34] : memref<8x512xf32, #tpu.memory_space<vmem>>, vector<8x512xf32>
    tpu.vector_store %arg4[%c0_13, %34], %33 {strides = array<i32>} : memref<8x512xf32, #tpu.memory_space<vmem>>, vector<8x512xf32>,
    %c1_i32 = arith.constant 1 : i32
    return
  }
  func.func @transform_0(%arg0: i32) -> (i32, i32) {
    %c0_i32 = arith.constant 0 : i32
    %c0_i32_0 = arith.constant 0 : i32
    return %c0_i32, %arg0 : i32, i32
  }
  func.func @transform_1(%arg0: i32) -> (i32, i32) {
    %c0_i32 = arith.constant 0 : i32
    %c0_i32_0 = arith.constant 0 : i32
    %c0_i32_1 = arith.constant 0 : i32
    return %c0_i32, %c0_i32_0 : i32, i32
  }
  func.func @transform_2(%arg0: i32) -> (i32, i32) {
    %c0_i32 = arith.constant 0 : i32
    %c0_i32_0 = arith.constant 0 : i32
    %c0_i32_1 = arith.constant 0 : i32
    return %c0_i32, %c0_i32_0 : i32, i32
  }
  func.func @transform_3(%arg0: i32) -> (i32, i32) {
    %c0_i32 = arith.constant 0 : i32
    %c0_i32_0 = arith.constant 0 : i32
    return %c0_i32, %arg0 : i32, i32
  }
}

</mosaic_0001>

<llo_original>
// kernel: seblock_forward.1
$region0: #{seblock_forward.1}
  #allocation0 [shape = 'u32[]', space=smem, size = 0x4, offset = 0x4, fixed_abs, tag = 'smem constant byte address 0x4 - core index']
  #allocation1 [shape = 'u32[72,128]{1,0:T(1,128)}', space=vmem, size = 0x9000, scoped, tag = 'internal scratch']
  #allocation2 [shape = 'f32[24,512]{1,0:T(8,128)}', space=vmem, size = 0xc000, scoped, tag = 'scratch operand']
  %s0 = inlined_call_operand.vmem [shape: f32[8,1024], index: 0, kind: input, shape index: {}]
  %s1 = inlined_call_operand.vmem [shape: f32[24,8], index: 1, kind: input, shape index: {}]
  %s2 = inlined_call_operand.vmem [shape: f32[24,1], index: 2, kind: input, shape index: {}]
  %s3 = inlined_call_operand.vmem [shape: f32[8,1024], index: 3, kind: output, shape index: {}]
  %s4 = sld [smem:[#allocation0]]
  $region45: #{seblock_forward.1} parent=0
    _
  %s6 = ssub.s32 1, %s4
  %s7 = scalar_select 0, %s6, %s4
  loop: start=0, step=1, limit=4
  $region2: #{seblock_forward.1} parent=0 // loop_pre_header
    _
  $region3: #{seblock_forward.1} parent=0 // loop_header
    %s9 = sphi 0, %s13
    %p10 = scmp.ge.s32.totalorder %s9, 4
    %s19 = sphi 0, %s21
    %s22 = sphi 0, %s19
    %s23 = sphi 0, %s22
    %s39 = sphi 0, %s23
    %s43 = sphi 0, %s43
    %s45 = sphi 0, %s43
    %s46 = sphi 0, %s45
    %s60 = sphi 0, %s46
    %s64 = sphi 0, %s64
    %s66 = sphi 0, %s64
    %s67 = sphi 0, %s66
    %s81 = sphi 0, %s67
    %s87 = sphi 0, %s89
    %s90 = sphi 0, %s87
    %s91 = sphi 0, %s90
    %s107 = sphi 0, %s91
  $region4: #{seblock_forward.1} parent=0 // loop_header_branch
    %12 = sbr.rel (%p10) target = $region8
  $region5: #{seblock_forward.1} parent=0 // loop_body
    %s14 = ssub.s32 %s9, 1
    %s15 = ssub.s32 %s9, 2
    %s16 = sadd.s32 %s9, 1
    %s17 = ssub.s32 %s9, %s16
    %p18 = scmp.eq.s32.totalorder %s17, 0
    %s20 = sadd.s32 %s19, 1
    %s21 = scalar_select %p18, %s19, %s20
    %p24 = pneg %p18
    %p25 = scmp.eq.s32.totalorder %s9, 1
    %p26 = por %p24, %p25
    %p27 = scmp.ne.s32.totalorder %s19, %s22
    %p28 = scmp.eq.s32.totalorder %s9, 0
    %p29 = por %p27, %p28
    %p30 = scmp.ne.s32.totalorder %s19, %s22
    %p31 = scmp.eq.s32.totalorder %s14, 1
    %p32 = por %p30, %p31
    %p33 = scmp.ne.s32.totalorder %s22, %s23
    %p34 = scmp.eq.s32.totalorder %s14, 0
    %p35 = por %p33, %p34
    %p36 = scmp.ne.s32.totalorder %s22, %s23
    %p37 = scmp.eq.s32.totalorder %s15, 1
    %p38 = por %p36, %p37
    %p40 = scmp.ne.s32.totalorder %s23, %s39
    %p41 = scmp.eq.s32.totalorder %s15, 0
    %p42 = por %p40, %p41
    %s44 = sadd.s32 %s43, 1
    %p47 = scmp.eq.s32.totalorder %s9, 1
    %p48 = scmp.ne.s32.totalorder %s43, %s45
    %p49 = scmp.eq.s32.totalorder %s9, 0
    %p50 = por %p48, %p49
    %p51 = scmp.ne.s32.totalorder %s43, %s45
    %p52 = scmp.eq.s32.totalorder %s14, 1
    %p53 = por %p51, %p52
    %p54 = scmp.ne.s32.totalorder %s45, %s46
    %p55 = scmp.eq.s32.totalorder %s14, 0
    %p56 = por %p54, %p55
    %p57 = scmp.ne.s32.totalorder %s45, %s46
    %p58 = scmp.eq.s32.totalorder %s15, 1
    %p59 = por %p57, %p58
    %p61 = scmp.ne.s32.totalorder %s46, %s60
    %p62 = scmp.eq.s32.totalorder %s15, 0
    %p63 = por %p61, %p62
    %s65 = sadd.s32 %s64, 1
    %p68 = scmp.eq.s32.totalorder %s9, 1
    %p69 = scmp.ne.s32.totalorder %s64, %s66
    %p70 = scmp.eq.s32.totalorder %s9, 0
    %p71 = por %p69, %p70
    %p72 = scmp.ne.s32.totalorder %s64, %s66
    %p73 = scmp.eq.s32.totalorder %s14, 1
    %p74 = por %p72, %p73
    %p75 = scmp.ne.s32.totalorder %s66, %s67
    %p76 = scmp.eq.s32.totalorder %s14, 0
    %p77 = por %p75, %p76
    %p78 = scmp.ne.s32.totalorder %s66, %s67
    %p79 = scmp.eq.s32.totalorder %s15, 1
    %p80 = por %p78, %p79
    %p82 = scmp.ne.s32.totalorder %s67, %s81
    %p83 = scmp.eq.s32.totalorder %s15, 0
    %p84 = por %p82, %p83
    %s85 = ssub.s32 %s9, %s16
    %p86 = scmp.eq.s32.totalorder %s85, 0
    %s88 = sadd.s32 %s87, 1
    %s89 = scalar_select %p86, %s87, %s88
    %p92 = pneg %p86
    %p93 = scmp.eq.s32.totalorder %s9, 1
    %p94 = por %p92, %p93
    %p95 = scmp.ne.s32.totalorder %s87, %s90
    %p96 = scmp.eq.s32.totalorder %s9, 0
    %p97 = por %p95, %p96
    %p98 = scmp.ne.s32.totalorder %s87, %s90
    %p99 = scmp.eq.s32.totalorder %s14, 1
    %p100 = por %p98, %p99
    %p101 = scmp.ne.s32.totalorder %s90, %s91
    %p102 = scmp.eq.s32.totalorder %s14, 0
    %p103 = por %p101, %p102
    %p104 = scmp.ne.s32.totalorder %s90, %s91
    %p105 = scmp.eq.s32.totalorder %s15, 1
    %p106 = por %p104, %p105
    %p108 = scmp.ne.s32.totalorder %s91, %s107
    %p109 = scmp.eq.s32.totalorder %s15, 0
    %p110 = por %p108, %p109
    %p111 = scmp.le.s32.totalorder 1, %s9
    %p112 = scmp.lt.s32.totalorder %s9, 3
    %p113 = pnand %p111, %p112
    %p114 = pneg %p113
    // Predicated region
    $region9: #{seblock_forward.1} parent=5 // pred_check
      _
    $region10: #{seblock_forward.1} parent=5 // pred_check_branch
      %116 = sbr.rel (%p113) target = $region12
    $region11: #{seblock_forward.1} parent=5 // pred_region
      %s117 = ssub.s32 %s9, 1
      // Predicated region
      $region13: #{seblock_forward.1} parent=11 // pred_check
        %p118 = pneg %p56
      $region14: #{seblock_forward.1} parent=11 // pred_check_branch
        %120 = sbr.rel (%p118) target = $region16
      $region15: #{seblock_forward.1} parent=11 // pred_region
        _
      $region16: #{seblock_forward.1} parent=11 // pred_fallthru
        _
      // Predicated region
      $region17: #{seblock_forward.1} parent=11 // pred_check
        %p121 = pneg %p77
      $region18: #{seblock_forward.1} parent=11 // pred_check_branch
        %123 = sbr.rel (%p121) target = $region20
      $region19: #{seblock_forward.1} parent=11 // pred_region
        _
      $region20: #{seblock_forward.1} parent=11 // pred_fallthru
        _
    $region12: #{seblock_forward.1} parent=5 // pred_fallthru
      _
    %p124 = scmp.lt.s32.totalorder %s9, 2
    // Predicated region
    $region21: #{seblock_forward.1} parent=5 // pred_check
      %p125 = pneg %p124
    $region22: #{seblock_forward.1} parent=5 // pred_check_branch
      %127 = sbr.rel (%p125) target = $region24
    $region23: #{seblock_forward.1} parent=5 // pred_region
      // Predicated region
      $region25: #{seblock_forward.1} parent=23 // pred_check
        %p128 = pneg %p29
      $region26: #{seblock_forward.1} parent=23 // pred_check_branch
        %130 = sbr.rel (%p128) target = $region28
      $region27: #{seblock_forward.1} parent=23 // pred_region
        %s131 = smul.u32 4, %s9
        %p132 = scmp.lt.s32.totalorder %s131, 7
        %s133 = scalar_select %p132, %s131, 7
        %s134 = smul.addr %s133, 8
        %s135 = scalar_lea.vmem %s0, %s134
        %s136 = smul.u32 4, %s9
      $region28: #{seblock_forward.1} parent=23 // pred_fallthru
        _
    $region24: #{seblock_forward.1} parent=5 // pred_fallthru
      _
    %p137 = scmp.le.s32.totalorder 1, %s9
    %p138 = scmp.lt.s32.totalorder %s9, 3
    %p139 = pnand %p137, %p138
    %p140 = pneg %p139
    // Predicated region
    $region29: #{seblock_forward.1} parent=5 // pred_check
      _
    $region30: #{seblock_forward.1} parent=5 // pred_check_branch
      %142 = sbr.rel (%p139) target = $region32
    $region31: #{seblock_forward.1} parent=5 // pred_region
      %s143 = ssub.s32 %s9, 1
      %s144 = smul.u32 4, %s14
      %p145 = scmp.lt.s32.totalorder %s144, 7
      %s146 = scalar_select %p145, %s144, 7
      %s147 = smul.addr %s146, 8
      %s148 = scalar_lea.vmem %s0, %s147
      %p149 = pneg %p35
      %p150 = pneg %p32
      %p151 = pneg %p56
      %p152 = pneg %p53
      %p153 = pneg %p77
      %p154 = pneg %p74
      %p155 = pneg %p103
      %p156 = pneg %p100
      %s157 = smul.u32 4, %s14
      %p158 = scmp.lt.s32.totalorder %s157, 7
      %s159 = scalar_select %p158, %s157, 7
      %s160 = smul.addr %s159, 8
      %s161 = scalar_lea.vmem %s3, %s160
      %s162 = smul.u32 4, %s14
      %p163 = scmp.lt.s32.totalorder %s162, 7
      %s164 = scalar_select %p163, %s162, 7
      %s165 = smul.addr %s164, 8
      %s166 = scalar_lea.vmem %s0, %s165
      %s167 = smul.u32 4, %s14
      %s168 = smul.u32 4, %s14
      %p169 = scmp.lt.s32.totalorder %s168, 7
      %s170 = scalar_select %p169, %s168, 7
      %s171 = smul.addr %s170, 8
      %s172 = scalar_lea.vmem %s3, %s171
      %s173 = smul.u32 4, %s14
      %v175 = vld [vmem:[%s1] sm:$0xff]
      %v176 = vld [vmem:[%s1 + $0x8] sm:$0xff]
      %v177 = vld [vmem:[%s1 + $0x10] sm:$0xff]
      %v178 = vld [vmem:[%s166] sm:$0xff]
      %v179 = vld [vmem:[%s166 + $0x8] sm:$0xff]
      %v180 = vld [vmem:[%s166 + $0x10] sm:$0xff]
      %v181 = vld [vmem:[%s166 + $0x18] sm:$0xff]
      %v182 = vld [vmem:[%s2] sm:$0xff]
      %v183 = vld [vmem:[%s2 + $0x8] sm:$0xff]
      %v184 = vld [vmem:[%s2 + $0x10] sm:$0xff]
      %186 = vset.pattern.permute.xlu0 0
      %187 = vperm.xlu0 %186, %v182
      %v188 = vpop.permute.xlu0 %187
      %191 = vset.pattern.permute.xlu0 0
      %192 = vperm.xlu0 %191, %v183
      %v193 = vpop.permute.xlu0 %192
      %196 = vset.pattern.permute.xlu0 0
      %197 = vperm.xlu0 %196, %v184
      %v198 = vpop.permute.xlu0 %197
      %vm200 = vcmask 64512
      %v202 = vsel %vm200, %v175, 0
      %v205 = vsel %vm200, %v176, 0
      %v208 = vsel %vm200, %v177, 0
      %210 = vmatpush.msra.mxu0 0.0
      %211 = vmatpush.msra.mxu0 0.0
      %212 = vmatpush.msra.mxu0 0.0
      %213 = vmatpush.msra.mxu0 0.0
      %214 = vmatpush.msra.mxu0 0.0
      %215 = vmatpush.msra.mxu0 0.0
      %216 = vmatpush.msra.mxu0 0.0
      %217 = vmatpush.msra.mxu0 0.0
      %218 = vmatpush.msra.mxu0 0.0
      %219 = vmatpush.msra.mxu0 0.0
      %220 = vmatpush.msra.mxu0 0.0
      %221 = vmatpush.msra.mxu0 0.0
      %222 = vmatpush.msra.mxu0 0.0
      %223 = vmatpush.msra.mxu0 0.0
      %224 = vmatpush.msra.mxu0 0.0
      %225 = vmatpush.msra.mxu0 %v178
      %226 = vmatmul.f32.gmra.mxu0 %v202
      %v227 = vpop.f32.mrf.mxu0
      %v228 = vadd.f32 %v188, %v227
      %229 = vmatmul.f32.gmra.mxu0 %v205
      %v230 = vpop.f32.mrf.mxu0
      %v231 = vadd.f32 %v193, %v230
      %232 = vmatmul.f32.gmra.mxu0 %v208
      %v233 = vpop.f32.mrf.mxu0
      %v234 = vadd.f32 %v198, %v233
      %235 = vdwg.mxu0
      %236 = vmatpush.msra.mxu0 0.0
      %237 = vmatpush.msra.mxu0 0.0
      %238 = vmatpush.msra.mxu0 0.0
      %239 = vmatpush.msra.mxu0 0.0
      %240 = vmatpush.msra.mxu0 0.0
      %241 = vmatpush.msra.mxu0 0.0
      %242 = vmatpush.msra.mxu0 0.0
      %243 = vmatpush.msra.mxu0 0.0
      %244 = vmatpush.msra.mxu0 0.0
      %245 = vmatpush.msra.mxu0 0.0
      %246 = vmatpush.msra.mxu0 0.0
      %247 = vmatpush.msra.mxu0 0.0
      %248 = vmatpush.msra.mxu0 0.0
      %249 = vmatpush.msra.mxu0 0.0
      %250 = vmatpush.msra.mxu0 0.0
      %251 = vmatpush.msra.mxu0 %v179
      %252 = vmatmul.f32.gmra.mxu0 %v202
      %v253 = vpop.f32.mrf.mxu0
      %v254 = vadd.f32 %v188, %v253
      %255 = vmatmul.f32.gmra.mxu0 %v205
      %v256 = vpop.f32.mrf.mxu0
      %v257 = vadd.f32 %v193, %v256
      %258 = vmatmul.f32.gmra.mxu0 %v208
      %v259 = vpop.f32.mrf.mxu0
      %v260 = vadd.f32 %v198, %v259
      %261 = vdwg.mxu0
      %262 = vmatpush.msra.mxu0 0.0
      %263 = vmatpush.msra.mxu0 0.0
      %264 = vmatpush.msra.mxu0 0.0
      %265 = vmatpush.msra.mxu0 0.0
      %266 = vmatpush.msra.mxu0 0.0
      %267 = vmatpush.msra.mxu0 0.0
      %268 = vmatpush.msra.mxu0 0.0
      %269 = vmatpush.msra.mxu0 0.0
      %270 = vmatpush.msra.mxu0 0.0
      %271 = vmatpush.msra.mxu0 0.0
      %272 = vmatpush.msra.mxu0 0.0
      %273 = vmatpush.msra.mxu0 0.0
      %274 = vmatpush.msra.mxu0 0.0
      %275 = vmatpush.msra.mxu0 0.0
      %276 = vmatpush.msra.mxu0 0.0
      %277 = vmatpush.msra.mxu0 %v180
      %278 = vmatmul.f32.gmra.mxu0 %v202
      %v279 = vpop.f32.mrf.mxu0
      %v280 = vadd.f32 %v188, %v279
      %281 = vmatmul.f32.gmra.mxu0 %v205
      %v282 = vpop.f32.mrf.mxu0
      %v283 = vadd.f32 %v193, %v282
      %284 = vmatmul.f32.gmra.mxu0 %v208
      %v285 = vpop.f32.mrf.mxu0
      %v286 = vadd.f32 %v198, %v285
      %287 = vdwg.mxu0
      %288 = vmatpush.msra.mxu0 0.0
      %289 = vmatpush.msra.mxu0 0.0
      %290 = vmatpush.msra.mxu0 0.0
      %291 = vmatpush.msra.mxu0 0.0
      %292 = vmatpush.msra.mxu0 0.0
      %293 = vmatpush.msra.mxu0 0.0
      %294 = vmatpush.msra.mxu0 0.0
      %295 = vmatpush.msra.mxu0 0.0
      %296 = vmatpush.msra.mxu0 0.0
      %297 = vmatpush.msra.mxu0 0.0
      %298 = vmatpush.msra.mxu0 0.0
      %299 = vmatpush.msra.mxu0 0.0
      %300 = vmatpush.msra.mxu0 0.0
      %301 = vmatpush.msra.mxu0 0.0
      %302 = vmatpush.msra.mxu0 0.0
      %303 = vmatpush.msra.mxu0 %v181
      %304 = vmatmul.f32.gmra.mxu0 %v202
      %v305 = vpop.f32.mrf.mxu0
      %v306 = vadd.f32 %v188, %v305
      %307 = vmatmul.f32.gmra.mxu0 %v205
      %v308 = vpop.f32.mrf.mxu0
      %v309 = vadd.f32 %v193, %v308
      %310 = vmatmul.f32.gmra.mxu0 %v208
      %v311 = vpop.f32.mrf.mxu0
      %v312 = vadd.f32 %v198, %v311
      %313 = vdwg.mxu0
      %314 = vst [vmem:[#allocation2] sm:$0xff] %v228
      %315 = vst [vmem:[#allocation2 + $0x8] sm:$0xff] %v254
      %316 = vst [vmem:[#allocation2 + $0x10] sm:$0xff] %v280
      %317 = vst [vmem:[#allocation2 + $0x18] sm:$0xff] %v306
      %318 = vst [vmem:[#allocation2 + $0x20] sm:$0xff] %v231
      %319 = vst [vmem:[#allocation2 + $0x28] sm:$0xff] %v257
      %320 = vst [vmem:[#allocation2 + $0x30] sm:$0xff] %v283
      %321 = vst [vmem:[#allocation2 + $0x38] sm:$0xff] %v309
      %322 = vst [vmem:[#allocation2 + $0x40] sm:$0xff] %v234
      %323 = vst [vmem:[#allocation2 + $0x48] sm:$0xff] %v260
      %324 = vst [vmem:[#allocation2 + $0x50] sm:$0xff] %v286
      %325 = vst [vmem:[#allocation2 + $0x58] sm:$0xff] %v312
      %v326 = vld [vmem:[#allocation2] sm:$0xff]
      %v327 = vld [vmem:[#allocation2 + $0x8] sm:$0xff]
      %v328 = vld [vmem:[#allocation2 + $0x10] sm:$0xff]
      %v329 = vld [vmem:[#allocation2 + $0x18] sm:$0xff]
      %v330 = vpack.c.bf16 %v326, %v326
      %v331 = vpack.c.bf16 %v327, %v327
      %v332 = vpack.c.bf16 %v328, %v328
      %v333 = vpack.c.bf16 %v329, %v329
      %v334 = vld [vmem:[#allocation2 + $0x20] sm:$0xff]
      %v335 = vld [vmem:[#allocation2 + $0x28] sm:$0xff]
      %v336 = vld [vmem:[#allocation2 + $0x30] sm:$0xff]
      %v337 = vld [vmem:[#allocation2 + $0x38] sm:$0xff]
      %v338 = vpack.c.bf16 %v334, %v334
      %v339 = vpack.c.bf16 %v335, %v335
      %v340 = vpack.c.bf16 %v336, %v336
      %v341 = vpack.c.bf16 %v337, %v337
      %v342 = vld [vmem:[#allocation2 + $0x40] sm:$0xff]
      %v343 = vld [vmem:[#allocation2 + $0x48] sm:$0xff]
      %v344 = vld [vmem:[#allocation2 + $0x50] sm:$0xff]
      %v345 = vld [vmem:[#allocation2 + $0x58] sm:$0xff]
      %v346 = vpack.c.bf16 %v342, %v342
      %v347 = vpack.c.bf16 %v343, %v343
      %v348 = vpack.c.bf16 %v344, %v344
      %v349 = vpack.c.bf16 %v345, %v345
      %350 = vxpose.binary.xlu0.c.b16.start [1/16] %v331, %v330, 128
      %351 = vxpose.binary.xlu0.c.b16.cont [2/16] 0, 0, 128
      %352 = vxpose.binary.xlu0.c.b16.cont [3/16] 0, 0, 128
      %353 = vxpose.binary.xlu0.c.b16.cont [4/16] 0, 0, 128
      %354 = vxpose.binary.xlu0.c.b16.cont [5/16] 0, 0, 128
      %355 = vxpose.binary.xlu0.c.b16.cont [6/16] 0, 0, 128
      %356 = vxpose.binary.xlu0.c.b16.cont [7/16] 0, 0, 128
      %357 = vxpose.binary.xlu0.c.b16.end [8/16] 0, 0, 128
      %v358 = vpop.trf.xlu0
      %v359 = vpop.trf.xlu0
      %v360 = vpop.trf.xlu0
      %v361 = vpop.trf.xlu0
      %v362 = vpop.trf.xlu0
      %v363 = vpop.trf.xlu0
      %v364 = vpop.trf.xlu0
      %v365 = vpop.trf.xlu0
      %v366 = vpop.trf.xlu0
      %v367 = vpop.trf.xlu0
      %v368 = vpop.trf.xlu0
      %v369 = vpop.trf.xlu0
      %v370 = vpop.trf.xlu0
      %v371 = vpop.trf.xlu0
      %v372 = vpop.trf.xlu0
      %v373 = vpop.trf.xlu0
      %374 = vxpose.binary.xlu0.c.b16.start [1/16] %v333, %v332, 128
      %375 = vxpose.binary.xlu0.c.b16.cont [2/16] 0, 0, 128
      %376 = vxpose.binary.xlu0.c.b16.cont [3/16] 0, 0, 128
      %377 = vxpose.binary.xlu0.c.b16.cont [4/16] 0, 0, 128
      %378 = vxpose.binary.xlu0.c.b16.cont [5/16] 0, 0, 128
      %379 = vxpose.binary.xlu0.c.b16.cont [6/16] 0, 0, 128
      %380 = vxpose.binary.xlu0.c.b16.cont [7/16] 0, 0, 128
      %381 = vxpose.binary.xlu0.c.b16.end [8/16] 0, 0, 128
      %v382 = vpop.trf.xlu0
      %v383 = vpop.trf.xlu0
      %v384 = vpop.trf.xlu0
      %v385 = vpop.trf.xlu0
      %v386 = vpop.trf.xlu0
      %v387 = vpop.trf.xlu0
      %v388 = vpop.trf.xlu0
      %v389 = vpop.trf.xlu0
      %v390 = vpop.trf.xlu0
      %v391 = vpop.trf.xlu0
      %v392 = vpop.trf.xlu0
      %v393 = vpop.trf.xlu0
      %v394 = vpop.trf.xlu0
      %v395 = vpop.trf.xlu0
      %v396 = vpop.trf.xlu0
      %v397 = vpop.trf.xlu0
      %v399 = vsel %vm200, %v358, 0
      %v402 = vsel %vm200, %v360, 0
      %v405 = vsel %vm200, %v362, 0
      %v408 = vsel %vm200, %v364, 0
      %v411 = vsel %vm200, %v366, 0
      %v414 = vsel %vm200, %v368, 0
      %v417 = vsel %vm200, %v370, 0
      %v420 = vsel %vm200, %v372, 0
      %v423 = vsel %vm200, %v359, 0
      %v426 = vsel %vm200, %v361, 0
      %v429 = vsel %vm200, %v363, 0
      %v432 = vsel %vm200, %v365, 0
      %v435 = vsel %vm200, %v367, 0
      %v438 = vsel %vm200, %v369, 0
      %v441 = vsel %vm200, %v371, 0
      %v444 = vsel %vm200, %v373, 0
      %v447 = vsel %vm200, %v382, 0
      %v450 = vsel %vm200, %v384, 0
      %v453 = vsel %vm200, %v386, 0
      %v456 = vsel %vm200, %v388, 0
      %v459 = vsel %vm200, %v390, 0
      %v462 = vsel %vm200, %v392, 0
      %v465 = vsel %vm200, %v394, 0
      %v468 = vsel %vm200, %v396, 0
      %v471 = vsel %vm200, %v383, 0
      %v474 = vsel %vm200, %v385, 0
      %v477 = vsel %vm200, %v387, 0
      %v480 = vsel %vm200, %v389, 0
      %v483 = vsel %vm200, %v391, 0
      %v486 = vsel %vm200, %v393, 0
      %v489 = vsel %vm200, %v395, 0
      %v492 = vsel %vm200, %v397, 0
      %vm494 = vcmask 1043456
      %v496 = vsel %vm494, %v338, 0
      %v499 = vsel %vm494, %v339, 0
      %v502 = vsel %vm494, %v340, 0
      %v505 = vsel %vm494, %v341, 0
      %507 = vmatpush.bf16.msra.mxu0 0
      %508 = vmatpush.bf16.msra.mxu0 0
      %509 = vmatpush.bf16.msra.mxu0 0
      %510 = vmatpush.bf16.msra.mxu0 0
      %511 = vmatpush.bf16.msra.mxu0 0
      %512 = vmatpush.bf16.msra.mxu0 0
      %513 = vmatpush.bf16.msra.mxu0 0
      %514 = vmatpush.bf16.msra.mxu0 %v496
      %515 = vmatmul.bf16.gmra.mxu0 %v399
      %v516 = vpop.f32.mrf.mxu0
      %v517 = vadd.f32 0.0, %v516
      %v518 = vpop.f32.mrf.mxu0
      %v519 = vadd.f32 0.0, %v518
      %520 = vmatmul.bf16.gmra.mxu0 %v402
      %v521 = vpop.f32.mrf.mxu0
      %v522 = vadd.f32 0.0, %v521
      %v523 = vpop.f32.mrf.mxu0
      %v524 = vadd.f32 0.0, %v523
      %525 = vmatmul.bf16.gmra.mxu0 %v405
      %v526 = vpop.f32.mrf.mxu0
      %v527 = vadd.f32 0.0, %v526
      %v528 = vpop.f32.mrf.mxu0
      %v529 = vadd.f32 0.0, %v528
      %530 = vmatmul.bf16.gmra.mxu0 %v408
      %v531 = vpop.f32.mrf.mxu0
      %v532 = vadd.f32 0.0, %v531
      %v533 = vpop.f32.mrf.mxu0
      %v534 = vadd.f32 0.0, %v533
      %535 = vmatmul.bf16.gmra.mxu0 %v411
      %v536 = vpop.f32.mrf.mxu0
      %v537 = vadd.f32 0.0, %v536
      %v538 = vpop.f32.mrf.mxu0
      %v539 = vadd.f32 0.0, %v538
      %540 = vmatmul.bf16.gmra.mxu0 %v414
      %v541 = vpop.f32.mrf.mxu0
      %v542 = vadd.f32 0.0, %v541
      %v543 = vpop.f32.mrf.mxu0
      %v544 = vadd.f32 0.0, %v543
      %545 = vmatmul.bf16.gmra.mxu0 %v417
      %v546 = vpop.f32.mrf.mxu0
      %v547 = vadd.f32 0.0, %v546
      %v548 = vpop.f32.mrf.mxu0
      %v549 = vadd.f32 0.0, %v548
      %550 = vmatmul.bf16.gmra.mxu0 %v420
      %v551 = vpop.f32.mrf.mxu0
      %v552 = vadd.f32 0.0, %v551
      %v553 = vpop.f32.mrf.mxu0
      %v554 = vadd.f32 0.0, %v553
      %555 = vmatmul.bf16.gmra.mxu0 %v423
      %v556 = vpop.f32.mrf.mxu0
      %v557 = vadd.f32 0.0, %v556
      %v558 = vpop.f32.mrf.mxu0
      %v559 = vadd.f32 0.0, %v558
      %560 = vmatmul.bf16.gmra.mxu0 %v426
      %v561 = vpop.f32.mrf.mxu0
      %v562 = vadd.f32 0.0, %v561
      %v563 = vpop.f32.mrf.mxu0
      %v564 = vadd.f32 0.0, %v563
      %565 = vmatmul.bf16.gmra.mxu0 %v429
      %v566 = vpop.f32.mrf.mxu0
      %v567 = vadd.f32 0.0, %v566
      %v568 = vpop.f32.mrf.mxu0
      %v569 = vadd.f32 0.0, %v568
      %570 = vmatmul.bf16.gmra.mxu0 %v432
      %v571 = vpop.f32.mrf.mxu0
      %v572 = vadd.f32 0.0, %v571
      %v573 = vpop.f32.mrf.mxu0
      %v574 = vadd.f32 0.0, %v573
      %575 = vmatmul.bf16.gmra.mxu0 %v435
      %v576 = vpop.f32.mrf.mxu0
      %v577 = vadd.f32 0.0, %v576
      %v578 = vpop.f32.mrf.mxu0
      %v579 = vadd.f32 0.0, %v578
      %580 = vmatmul.bf16.gmra.mxu0 %v438
      %v581 = vpop.f32.mrf.mxu0
      %v582 = vadd.f32 0.0, %v581
      %v583 = vpop.f32.mrf.mxu0
      %v584 = vadd.f32 0.0, %v583
      %585 = vmatmul.bf16.gmra.mxu0 %v441
      %v586 = vpop.f32.mrf.mxu0
      %v587 = vadd.f32 0.0, %v586
      %v588 = vpop.f32.mrf.mxu0
      %v589 = vadd.f32 0.0, %v588
      %590 = vmatmul.bf16.gmra.mxu0 %v444
      %v591 = vpop.f32.mrf.mxu0
      %v592 = vadd.f32 0.0, %v591
      %v593 = vpop.f32.mrf.mxu0
      %v594 = vadd.f32 0.0, %v593
      %595 = vmatmul.bf16.gmra.mxu0 %v447
      %v596 = vpop.f32.mrf.mxu0
      %v597 = vadd.f32 0.0, %v596
      %v598 = vpop.f32.mrf.mxu0
      %v599 = vadd.f32 0.0, %v598
      %600 = vmatmul.bf16.gmra.mxu0 %v450
      %v601 = vpop.f32.mrf.mxu0
      %v602 = vadd.f32 0.0, %v601
      %v603 = vpop.f32.mrf.mxu0
      %v604 = vadd.f32 0.0, %v603
      %605 = vmatmul.bf16.gmra.mxu0 %v453
      %v606 = vpop.f32.mrf.mxu0
      %v607 = vadd.f32 0.0, %v606
      %v608 = vpop.f32.mrf.mxu0
      %v609 = vadd.f32 0.0, %v608
      %610 = vmatmul.bf16.gmra.mxu0 %v456
      %v611 = vpop.f32.mrf.mxu0
      %v612 = vadd.f32 0.0, %v611
      %v613 = vpop.f32.mrf.mxu0
      %v614 = vadd.f32 0.0, %v613
      %615 = vmatmul.bf16.gmra.mxu0 %v459
      %v616 = vpop.f32.mrf.mxu0
      %v617 = vadd.f32 0.0, %v616
      %v618 = vpop.f32.mrf.mxu0
      %v619 = vadd.f32 0.0, %v618
      %620 = vmatmul.bf16.gmra.mxu0 %v462
      %v621 = vpop.f32.mrf.mxu0
      %v622 = vadd.f32 0.0, %v621
      %v623 = vpop.f32.mrf.mxu0
      %v624 = vadd.f32 0.0, %v623
      %625 = vmatmul.bf16.gmra.mxu0 %v465
      %v626 = vpop.f32.mrf.mxu0
      %v627 = vadd.f32 0.0, %v626
      %v628 = vpop.f32.mrf.mxu0
      %v629 = vadd.f32 0.0, %v628
      %630 = vmatmul.bf16.gmra.mxu0 %v468
      %v631 = vpop.f32.mrf.mxu0
      %v632 = vadd.f32 0.0, %v631
      %v633 = vpop.f32.mrf.mxu0
      %v634 = vadd.f32 0.0, %v633
      %635 = vmatmul.bf16.gmra.mxu0 %v471
      %v636 = vpop.f32.mrf.mxu0
      %v637 = vadd.f32 0.0, %v636
      %v638 = vpop.f32.mrf.mxu0
      %v639 = vadd.f32 0.0, %v638
      %640 = vmatmul.bf16.gmra.mxu0 %v474
      %v641 = vpop.f32.mrf.mxu0
      %v642 = vadd.f32 0.0, %v641
      %v643 = vpop.f32.mrf.mxu0
      %v644 = vadd.f32 0.0, %v643
      %645 = vmatmul.bf16.gmra.mxu0 %v477
      %v646 = vpop.f32.mrf.mxu0
      %v647 = vadd.f32 0.0, %v646
      %v648 = vpop.f32.mrf.mxu0
      %v649 = vadd.f32 0.0, %v648
      %650 = vmatmul.bf16.gmra.mxu0 %v480
      %v651 = vpop.f32.mrf.mxu0
      %v652 = vadd.f32 0.0, %v651
      %v653 = vpop.f32.mrf.mxu0
      %v654 = vadd.f32 0.0, %v653
      %655 = vmatmul.bf16.gmra.mxu0 %v483
      %v656 = vpop.f32.mrf.mxu0
      %v657 = vadd.f32 0.0, %v656
      %v658 = vpop.f32.mrf.mxu0
      %v659 = vadd.f32 0.0, %v658
      %660 = vmatmul.bf16.gmra.mxu0 %v486
      %v661 = vpop.f32.mrf.mxu0
      %v662 = vadd.f32 0.0, %v661
      %v663 = vpop.f32.mrf.mxu0
      %v664 = vadd.f32 0.0, %v663
      %665 = vmatmul.bf16.gmra.mxu0 %v489
      %v666 = vpop.f32.mrf.mxu0
      %v667 = vadd.f32 0.0, %v666
      %v668 = vpop.f32.mrf.mxu0
      %v669 = vadd.f32 0.0, %v668
      %670 = vmatmul.bf16.gmra.mxu0 %v492
      %v671 = vpop.f32.mrf.mxu0
      %v672 = vadd.f32 0.0, %v671
      %v673 = vpop.f32.mrf.mxu0
      %v674 = vadd.f32 0.0, %v673
      %675 = vdwg.mxu0
      %676 = vmatpush.bf16.msra.mxu0 0
      %677 = vmatpush.bf16.msra.mxu0 0
      %678 = vmatpush.bf16.msra.mxu0 0
      %679 = vmatpush.bf16.msra.mxu0 0
      %680 = vmatpush.bf16.msra.mxu0 0
      %681 = vmatpush.bf16.msra.mxu0 0
      %682 = vmatpush.bf16.msra.mxu0 0
      %683 = vmatpush.bf16.msra.mxu0 %v499
      %684 = vmatmul.bf16.gmra.mxu0 %v399
      %v685 = vpop.f32.mrf.mxu0
      %v686 = vadd.f32 0.0, %v685
      %v687 = vpop.f32.mrf.mxu0
      %v688 = vadd.f32 0.0, %v687
      %689 = vmatmul.bf16.gmra.mxu0 %v402
      %v690 = vpop.f32.mrf.mxu0
      %v691 = vadd.f32 0.0, %v690
      %v692 = vpop.f32.mrf.mxu0
      %v693 = vadd.f32 0.0, %v692
      %694 = vmatmul.bf16.gmra.mxu0 %v405
      %v695 = vpop.f32.mrf.mxu0
      %v696 = vadd.f32 0.0, %v695
      %v697 = vpop.f32.mrf.mxu0
      %v698 = vadd.f32 0.0, %v697
      %699 = vmatmul.bf16.gmra.mxu0 %v408
      %v700 = vpop.f32.mrf.mxu0
      %v701 = vadd.f32 0.0, %v700
      %v702 = vpop.f32.mrf.mxu0
      %v703 = vadd.f32 0.0, %v702
      %704 = vmatmul.bf16.gmra.mxu0 %v411
      %v705 = vpop.f32.mrf.mxu0
      %v706 = vadd.f32 0.0, %v705
      %v707 = vpop.f32.mrf.mxu0
      %v708 = vadd.f32 0.0, %v707
      %709 = vmatmul.bf16.gmra.mxu0 %v414
      %v710 = vpop.f32.mrf.mxu0
      %v711 = vadd.f32 0.0, %v710
      %v712 = vpop.f32.mrf.mxu0
      %v713 = vadd.f32 0.0, %v712
      %714 = vmatmul.bf16.gmra.mxu0 %v417
      %v715 = vpop.f32.mrf.mxu0
      %v716 = vadd.f32 0.0, %v715
      %v717 = vpop.f32.mrf.mxu0
      %v718 = vadd.f32 0.0, %v717
      %719 = vmatmul.bf16.gmra.mxu0 %v420
      %v720 = vpop.f32.mrf.mxu0
      %v721 = vadd.f32 0.0, %v720
      %v722 = vpop.f32.mrf.mxu0
      %v723 = vadd.f32 0.0, %v722
      %724 = vmatmul.bf16.gmra.mxu0 %v423
      %v725 = vpop.f32.mrf.mxu0
      %v726 = vadd.f32 0.0, %v725
      %v727 = vpop.f32.mrf.mxu0
      %v728 = vadd.f32 0.0, %v727
      %729 = vmatmul.bf16.gmra.mxu0 %v426
      %v730 = vpop.f32.mrf.mxu0
      %v731 = vadd.f32 0.0, %v730
      %v732 = vpop.f32.mrf.mxu0
      %v733 = vadd.f32 0.0, %v732
      %734 = vmatmul.bf16.gmra.mxu0 %v429
      %v735 = vpop.f32.mrf.mxu0
      %v736 = vadd.f32 0.0, %v735
      %v737 = vpop.f32.mrf.mxu0
      %v738 = vadd.f32 0.0, %v737
      %739 = vmatmul.bf16.gmra.mxu0 %v432
      %v740 = vpop.f32.mrf.mxu0
      %v741 = vadd.f32 0.0, %v740
      %v742 = vpop.f32.mrf.mxu0
      %v743 = vadd.f32 0.0, %v742
      %744 = vmatmul.bf16.gmra.mxu0 %v435
      %v745 = vpop.f32.mrf.mxu0
      %v746 = vadd.f32 0.0, %v745
      %v747 = vpop.f32.mrf.mxu0
      %v748 = vadd.f32 0.0, %v747
      %749 = vmatmul.bf16.gmra.mxu0 %v438
      %v750 = vpop.f32.mrf.mxu0
      %v751 = vadd.f32 0.0, %v750
      %v752 = vpop.f32.mrf.mxu0
      %v753 = vadd.f32 0.0, %v752
      %754 = vmatmul.bf16.gmra.mxu0 %v441
      %v755 = vpop.f32.mrf.mxu0
      %v756 = vadd.f32 0.0, %v755
      %v757 = vpop.f32.mrf.mxu0
      %v758 = vadd.f32 0.0, %v757
      %759 = vmatmul.bf16.gmra.mxu0 %v444
      %v760 = vpop.f32.mrf.mxu0
      %v761 = vadd.f32 0.0, %v760
      %v762 = vpop.f32.mrf.mxu0
      %v763 = vadd.f32 0.0, %v762
      %764 = vmatmul.bf16.gmra.mxu0 %v447
      %v765 = vpop.f32.mrf.mxu0
      %v766 = vadd.f32 0.0, %v765
      %v767 = vpop.f32.mrf.mxu0
      %v768 = vadd.f32 0.0, %v767
      %769 = vmatmul.bf16.gmra.mxu0 %v450
      %v770 = vpop.f32.mrf.mxu0
      %v771 = vadd.f32 0.0, %v770
      %v772 = vpop.f32.mrf.mxu0
      %v773 = vadd.f32 0.0, %v772
      %774 = vmatmul.bf16.gmra.mxu0 %v453
      %v775 = vpop.f32.mrf.mxu0
      %v776 = vadd.f32 0.0, %v775
      %v777 = vpop.f32.mrf.mxu0
      %v778 = vadd.f32 0.0, %v777
      %779 = vmatmul.bf16.gmra.mxu0 %v456
      %v780 = vpop.f32.mrf.mxu0
      %v781 = vadd.f32 0.0, %v780
      %v782 = vpop.f32.mrf.mxu0
      %v783 = vadd.f32 0.0, %v782
      %784 = vmatmul.bf16.gmra.mxu0 %v459
      %v785 = vpop.f32.mrf.mxu0
      %v786 = vadd.f32 0.0, %v785
      %v787 = vpop.f32.mrf.mxu0
      %v788 = vadd.f32 0.0, %v787
      %789 = vmatmul.bf16.gmra.mxu0 %v462
      %v790 = vpop.f32.mrf.mxu0
      %v791 = vadd.f32 0.0, %v790
      %v792 = vpop.f32.mrf.mxu0
      %v793 = vadd.f32 0.0, %v792
      %794 = vmatmul.bf16.gmra.mxu0 %v465
      %v795 = vpop.f32.mrf.mxu0
      %v796 = vadd.f32 0.0, %v795
      %v797 = vpop.f32.mrf.mxu0
      %v798 = vadd.f32 0.0, %v797
      %799 = vmatmul.bf16.gmra.mxu0 %v468
      %v800 = vpop.f32.mrf.mxu0
      %v801 = vadd.f32 0.0, %v800
      %v802 = vpop.f32.mrf.mxu0
      %v803 = vadd.f32 0.0, %v802
      %804 = vmatmul.bf16.gmra.mxu0 %v471
      %v805 = vpop.f32.mrf.mxu0
      %v806 = vadd.f32 0.0, %v805
      %v807 = vpop.f32.mrf.mxu0
      %v808 = vadd.f32 0.0, %v807
      %809 = vmatmul.bf16.gmra.mxu0 %v474
      %v810 = vpop.f32.mrf.mxu0
      %v811 = vadd.f32 0.0, %v810
      %v812 = vpop.f32.mrf.mxu0
      %v813 = vadd.f32 0.0, %v812
      %814 = vmatmul.bf16.gmra.mxu0 %v477
      %v815 = vpop.f32.mrf.mxu0
      %v816 = vadd.f32 0.0, %v815
      %v817 = vpop.f32.mrf.mxu0
      %v818 = vadd.f32 0.0, %v817
      %819 = vmatmul.bf16.gmra.mxu0 %v480
      %v820 = vpop.f32.mrf.mxu0
      %v821 = vadd.f32 0.0, %v820
      %v822 = vpop.f32.mrf.mxu0
      %v823 = vadd.f32 0.0, %v822
      %824 = vmatmul.bf16.gmra.mxu0 %v483
      %v825 = vpop.f32.mrf.mxu0
      %v826 = vadd.f32 0.0, %v825
      %v827 = vpop.f32.mrf.mxu0
      %v828 = vadd.f32 0.0, %v827
      %829 = vmatmul.bf16.gmra.mxu0 %v486
      %v830 = vpop.f32.mrf.mxu0
      %v831 = vadd.f32 0.0, %v830
      %v832 = vpop.f32.mrf.mxu0
      %v833 = vadd.f32 0.0, %v832
      %834 = vmatmul.bf16.gmra.mxu0 %v489
      %v835 = vpop.f32.mrf.mxu0
      %v836 = vadd.f32 0.0, %v835
      %v837 = vpop.f32.mrf.mxu0
      %v838 = vadd.f32 0.0, %v837
      %839 = vmatmul.bf16.gmra.mxu0 %v492
      %v840 = vpop.f32.mrf.mxu0
      %v841 = vadd.f32 0.0, %v840
      %v842 = vpop.f32.mrf.mxu0
      %v843 = vadd.f32 0.0, %v842
      %844 = vdwg.mxu0
      %845 = vmatpush.bf16.msra.mxu0 0
      %846 = vmatpush.bf16.msra.mxu0 0
      %847 = vmatpush.bf16.msra.mxu0 0
      %848 = vmatpush.bf16.msra.mxu0 0
      %849 = vmatpush.bf16.msra.mxu0 0
      %850 = vmatpush.bf16.msra.mxu0 0
      %851 = vmatpush.bf16.msra.mxu0 0
      %852 = vmatpush.bf16.msra.mxu0 %v502
      %853 = vmatmul.bf16.gmra.mxu0 %v399
      %v854 = vpop.f32.mrf.mxu0
      %v855 = vadd.f32 0.0, %v854
      %v856 = vpop.f32.mrf.mxu0
      %v857 = vadd.f32 0.0, %v856
      %858 = vmatmul.bf16.gmra.mxu0 %v402
      %v859 = vpop.f32.mrf.mxu0
      %v860 = vadd.f32 0.0, %v859
      %v861 = vpop.f32.mrf.mxu0
      %v862 = vadd.f32 0.0, %v861
      %863 = vmatmul.bf16.gmra.mxu0 %v405
      %v864 = vpop.f32.mrf.mxu0
      %v865 = vadd.f32 0.0, %v864
      %v866 = vpop.f32.mrf.mxu0
      %v867 = vadd.f32 0.0, %v866
      %868 = vmatmul.bf16.gmra.mxu0 %v408
      %v869 = vpop.f32.mrf.mxu0
      %v870 = vadd.f32 0.0, %v869
      %v871 = vpop.f32.mrf.mxu0
      %v872 = vadd.f32 0.0, %v871
      %873 = vmatmul.bf16.gmra.mxu0 %v411
      %v874 = vpop.f32.mrf.mxu0
      %v875 = vadd.f32 0.0, %v874
      %v876 = vpop.f32.mrf.mxu0
      %v877 = vadd.f32 0.0, %v876
      %878 = vmatmul.bf16.gmra.mxu0 %v414
      %v879 = vpop.f32.mrf.mxu0
      %v880 = vadd.f32 0.0, %v879
      %v881 = vpop.f32.mrf.mxu0
      %v882 = vadd.f32 0.0, %v881
      %883 = vmatmul.bf16.gmra.mxu0 %v417
      %v884 = vpop.f32.mrf.mxu0
      %v885 = vadd.f32 0.0, %v884
      %v886 = vpop.f32.mrf.mxu0
      %v887 = vadd.f32 0.0, %v886
      %888 = vmatmul.bf16.gmra.mxu0 %v420
      %v889 = vpop.f32.mrf.mxu0
      %v890 = vadd.f32 0.0, %v889
      %v891 = vpop.f32.mrf.mxu0
      %v892 = vadd.f32 0.0, %v891
      %893 = vmatmul.bf16.gmra.mxu0 %v423
      %v894 = vpop.f32.mrf.mxu0
      %v895 = vadd.f32 0.0, %v894
      %v896 = vpop.f32.mrf.mxu0
      %v897 = vadd.f32 0.0, %v896
      %898 = vmatmul.bf16.gmra.mxu0 %v426
      %v899 = vpop.f32.mrf.mxu0
      %v900 = vadd.f32 0.0, %v899
      %v901 = vpop.f32.mrf.mxu0
      %v902 = vadd.f32 0.0, %v901
      %903 = vmatmul.bf16.gmra.mxu0 %v429
      %v904 = vpop.f32.mrf.mxu0
      %v905 = vadd.f32 0.0, %v904
      %v906 = vpop.f32.mrf.mxu0
      %v907 = vadd.f32 0.0, %v906
      %908 = vmatmul.bf16.gmra.mxu0 %v432
      %v909 = vpop.f32.mrf.mxu0
      %v910 = vadd.f32 0.0, %v909
      %v911 = vpop.f32.mrf.mxu0
      %v912 = vadd.f32 0.0, %v911
      %913 = vmatmul.bf16.gmra.mxu0 %v435
      %v914 = vpop.f32.mrf.mxu0
      %v915 = vadd.f32 0.0, %v914
      %v916 = vpop.f32.mrf.mxu0
      %v917 = vadd.f32 0.0, %v916
      %918 = vmatmul.bf16.gmra.mxu0 %v438
      %v919 = vpop.f32.mrf.mxu0
      %v920 = vadd.f32 0.0, %v919
      %v921 = vpop.f32.mrf.mxu0
      %v922 = vadd.f32 0.0, %v921
      %923 = vmatmul.bf16.gmra.mxu0 %v441
      %v924 = vpop.f32.mrf.mxu0
      %v925 = vadd.f32 0.0, %v924
      %v926 = vpop.f32.mrf.mxu0
      %v927 = vadd.f32 0.0, %v926
      %928 = vmatmul.bf16.gmra.mxu0 %v444
      %v929 = vpop.f32.mrf.mxu0
      %v930 = vadd.f32 0.0, %v929
      %v931 = vpop.f32.mrf.mxu0
      %v932 = vadd.f32 0.0, %v931
      %933 = vmatmul.bf16.gmra.mxu0 %v447
      %v934 = vpop.f32.mrf.mxu0
      %v935 = vadd.f32 0.0, %v934
      %v936 = vpop.f32.mrf.mxu0
      %v937 = vadd.f32 0.0, %v936
      %938 = vmatmul.bf16.gmra.mxu0 %v450
      %v939 = vpop.f32.mrf.mxu0
      %v940 = vadd.f32 0.0, %v939
      %v941 = vpop.f32.mrf.mxu0
      %v942 = vadd.f32 0.0, %v941
      %943 = vmatmul.bf16.gmra.mxu0 %v453
      %v944 = vpop.f32.mrf.mxu0
      %v945 = vadd.f32 0.0, %v944
      %v946 = vpop.f32.mrf.mxu0
      %v947 = vadd.f32 0.0, %v946
      %948 = vmatmul.bf16.gmra.mxu0 %v456
      %v949 = vpop.f32.mrf.mxu0
      %v950 = vadd.f32 0.0, %v949
      %v951 = vpop.f32.mrf.mxu0
      %v952 = vadd.f32 0.0, %v951
      %953 = vmatmul.bf16.gmra.mxu0 %v459
      %v954 = vpop.f32.mrf.mxu0
      %v955 = vadd.f32 0.0, %v954
      %v956 = vpop.f32.mrf.mxu0
      %v957 = vadd.f32 0.0, %v956
      %958 = vmatmul.bf16.gmra.mxu0 %v462
      %v959 = vpop.f32.mrf.mxu0
      %v960 = vadd.f32 0.0, %v959
      %v961 = vpop.f32.mrf.mxu0
      %v962 = vadd.f32 0.0, %v961
      %963 = vmatmul.bf16.gmra.mxu0 %v465
      %v964 = vpop.f32.mrf.mxu0
      %v965 = vadd.f32 0.0, %v964
      %v966 = vpop.f32.mrf.mxu0
      %v967 = vadd.f32 0.0, %v966
      %968 = vmatmul.bf16.gmra.mxu0 %v468
      %v969 = vpop.f32.mrf.mxu0
      %v970 = vadd.f32 0.0, %v969
      %v971 = vpop.f32.mrf.mxu0
      %v972 = vadd.f32 0.0, %v971
      %973 = vmatmul.bf16.gmra.mxu0 %v471
      %v974 = vpop.f32.mrf.mxu0
      %v975 = vadd.f32 0.0, %v974
      %v976 = vpop.f32.mrf.mxu0
      %v977 = vadd.f32 0.0, %v976
      %978 = vmatmul.bf16.gmra.mxu0 %v474
      %v979 = vpop.f32.mrf.mxu0
      %v980 = vadd.f32 0.0, %v979
      %v981 = vpop.f32.mrf.mxu0
      %v982 = vadd.f32 0.0, %v981
      %983 = vmatmul.bf16.gmra.mxu0 %v477
      %v984 = vpop.f32.mrf.mxu0
      %v985 = vadd.f32 0.0, %v984
      %v986 = vpop.f32.mrf.mxu0
      %v987 = vadd.f32 0.0, %v986
      %988 = vmatmul.bf16.gmra.mxu0 %v480
      %v989 = vpop.f32.mrf.mxu0
      %v990 = vadd.f32 0.0, %v989
      %v991 = vpop.f32.mrf.mxu0
      %v992 = vadd.f32 0.0, %v991
      %993 = vmatmul.bf16.gmra.mxu0 %v483
      %v994 = vpop.f32.mrf.mxu0
      %v995 = vadd.f32 0.0, %v994
      %v996 = vpop.f32.mrf.mxu0
      %v997 = vadd.f32 0.0, %v996
      %998 = vmatmul.bf16.gmra.mxu0 %v486
      %v999 = vpop.f32.mrf.mxu0
      %v1000 = vadd.f32 0.0, %v999
      %v1001 = vpop.f32.mrf.mxu0
      %v1002 = vadd.f32 0.0, %v1001
      %1003 = vmatmul.bf16.gmra.mxu0 %v489
      %v1004 = vpop.f32.mrf.mxu0
      %v1005 = vadd.f32 0.0, %v1004
      %v1006 = vpop.f32.mrf.mxu0
      %v1007 = vadd.f32 0.0, %v1006
      %1008 = vmatmul.bf16.gmra.mxu0 %v492
      %v1009 = vpop.f32.mrf.mxu0
      %v1010 = vadd.f32 0.0, %v1009
      %v1011 = vpop.f32.mrf.mxu0
      %v1012 = vadd.f32 0.0, %v1011
      %1013 = vdwg.mxu0
      %1014 = vmatpush.bf16.msra.mxu0 0
      %1015 = vmatpush.bf16.msra.mxu0 0
      %1016 = vmatpush.bf16.msra.mxu0 0
      %1017 = vmatpush.bf16.msra.mxu0 0
      %1018 = vmatpush.bf16.msra.mxu0 0
      %1019 = vmatpush.bf16.msra.mxu0 0
      %1020 = vmatpush.bf16.msra.mxu0 0
      %1021 = vmatpush.bf16.msra.mxu0 %v505
      %1022 = vmatmul.bf16.gmra.mxu0 %v399
      %v1023 = vpop.f32.mrf.mxu0
      %v1024 = vadd.f32 0.0, %v1023
      %v1025 = vpop.f32.mrf.mxu0
      %v1026 = vadd.f32 0.0, %v1025
      %1027 = vmatmul.bf16.gmra.mxu0 %v402
      %v1028 = vpop.f32.mrf.mxu0
      %v1029 = vadd.f32 0.0, %v1028
      %v1030 = vpop.f32.mrf.mxu0
      %v1031 = vadd.f32 0.0, %v1030
      %1032 = vmatmul.bf16.gmra.mxu0 %v405
      %v1033 = vpop.f32.mrf.mxu0
      %v1034 = vadd.f32 0.0, %v1033
      %v1035 = vpop.f32.mrf.mxu0
      %v1036 = vadd.f32 0.0, %v1035
      %1037 = vmatmul.bf16.gmra.mxu0 %v408
      %v1038 = vpop.f32.mrf.mxu0
      %v1039 = vadd.f32 0.0, %v1038
      %v1040 = vpop.f32.mrf.mxu0
      %v1041 = vadd.f32 0.0, %v1040
      %1042 = vmatmul.bf16.gmra.mxu0 %v411
      %v1043 = vpop.f32.mrf.mxu0
      %v1044 = vadd.f32 0.0, %v1043
      %v1045 = vpop.f32.mrf.mxu0
      %v1046 = vadd.f32 0.0, %v1045
      %1047 = vmatmul.bf16.gmra.mxu0 %v414
      %v1048 = vpop.f32.mrf.mxu0
      %v1049 = vadd.f32 0.0, %v1048
      %v1050 = vpop.f32.mrf.mxu0
      %v1051 = vadd.f32 0.0, %v1050
      %1052 = vmatmul.bf16.gmra.mxu0 %v417
      %v1053 = vpop.f32.mrf.mxu0
      %v1054 = vadd.f32 0.0, %v1053
      %v1055 = vpop.f32.mrf.mxu0
      %v1056 = vadd.f32 0.0, %v1055
      %1057 = vmatmul.bf16.gmra.mxu0 %v420
      %v1058 = vpop.f32.mrf.mxu0
      %v1059 = vadd.f32 0.0, %v1058
      %v1060 = vpop.f32.mrf.mxu0
      %v1061 = vadd.f32 0.0, %v1060
      %1062 = vmatmul.bf16.gmra.mxu0 %v423
      %v1063 = vpop.f32.mrf.mxu0
      %v1064 = vadd.f32 0.0, %v1063
      %v1065 = vpop.f32.mrf.mxu0
      %v1066 = vadd.f32 0.0, %v1065
      %1067 = vmatmul.bf16.gmra.mxu0 %v426
      %v1068 = vpop.f32.mrf.mxu0
      %v1069 = vadd.f32 0.0, %v1068
      %v1070 = vpop.f32.mrf.mxu0
      %v1071 = vadd.f32 0.0, %v1070
      %1072 = vmatmul.bf16.gmra.mxu0 %v429
      %v1073 = vpop.f32.mrf.mxu0
      %v1074 = vadd.f32 0.0, %v1073
      %v1075 = vpop.f32.mrf.mxu0
      %v1076 = vadd.f32 0.0, %v1075
      %1077 = vmatmul.bf16.gmra.mxu0 %v432
      %v1078 = vpop.f32.mrf.mxu0
      %v1079 = vadd.f32 0.0, %v1078
      %v1080 = vpop.f32.mrf.mxu0
      %v1081 = vadd.f32 0.0, %v1080
      %1082 = vmatmul.bf16.gmra.mxu0 %v435
      %v1083 = vpop.f32.mrf.mxu0
      %v1084 = vadd.f32 0.0, %v1083
      %v1085 = vpop.f32.mrf.mxu0
      %v1086 = vadd.f32 0.0, %v1085
      %1087 = vmatmul.bf16.gmra.mxu0 %v438
      %v1088 = vpop.f32.mrf.mxu0
      %v1089 = vadd.f32 0.0, %v1088
      %v1090 = vpop.f32.mrf.mxu0
      %v1091 = vadd.f32 0.0, %v1090
      %1092 = vmatmul.bf16.gmra.mxu0 %v441
      %v1093 = vpop.f32.mrf.mxu0
      %v1094 = vadd.f32 0.0, %v1093
      %v1095 = vpop.f32.mrf.mxu0
      %v1096 = vadd.f32 0.0, %v1095
      %1097 = vmatmul.bf16.gmra.mxu0 %v444
      %v1098 = vpop.f32.mrf.mxu0
      %v1099 = vadd.f32 0.0, %v1098
      %v1100 = vpop.f32.mrf.mxu0
      %v1101 = vadd.f32 0.0, %v1100
      %1102 = vmatmul.bf16.gmra.mxu0 %v447
      %v1103 = vpop.f32.mrf.mxu0
      %v1104 = vadd.f32 0.0, %v1103
      %v1105 = vpop.f32.mrf.mxu0
      %v1106 = vadd.f32 0.0, %v1105
      %1107 = vmatmul.bf16.gmra.mxu0 %v450
      %v1108 = vpop.f32.mrf.mxu0
      %v1109 = vadd.f32 0.0, %v1108
      %v1110 = vpop.f32.mrf.mxu0
      %v1111 = vadd.f32 0.0, %v1110
      %1112 = vmatmul.bf16.gmra.mxu0 %v453
      %v1113 = vpop.f32.mrf.mxu0
      %v1114 = vadd.f32 0.0, %v1113
      %v1115 = vpop.f32.mrf.mxu0
      %v1116 = vadd.f32 0.0, %v1115
      %1117 = vmatmul.bf16.gmra.mxu0 %v456
      %v1118 = vpop.f32.mrf.mxu0
      %v1119 = vadd.f32 0.0, %v1118
      %v1120 = vpop.f32.mrf.mxu0
      %v1121 = vadd.f32 0.0, %v1120
      %1122 = vmatmul.bf16.gmra.mxu0 %v459
      %v1123 = vpop.f32.mrf.mxu0
      %v1124 = vadd.f32 0.0, %v1123
      %v1125 = vpop.f32.mrf.mxu0
      %v1126 = vadd.f32 0.0, %v1125
      %1127 = vmatmul.bf16.gmra.mxu0 %v462
      %v1128 = vpop.f32.mrf.mxu0
      %v1129 = vadd.f32 0.0, %v1128
      %v1130 = vpop.f32.mrf.mxu0
      %v1131 = vadd.f32 0.0, %v1130
      %1132 = vmatmul.bf16.gmra.mxu0 %v465
      %v1133 = vpop.f32.mrf.mxu0
      %v1134 = vadd.f32 0.0, %v1133
      %v1135 = vpop.f32.mrf.mxu0
      %v1136 = vadd.f32 0.0, %v1135
      %1137 = vmatmul.bf16.gmra.mxu0 %v468
      %v1138 = vpop.f32.mrf.mxu0
      %v1139 = vadd.f32 0.0, %v1138
      %v1140 = vpop.f32.mrf.mxu0
      %v1141 = vadd.f32 0.0, %v1140
      %1142 = vmatmul.bf16.gmra.mxu0 %v471
      %v1143 = vpop.f32.mrf.mxu0
      %v1144 = vadd.f32 0.0, %v1143
      %v1145 = vpop.f32.mrf.mxu0
      %v1146 = vadd.f32 0.0, %v1145
      %1147 = vmatmul.bf16.gmra.mxu0 %v474
      %v1148 = vpop.f32.mrf.mxu0
      %v1149 = vadd.f32 0.0, %v1148
      %v1150 = vpop.f32.mrf.mxu0
      %v1151 = vadd.f32 0.0, %v1150
      %1152 = vmatmul.bf16.gmra.mxu0 %v477
      %v1153 = vpop.f32.mrf.mxu0
      %v1154 = vadd.f32 0.0, %v1153
      %v1155 = vpop.f32.mrf.mxu0
      %v1156 = vadd.f32 0.0, %v1155
      %1157 = vmatmul.bf16.gmra.mxu0 %v480
      %v1158 = vpop.f32.mrf.mxu0
      %v1159 = vadd.f32 0.0, %v1158
      %v1160 = vpop.f32.mrf.mxu0
      %v1161 = vadd.f32 0.0, %v1160
      %1162 = vmatmul.bf16.gmra.mxu0 %v483
      %v1163 = vpop.f32.mrf.mxu0
      %v1164 = vadd.f32 0.0, %v1163
      %v1165 = vpop.f32.mrf.mxu0
      %v1166 = vadd.f32 0.0, %v1165
      %1167 = vmatmul.bf16.gmra.mxu0 %v486
      %v1168 = vpop.f32.mrf.mxu0
      %v1169 = vadd.f32 0.0, %v1168
      %v1170 = vpop.f32.mrf.mxu0
      %v1171 = vadd.f32 0.0, %v1170
      %1172 = vmatmul.bf16.gmra.mxu0 %v489
      %v1173 = vpop.f32.mrf.mxu0
      %v1174 = vadd.f32 0.0, %v1173
      %v1175 = vpop.f32.mrf.mxu0
      %v1176 = vadd.f32 0.0, %v1175
      %1177 = vmatmul.bf16.gmra.mxu0 %v492
      %v1178 = vpop.f32.mrf.mxu0
      %v1179 = vadd.f32 0.0, %v1178
      %v1180 = vpop.f32.mrf.mxu0
      %v1181 = vadd.f32 0.0, %v1180
      %1182 = vdwg.mxu0
      %v1183 = vmax.f32 %v517, %v686
      %v1184 = vmax.f32 %v1183, %v855
      %v1185 = vmax.f32 %v1184, %v1024
      %1186 = vmax.xlane.f32.xlu0 %v1185
      %v1187 = vpop.xlane.xlu0 %1186
      %v1188 = vmax.f32 %v519, %v688
      %v1189 = vmax.f32 %v1188, %v857
      %v1190 = vmax.f32 %v1189, %v1026
      %1191 = vmax.xlane.f32.xlu0 %v1190
      %v1192 = vpop.xlane.xlu0 %1191
      %v1193 = vmax.f32 %v522, %v691
      %v1194 = vmax.f32 %v1193, %v860
      %v1195 = vmax.f32 %v1194, %v1029
      %1196 = vmax.xlane.f32.xlu0 %v1195
      %v1197 = vpop.xlane.xlu0 %1196
      %v1198 = vmax.f32 %v524, %v693
      %v1199 = vmax.f32 %v1198, %v862
      %v1200 = vmax.f32 %v1199, %v1031
      %1201 = vmax.xlane.f32.xlu0 %v1200
      %v1202 = vpop.xlane.xlu0 %1201
      %v1203 = vmax.f32 %v527, %v696
      %v1204 = vmax.f32 %v1203, %v865
      %v1205 = vmax.f32 %v1204, %v1034
      %1206 = vmax.xlane.f32.xlu0 %v1205
      %v1207 = vpop.xlane.xlu0 %1206
      %v1208 = vmax.f32 %v529, %v698
      %v1209 = vmax.f32 %v1208, %v867
      %v1210 = vmax.f32 %v1209, %v1036
      %1211 = vmax.xlane.f32.xlu0 %v1210
      %v1212 = vpop.xlane.xlu0 %1211
      %v1213 = vmax.f32 %v532, %v701
      %v1214 = vmax.f32 %v1213, %v870
      %v1215 = vmax.f32 %v1214, %v1039
      %1216 = vmax.xlane.f32.xlu0 %v1215
      %v1217 = vpop.xlane.xlu0 %1216
      %v1218 = vmax.f32 %v534, %v703
      %v1219 = vmax.f32 %v1218, %v872
      %v1220 = vmax.f32 %v1219, %v1041
      %1221 = vmax.xlane.f32.xlu0 %v1220
      %v1222 = vpop.xlane.xlu0 %1221
      %v1223 = vmax.f32 %v537, %v706
      %v1224 = vmax.f32 %v1223, %v875
      %v1225 = vmax.f32 %v1224, %v1044
      %1226 = vmax.xlane.f32.xlu0 %v1225
      %v1227 = vpop.xlane.xlu0 %1226
      %v1228 = vmax.f32 %v539, %v708
      %v1229 = vmax.f32 %v1228, %v877
      %v1230 = vmax.f32 %v1229, %v1046
      %1231 = vmax.xlane.f32.xlu0 %v1230
      %v1232 = vpop.xlane.xlu0 %1231
      %v1233 = vmax.f32 %v542, %v711
      %v1234 = vmax.f32 %v1233, %v880
      %v1235 = vmax.f32 %v1234, %v1049
      %1236 = vmax.xlane.f32.xlu0 %v1235
      %v1237 = vpop.xlane.xlu0 %1236
      %v1238 = vmax.f32 %v544, %v713
      %v1239 = vmax.f32 %v1238, %v882
      %v1240 = vmax.f32 %v1239, %v1051
      %1241 = vmax.xlane.f32.xlu0 %v1240
      %v1242 = vpop.xlane.xlu0 %1241
      %v1243 = vmax.f32 %v547, %v716
      %v1244 = vmax.f32 %v1243, %v885
      %v1245 = vmax.f32 %v1244, %v1054
      %1246 = vmax.xlane.f32.xlu0 %v1245
      %v1247 = vpop.xlane.xlu0 %1246
      %v1248 = vmax.f32 %v549, %v718
      %v1249 = vmax.f32 %v1248, %v887
      %v1250 = vmax.f32 %v1249, %v1056
      %1251 = vmax.xlane.f32.xlu0 %v1250
      %v1252 = vpop.xlane.xlu0 %1251
      %v1253 = vmax.f32 %v552, %v721
      %v1254 = vmax.f32 %v1253, %v890
      %v1255 = vmax.f32 %v1254, %v1059
      %1256 = vmax.xlane.f32.xlu0 %v1255
      %v1257 = vpop.xlane.xlu0 %1256
      %v1258 = vmax.f32 %v554, %v723
      %v1259 = vmax.f32 %v1258, %v892
      %v1260 = vmax.f32 %v1259, %v1061
      %1261 = vmax.xlane.f32.xlu0 %v1260
      %v1262 = vpop.xlane.xlu0 %1261
      %v1263 = vmax.f32 %v557, %v726
      %v1264 = vmax.f32 %v1263, %v895
      %v1265 = vmax.f32 %v1264, %v1064
      %1266 = vmax.xlane.f32.xlu0 %v1265
      %v1267 = vpop.xlane.xlu0 %1266
      %v1268 = vmax.f32 %v559, %v728
      %v1269 = vmax.f32 %v1268, %v897
      %v1270 = vmax.f32 %v1269, %v1066
      %1271 = vmax.xlane.f32.xlu0 %v1270
      %v1272 = vpop.xlane.xlu0 %1271
      %v1273 = vmax.f32 %v562, %v731
      %v1274 = vmax.f32 %v1273, %v900
      %v1275 = vmax.f32 %v1274, %v1069
      %1276 = vmax.xlane.f32.xlu0 %v1275
      %v1277 = vpop.xlane.xlu0 %1276
      %v1278 = vmax.f32 %v564, %v733
      %v1279 = vmax.f32 %v1278, %v902
      %v1280 = vmax.f32 %v1279, %v1071
      %1281 = vmax.xlane.f32.xlu0 %v1280
      %v1282 = vpop.xlane.xlu0 %1281
      %v1283 = vmax.f32 %v567, %v736
      %v1284 = vmax.f32 %v1283, %v905
      %v1285 = vmax.f32 %v1284, %v1074
      %1286 = vmax.xlane.f32.xlu0 %v1285
      %v1287 = vpop.xlane.xlu0 %1286
      %v1288 = vmax.f32 %v569, %v738
      %v1289 = vmax.f32 %v1288, %v907
      %v1290 = vmax.f32 %v1289, %v1076
      %1291 = vmax.xlane.f32.xlu0 %v1290
      %v1292 = vpop.xlane.xlu0 %1291
      %v1293 = vmax.f32 %v572, %v741
      %v1294 = vmax.f32 %v1293, %v910
      %v1295 = vmax.f32 %v1294, %v1079
      %1296 = vmax.xlane.f32.xlu0 %v1295
      %v1297 = vpop.xlane.xlu0 %1296
      %v1298 = vmax.f32 %v574, %v743
      %v1299 = vmax.f32 %v1298, %v912
      %v1300 = vmax.f32 %v1299, %v1081
      %1301 = vmax.xlane.f32.xlu0 %v1300
      %v1302 = vpop.xlane.xlu0 %1301
      %v1303 = vmax.f32 %v577, %v746
      %v1304 = vmax.f32 %v1303, %v915
      %v1305 = vmax.f32 %v1304, %v1084
      %1306 = vmax.xlane.f32.xlu0 %v1305
      %v1307 = vpop.xlane.xlu0 %1306
      %v1308 = vmax.f32 %v579, %v748
      %v1309 = vmax.f32 %v1308, %v917
      %v1310 = vmax.f32 %v1309, %v1086
      %1311 = vmax.xlane.f32.xlu0 %v1310
      %v1312 = vpop.xlane.xlu0 %1311
      %v1313 = vmax.f32 %v582, %v751
      %v1314 = vmax.f32 %v1313, %v920
      %v1315 = vmax.f32 %v1314, %v1089
      %1316 = vmax.xlane.f32.xlu0 %v1315
      %v1317 = vpop.xlane.xlu0 %1316
      %v1318 = vmax.f32 %v584, %v753
      %v1319 = vmax.f32 %v1318, %v922
      %v1320 = vmax.f32 %v1319, %v1091
      %1321 = vmax.xlane.f32.xlu0 %v1320
      %v1322 = vpop.xlane.xlu0 %1321
      %v1323 = vmax.f32 %v587, %v756
      %v1324 = vmax.f32 %v1323, %v925
      %v1325 = vmax.f32 %v1324, %v1094
      %1326 = vmax.xlane.f32.xlu0 %v1325
      %v1327 = vpop.xlane.xlu0 %1326
      %v1328 = vmax.f32 %v589, %v758
      %v1329 = vmax.f32 %v1328, %v927
      %v1330 = vmax.f32 %v1329, %v1096
      %1331 = vmax.xlane.f32.xlu0 %v1330
      %v1332 = vpop.xlane.xlu0 %1331
      %v1333 = vmax.f32 %v592, %v761
      %v1334 = vmax.f32 %v1333, %v930
      %v1335 = vmax.f32 %v1334, %v1099
      %1336 = vmax.xlane.f32.xlu0 %v1335
      %v1337 = vpop.xlane.xlu0 %1336
      %v1338 = vmax.f32 %v594, %v763
      %v1339 = vmax.f32 %v1338, %v932
      %v1340 = vmax.f32 %v1339, %v1101
      %1341 = vmax.xlane.f32.xlu0 %v1340
      %v1342 = vpop.xlane.xlu0 %1341
      %v1343 = vmax.f32 %v597, %v766
      %v1344 = vmax.f32 %v1343, %v935
      %v1345 = vmax.f32 %v1344, %v1104
      %1346 = vmax.xlane.f32.xlu0 %v1345
      %v1347 = vpop.xlane.xlu0 %1346
      %v1348 = vmax.f32 %v599, %v768
      %v1349 = vmax.f32 %v1348, %v937
      %v1350 = vmax.f32 %v1349, %v1106
      %1351 = vmax.xlane.f32.xlu0 %v1350
      %v1352 = vpop.xlane.xlu0 %1351
      %v1353 = vmax.f32 %v602, %v771
      %v1354 = vmax.f32 %v1353, %v940
      %v1355 = vmax.f32 %v1354, %v1109
      %1356 = vmax.xlane.f32.xlu0 %v1355
      %v1357 = vpop.xlane.xlu0 %1356
      %v1358 = vmax.f32 %v604, %v773
      %v1359 = vmax.f32 %v1358, %v942
      %v1360 = vmax.f32 %v1359, %v1111
      %1361 = vmax.xlane.f32.xlu0 %v1360
      %v1362 = vpop.xlane.xlu0 %1361
      %v1363 = vmax.f32 %v607, %v776
      %v1364 = vmax.f32 %v1363, %v945
      %v1365 = vmax.f32 %v1364, %v1114
      %1366 = vmax.xlane.f32.xlu0 %v1365
      %v1367 = vpop.xlane.xlu0 %1366
      %v1368 = vmax.f32 %v609, %v778
      %v1369 = vmax.f32 %v1368, %v947
      %v1370 = vmax.f32 %v1369, %v1116
      %1371 = vmax.xlane.f32.xlu0 %v1370
      %v1372 = vpop.xlane.xlu0 %1371
      %v1373 = vmax.f32 %v612, %v781
      %v1374 = vmax.f32 %v1373, %v950
      %v1375 = vmax.f32 %v1374, %v1119
      %1376 = vmax.xlane.f32.xlu0 %v1375
      %v1377 = vpop.xlane.xlu0 %1376
      %v1378 = vmax.f32 %v614, %v783
      %v1379 = vmax.f32 %v1378, %v952
      %v1380 = vmax.f32 %v1379, %v1121
      %1381 = vmax.xlane.f32.xlu0 %v1380
      %v1382 = vpop.xlane.xlu0 %1381
      %v1383 = vmax.f32 %v617, %v786
      %v1384 = vmax.f32 %v1383, %v955
      %v1385 = vmax.f32 %v1384, %v1124
      %1386 = vmax.xlane.f32.xlu0 %v1385
      %v1387 = vpop.xlane.xlu0 %1386
      %v1388 = vmax.f32 %v619, %v788
      %v1389 = vmax.f32 %v1388, %v957
      %v1390 = vmax.f32 %v1389, %v1126
      %1391 = vmax.xlane.f32.xlu0 %v1390
      %v1392 = vpop.xlane.xlu0 %1391
      %v1393 = vmax.f32 %v622, %v791
      %v1394 = vmax.f32 %v1393, %v960
      %v1395 = vmax.f32 %v1394, %v1129
      %1396 = vmax.xlane.f32.xlu0 %v1395
      %v1397 = vpop.xlane.xlu0 %1396
      %v1398 = vmax.f32 %v624, %v793
      %v1399 = vmax.f32 %v1398, %v962
      %v1400 = vmax.f32 %v1399, %v1131
      %1401 = vmax.xlane.f32.xlu0 %v1400
      %v1402 = vpop.xlane.xlu0 %1401
      %v1403 = vmax.f32 %v627, %v796
      %v1404 = vmax.f32 %v1403, %v965
      %v1405 = vmax.f32 %v1404, %v1134
      %1406 = vmax.xlane.f32.xlu0 %v1405
      %v1407 = vpop.xlane.xlu0 %1406
      %v1408 = vmax.f32 %v629, %v798
      %v1409 = vmax.f32 %v1408, %v967
      %v1410 = vmax.f32 %v1409, %v1136
      %1411 = vmax.xlane.f32.xlu0 %v1410
      %v1412 = vpop.xlane.xlu0 %1411
      %v1413 = vmax.f32 %v632, %v801
      %v1414 = vmax.f32 %v1413, %v970
      %v1415 = vmax.f32 %v1414, %v1139
      %1416 = vmax.xlane.f32.xlu0 %v1415
      %v1417 = vpop.xlane.xlu0 %1416
      %v1418 = vmax.f32 %v634, %v803
      %v1419 = vmax.f32 %v1418, %v972
      %v1420 = vmax.f32 %v1419, %v1141
      %1421 = vmax.xlane.f32.xlu0 %v1420
      %v1422 = vpop.xlane.xlu0 %1421
      %v1423 = vmax.f32 %v637, %v806
      %v1424 = vmax.f32 %v1423, %v975
      %v1425 = vmax.f32 %v1424, %v1144
      %1426 = vmax.xlane.f32.xlu0 %v1425
      %v1427 = vpop.xlane.xlu0 %1426
      %v1428 = vmax.f32 %v639, %v808
      %v1429 = vmax.f32 %v1428, %v977
      %v1430 = vmax.f32 %v1429, %v1146
      %1431 = vmax.xlane.f32.xlu0 %v1430
      %v1432 = vpop.xlane.xlu0 %1431
      %v1433 = vmax.f32 %v642, %v811
      %v1434 = vmax.f32 %v1433, %v980
      %v1435 = vmax.f32 %v1434, %v1149
      %1436 = vmax.xlane.f32.xlu0 %v1435
      %v1437 = vpop.xlane.xlu0 %1436
      %v1438 = vmax.f32 %v644, %v813
      %v1439 = vmax.f32 %v1438, %v982
      %v1440 = vmax.f32 %v1439, %v1151
      %1441 = vmax.xlane.f32.xlu0 %v1440
      %v1442 = vpop.xlane.xlu0 %1441
      %v1443 = vmax.f32 %v647, %v816
      %v1444 = vmax.f32 %v1443, %v985
      %v1445 = vmax.f32 %v1444, %v1154
      %1446 = vmax.xlane.f32.xlu0 %v1445
      %v1447 = vpop.xlane.xlu0 %1446
      %v1448 = vmax.f32 %v649, %v818
      %v1449 = vmax.f32 %v1448, %v987
      %v1450 = vmax.f32 %v1449, %v1156
      %1451 = vmax.xlane.f32.xlu0 %v1450
      %v1452 = vpop.xlane.xlu0 %1451
      %v1453 = vmax.f32 %v652, %v821
      %v1454 = vmax.f32 %v1453, %v990
      %v1455 = vmax.f32 %v1454, %v1159
      %1456 = vmax.xlane.f32.xlu0 %v1455
      %v1457 = vpop.xlane.xlu0 %1456
      %v1458 = vmax.f32 %v654, %v823
      %v1459 = vmax.f32 %v1458, %v992
      %v1460 = vmax.f32 %v1459, %v1161
      %1461 = vmax.xlane.f32.xlu0 %v1460
      %v1462 = vpop.xlane.xlu0 %1461
      %v1463 = vmax.f32 %v657, %v826
      %v1464 = vmax.f32 %v1463, %v995
      %v1465 = vmax.f32 %v1464, %v1164
      %1466 = vmax.xlane.f32.xlu0 %v1465
      %v1467 = vpop.xlane.xlu0 %1466
      %v1468 = vmax.f32 %v659, %v828
      %v1469 = vmax.f32 %v1468, %v997
      %v1470 = vmax.f32 %v1469, %v1166
      %1471 = vmax.xlane.f32.xlu0 %v1470
      %v1472 = vpop.xlane.xlu0 %1471
      %v1473 = vmax.f32 %v662, %v831
      %v1474 = vmax.f32 %v1473, %v1000
      %v1475 = vmax.f32 %v1474, %v1169
      %1476 = vmax.xlane.f32.xlu0 %v1475
      %v1477 = vpop.xlane.xlu0 %1476
      %v1478 = vmax.f32 %v664, %v833
      %v1479 = vmax.f32 %v1478, %v1002
      %v1480 = vmax.f32 %v1479, %v1171
      %1481 = vmax.xlane.f32.xlu0 %v1480
      %v1482 = vpop.xlane.xlu0 %1481
      %v1483 = vmax.f32 %v667, %v836
      %v1484 = vmax.f32 %v1483, %v1005
      %v1485 = vmax.f32 %v1484, %v1174
      %1486 = vmax.xlane.f32.xlu0 %v1485
      %v1487 = vpop.xlane.xlu0 %1486
      %v1488 = vmax.f32 %v669, %v838
      %v1489 = vmax.f32 %v1488, %v1007
      %v1490 = vmax.f32 %v1489, %v1176
      %1491 = vmax.xlane.f32.xlu0 %v1490
      %v1492 = vpop.xlane.xlu0 %1491
      %v1493 = vmax.f32 %v672, %v841
      %v1494 = vmax.f32 %v1493, %v1010
      %v1495 = vmax.f32 %v1494, %v1179
      %1496 = vmax.xlane.f32.xlu0 %v1495
      %v1497 = vpop.xlane.xlu0 %1496
      %v1498 = vmax.f32 %v674, %v843
      %v1499 = vmax.f32 %v1498, %v1012
      %v1500 = vmax.f32 %v1499, %v1181
      %1501 = vmax.xlane.f32.xlu0 %v1500
      %v1502 = vpop.xlane.xlu0 %1501
      %v1503 = vsub.f32 %v517, %v1187
      %v1504 = vsub.f32 %v686, %v1187
      %v1505 = vsub.f32 %v855, %v1187
      %v1506 = vsub.f32 %v1024, %v1187
      %v1507 = vsub.f32 %v519, %v1192
      %v1508 = vsub.f32 %v688, %v1192
      %v1509 = vsub.f32 %v857, %v1192
      %v1510 = vsub.f32 %v1026, %v1192
      %v1511 = vsub.f32 %v522, %v1197
      %v1512 = vsub.f32 %v691, %v1197
      %v1513 = vsub.f32 %v860, %v1197
      %v1514 = vsub.f32 %v1029, %v1197
      %v1515 = vsub.f32 %v524, %v1202
      %v1516 = vsub.f32 %v693, %v1202
      %v1517 = vsub.f32 %v862, %v1202
      %v1518 = vsub.f32 %v1031, %v1202
      %v1519 = vsub.f32 %v527, %v1207
      %v1520 = vsub.f32 %v696, %v1207
      %v1521 = vsub.f32 %v865, %v1207
      %v1522 = vsub.f32 %v1034, %v1207
      %v1523 = vsub.f32 %v529, %v1212
      %v1524 = vsub.f32 %v698, %v1212
      %v1525 = vsub.f32 %v867, %v1212
      %v1526 = vsub.f32 %v1036, %v1212
      %v1527 = vsub.f32 %v532, %v1217
      %v1528 = vsub.f32 %v701, %v1217
      %v1529 = vsub.f32 %v870, %v1217
      %v1530 = vsub.f32 %v1039, %v1217
      %v1531 = vsub.f32 %v534, %v1222
      %v1532 = vsub.f32 %v703, %v1222
      %v1533 = vsub.f32 %v872, %v1222
      %v1534 = vsub.f32 %v1041, %v1222
      %v1535 = vsub.f32 %v537, %v1227
      %v1536 = vsub.f32 %v706, %v1227
      %v1537 = vsub.f32 %v875, %v1227
      %v1538 = vsub.f32 %v1044, %v1227
      %v1539 = vsub.f32 %v539, %v1232
      %v1540 = vsub.f32 %v708, %v1232
      %v1541 = vsub.f32 %v877, %v1232
      %v1542 = vsub.f32 %v1046, %v1232
      %v1543 = vsub.f32 %v542, %v1237
      %v1544 = vsub.f32 %v711, %v1237
      %v1545 = vsub.f32 %v880, %v1237
      %v1546 = vsub.f32 %v1049, %v1237
      %v1547 = vsub.f32 %v544, %v1242
      %v1548 = vsub.f32 %v713, %v1242
      %v1549 = vsub.f32 %v882, %v1242
      %v1550 = vsub.f32 %v1051, %v1242
      %v1551 = vsub.f32 %v547, %v1247
      %v1552 = vsub.f32 %v716, %v1247
      %v1553 = vsub.f32 %v885, %v1247
      %v1554 = vsub.f32 %v1054, %v1247
      %v1555 = vsub.f32 %v549, %v1252
      %v1556 = vsub.f32 %v718, %v1252
      %v1557 = vsub.f32 %v887, %v1252
      %v1558 = vsub.f32 %v1056, %v1252
      %v1559 = vsub.f32 %v552, %v1257
      %v1560 = vsub.f32 %v721, %v1257
      %v1561 = vsub.f32 %v890, %v1257
      %v1562 = vsub.f32 %v1059, %v1257
      %v1563 = vsub.f32 %v554, %v1262
      %v1564 = vsub.f32 %v723, %v1262
      %v1565 = vsub.f32 %v892, %v1262
      %v1566 = vsub.f32 %v1061, %v1262
      %v1567 = vsub.f32 %v557, %v1267
      %v1568 = vsub.f32 %v726, %v1267
      %v1569 = vsub.f32 %v895, %v1267
      %v1570 = vsub.f32 %v1064, %v1267
      %v1571 = vsub.f32 %v559, %v1272
      %v1572 = vsub.f32 %v728, %v1272
      %v1573 = vsub.f32 %v897, %v1272
      %v1574 = vsub.f32 %v1066, %v1272
      %v1575 = vsub.f32 %v562, %v1277
      %v1576 = vsub.f32 %v731, %v1277
      %v1577 = vsub.f32 %v900, %v1277
      %v1578 = vsub.f32 %v1069, %v1277
      %v1579 = vsub.f32 %v564, %v1282
      %v1580 = vsub.f32 %v733, %v1282
      %v1581 = vsub.f32 %v902, %v1282
      %v1582 = vsub.f32 %v1071, %v1282
      %v1583 = vsub.f32 %v567, %v1287
      %v1584 = vsub.f32 %v736, %v1287
      %v1585 = vsub.f32 %v905, %v1287
      %v1586 = vsub.f32 %v1074, %v1287
      %v1587 = vsub.f32 %v569, %v1292
      %v1588 = vsub.f32 %v738, %v1292
      %v1589 = vsub.f32 %v907, %v1292
      %v1590 = vsub.f32 %v1076, %v1292
      %v1591 = vsub.f32 %v572, %v1297
      %v1592 = vsub.f32 %v741, %v1297
      %v1593 = vsub.f32 %v910, %v1297
      %v1594 = vsub.f32 %v1079, %v1297
      %v1595 = vsub.f32 %v574, %v1302
      %v1596 = vsub.f32 %v743, %v1302
      %v1597 = vsub.f32 %v912, %v1302
      %v1598 = vsub.f32 %v1081, %v1302
      %v1599 = vsub.f32 %v577, %v1307
      %v1600 = vsub.f32 %v746, %v1307
      %v1601 = vsub.f32 %v915, %v1307
      %v1602 = vsub.f32 %v1084, %v1307
      %v1603 = vsub.f32 %v579, %v1312
      %v1604 = vsub.f32 %v748, %v1312
      %v1605 = vsub.f32 %v917, %v1312
      %v1606 = vsub.f32 %v1086, %v1312
      %v1607 = vsub.f32 %v582, %v1317
      %v1608 = vsub.f32 %v751, %v1317
      %v1609 = vsub.f32 %v920, %v1317
      %v1610 = vsub.f32 %v1089, %v1317
      %v1611 = vsub.f32 %v584, %v1322
      %v1612 = vsub.f32 %v753, %v1322
      %v1613 = vsub.f32 %v922, %v1322
      %v1614 = vsub.f32 %v1091, %v1322
      %v1615 = vsub.f32 %v587, %v1327
      %v1616 = vsub.f32 %v756, %v1327
      %v1617 = vsub.f32 %v925, %v1327
      %v1618 = vsub.f32 %v1094, %v1327
      %v1619 = vsub.f32 %v589, %v1332
      %v1620 = vsub.f32 %v758, %v1332
      %v1621 = vsub.f32 %v927, %v1332
      %v1622 = vsub.f32 %v1096, %v1332
      %v1623 = vsub.f32 %v592, %v1337
      %v1624 = vsub.f32 %v761, %v1337
      %v1625 = vsub.f32 %v930, %v1337
      %v1626 = vsub.f32 %v1099, %v1337
      %v1627 = vsub.f32 %v594, %v1342
      %v1628 = vsub.f32 %v763, %v1342
      %v1629 = vsub.f32 %v932, %v1342
      %v1630 = vsub.f32 %v1101, %v1342
      %v1631 = vsub.f32 %v597, %v1347
      %v1632 = vsub.f32 %v766, %v1347
      %v1633 = vsub.f32 %v935, %v1347
      %v1634 = vsub.f32 %v1104, %v1347
      %v1635 = vsub.f32 %v599, %v1352
      %v1636 = vsub.f32 %v768, %v1352
      %v1637 = vsub.f32 %v937, %v1352
      %v1638 = vsub.f32 %v1106, %v1352
      %v1639 = vsub.f32 %v602, %v1357
      %v1640 = vsub.f32 %v771, %v1357
      %v1641 = vsub.f32 %v940, %v1357
      %v1642 = vsub.f32 %v1109, %v1357
      %v1643 = vsub.f32 %v604, %v1362
      %v1644 = vsub.f32 %v773, %v1362
      %v1645 = vsub.f32 %v942, %v1362
      %v1646 = vsub.f32 %v1111, %v1362
      %v1647 = vsub.f32 %v607, %v1367
      %v1648 = vsub.f32 %v776, %v1367
      %v1649 = vsub.f32 %v945, %v1367
      %v1650 = vsub.f32 %v1114, %v1367
      %v1651 = vsub.f32 %v609, %v1372
      %v1652 = vsub.f32 %v778, %v1372
      %v1653 = vsub.f32 %v947, %v1372
      %v1654 = vsub.f32 %v1116, %v1372
      %v1655 = vsub.f32 %v612, %v1377
      %v1656 = vsub.f32 %v781, %v1377
      %v1657 = vsub.f32 %v950, %v1377
      %v1658 = vsub.f32 %v1119, %v1377
      %v1659 = vsub.f32 %v614, %v1382
      %v1660 = vsub.f32 %v783, %v1382
      %v1661 = vsub.f32 %v952, %v1382
      %v1662 = vsub.f32 %v1121, %v1382
      %v1663 = vsub.f32 %v617, %v1387
      %v1664 = vsub.f32 %v786, %v1387
      %v1665 = vsub.f32 %v955, %v1387
      %v1666 = vsub.f32 %v1124, %v1387
      %v1667 = vsub.f32 %v619, %v1392
      %v1668 = vsub.f32 %v788, %v1392
      %v1669 = vsub.f32 %v957, %v1392
      %v1670 = vsub.f32 %v1126, %v1392
      %v1671 = vsub.f32 %v622, %v1397
      %v1672 = vsub.f32 %v791, %v1397
      %v1673 = vsub.f32 %v960, %v1397
      %v1674 = vsub.f32 %v1129, %v1397
      %v1675 = vsub.f32 %v624, %v1402
      %v1676 = vsub.f32 %v793, %v1402
      %v1677 = vsub.f32 %v962, %v1402
      %v1678 = vsub.f32 %v1131, %v1402
      %v1679 = vsub.f32 %v627, %v1407
      %v1680 = vsub.f32 %v796, %v1407
      %v1681 = vsub.f32 %v965, %v1407
      %v1682 = vsub.f32 %v1134, %v1407
      %v1683 = vsub.f32 %v629, %v1412
      %v1684 = vsub.f32 %v798, %v1412
      %v1685 = vsub.f32 %v967, %v1412
      %v1686 = vsub.f32 %v1136, %v1412
      %v1687 = vsub.f32 %v632, %v1417
      %v1688 = vsub.f32 %v801, %v1417
      %v1689 = vsub.f32 %v970, %v1417
      %v1690 = vsub.f32 %v1139, %v1417
      %v1691 = vsub.f32 %v634, %v1422
      %v1692 = vsub.f32 %v803, %v1422
      %v1693 = vsub.f32 %v972, %v1422
      %v1694 = vsub.f32 %v1141, %v1422
      %v1695 = vsub.f32 %v637, %v1427
      %v1696 = vsub.f32 %v806, %v1427
      %v1697 = vsub.f32 %v975, %v1427
      %v1698 = vsub.f32 %v1144, %v1427
      %v1699 = vsub.f32 %v639, %v1432
      %v1700 = vsub.f32 %v808, %v1432
      %v1701 = vsub.f32 %v977, %v1432
      %v1702 = vsub.f32 %v1146, %v1432
      %v1703 = vsub.f32 %v642, %v1437
      %v1704 = vsub.f32 %v811, %v1437
      %v1705 = vsub.f32 %v980, %v1437
      %v1706 = vsub.f32 %v1149, %v1437
      %v1707 = vsub.f32 %v644, %v1442
      %v1708 = vsub.f32 %v813, %v1442
      %v1709 = vsub.f32 %v982, %v1442
      %v1710 = vsub.f32 %v1151, %v1442
      %v1711 = vsub.f32 %v647, %v1447
      %v1712 = vsub.f32 %v816, %v1447
      %v1713 = vsub.f32 %v985, %v1447
      %v1714 = vsub.f32 %v1154, %v1447
      %v1715 = vsub.f32 %v649, %v1452
      %v1716 = vsub.f32 %v818, %v1452
      %v1717 = vsub.f32 %v987, %v1452
      %v1718 = vsub.f32 %v1156, %v1452
      %v1719 = vsub.f32 %v652, %v1457
      %v1720 = vsub.f32 %v821, %v1457
      %v1721 = vsub.f32 %v990, %v1457
      %v1722 = vsub.f32 %v1159, %v1457
      %v1723 = vsub.f32 %v654, %v1462
      %v1724 = vsub.f32 %v823, %v1462
      %v1725 = vsub.f32 %v992, %v1462
      %v1726 = vsub.f32 %v1161, %v1462
      %v1727 = vsub.f32 %v657, %v1467
      %v1728 = vsub.f32 %v826, %v1467
      %v1729 = vsub.f32 %v995, %v1467
      %v1730 = vsub.f32 %v1164, %v1467
      %v1731 = vsub.f32 %v659, %v1472
      %v1732 = vsub.f32 %v828, %v1472
      %v1733 = vsub.f32 %v997, %v1472
      %v1734 = vsub.f32 %v1166, %v1472
      %v1735 = vsub.f32 %v662, %v1477
      %v1736 = vsub.f32 %v831, %v1477
      %v1737 = vsub.f32 %v1000, %v1477
      %v1738 = vsub.f32 %v1169, %v1477
      %v1739 = vsub.f32 %v664, %v1482
      %v1740 = vsub.f32 %v833, %v1482
      %v1741 = vsub.f32 %v1002, %v1482
      %v1742 = vsub.f32 %v1171, %v1482
      %v1743 = vsub.f32 %v667, %v1487
      %v1744 = vsub.f32 %v836, %v1487
      %v1745 = vsub.f32 %v1005, %v1487
      %v1746 = vsub.f32 %v1174, %v1487
      %v1747 = vsub.f32 %v669, %v1492
      %v1748 = vsub.f32 %v838, %v1492
      %v1749 = vsub.f32 %v1007, %v1492
      %v1750 = vsub.f32 %v1176, %v1492
      %v1751 = vsub.f32 %v672, %v1497
      %v1752 = vsub.f32 %v841, %v1497
      %v1753 = vsub.f32 %v1010, %v1497
      %v1754 = vsub.f32 %v1179, %v1497
      %v1755 = vsub.f32 %v674, %v1502
      %v1756 = vsub.f32 %v843, %v1502
      %v1757 = vsub.f32 %v1012, %v1502
      %v1758 = vsub.f32 %v1181, %v1502
      %v1759 = vmul.f32 %v1503, 1.442695
      %v1760 = vpow.pop %v1759
      %v1761 = vmul.f32 %v1504, 1.442695
      %v1762 = vpow.pop %v1761
      %v1763 = vmul.f32 %v1505, 1.442695
      %v1764 = vpow.pop %v1763
      %v1765 = vmul.f32 %v1506, 1.442695
      %v1766 = vpow.pop %v1765
      %v1767 = vmul.f32 %v1507, 1.442695
      %v1768 = vpow.pop %v1767
      %v1769 = vmul.f32 %v1508, 1.442695
      %v1770 = vpow.pop %v1769
      %v1771 = vmul.f32 %v1509, 1.442695
      %v1772 = vpow.pop %v1771
      %v1773 = vmul.f32 %v1510, 1.442695
      %v1774 = vpow.pop %v1773
      %v1775 = vmul.f32 %v1511, 1.442695
      %v1776 = vpow.pop %v1775
      %v1777 = vmul.f32 %v1512, 1.442695
      %v1778 = vpow.pop %v1777
      %v1779 = vmul.f32 %v1513, 1.442695
      %v1780 = vpow.pop %v1779
      %v1781 = vmul.f32 %v1514, 1.442695
      %v1782 = vpow.pop %v1781
      %v1783 = vmul.f32 %v1515, 1.442695
      %v1784 = vpow.pop %v1783
      %v1785 = vmul.f32 %v1516, 1.442695
      %v1786 = vpow.pop %v1785
      %v1787 = vmul.f32 %v1517, 1.442695
      %v1788 = vpow.pop %v1787
      %v1789 = vmul.f32 %v1518, 1.442695
      %v1790 = vpow.pop %v1789
      %v1791 = vmul.f32 %v1519, 1.442695
      %v1792 = vpow.pop %v1791
      %v1793 = vmul.f32 %v1520, 1.442695
      %v1794 = vpow.pop %v1793
      %v1795 = vmul.f32 %v1521, 1.442695
      %v1796 = vpow.pop %v1795
      %v1797 = vmul.f32 %v1522, 1.442695
      %v1798 = vpow.pop %v1797
      %v1799 = vmul.f32 %v1523, 1.442695
      %v1800 = vpow.pop %v1799
      %v1801 = vmul.f32 %v1524, 1.442695
      %v1802 = vpow.pop %v1801
      %v1803 = vmul.f32 %v1525, 1.442695
      %v1804 = vpow.pop %v1803
      %v1805 = vmul.f32 %v1526, 1.442695
      %v1806 = vpow.pop %v1805
      %v1807 = vmul.f32 %v1527, 1.442695
      %v1808 = vpow.pop %v1807
      %v1809 = vmul.f32 %v1528, 1.442695
      %v1810 = vpow.pop %v1809
      %v1811 = vmul.f32 %v1529, 1.442695
      %v1812 = vpow.pop %v1811
      %v1813 = vmul.f32 %v1530, 1.442695
      %v1814 = vpow.pop %v1813
      %v1815 = vmul.f32 %v1531, 1.442695
      %v1816 = vpow.pop %v1815
      %v1817 = vmul.f32 %v1532, 1.442695
      %v1818 = vpow.pop %v1817
      %v1819 = vmul.f32 %v1533, 1.442695
      %v1820 = vpow.pop %v1819
      %v1821 = vmul.f32 %v1534, 1.442695
      %v1822 = vpow.pop %v1821
      %v1823 = vmul.f32 %v1535, 1.442695
      %v1824 = vpow.pop %v1823
      %v1825 = vmul.f32 %v1536, 1.442695
      %v1826 = vpow.pop %v1825
      %v1827 = vmul.f32 %v1537, 1.442695
      %v1828 = vpow.pop %v1827
      %v1829 = vmul.f32 %v1538, 1.442695
      %v1830 = vpow.pop %v1829
      %v1831 = vmul.f32 %v1539, 1.442695
      %v1832 = vpow.pop %v1831
      %v1833 = vmul.f32 %v1540, 1.442695
      %v1834 = vpow.pop %v1833
      %v1835 = vmul.f32 %v1541, 1.442695
      %v1836 = vpow.pop %v1835
      %v1837 = vmul.f32 %v1542, 1.442695
      %v1838 = vpow.pop %v1837
      %v1839 = vmul.f32 %v1543, 1.442695
      %v1840 = vpow.pop %v1839
      %v1841 = vmul.f32 %v1544, 1.442695
      %v1842 = vpow.pop %v1841
      %v1843 = vmul.f32 %v1545, 1.442695
      %v1844 = vpow.pop %v1843
      %v1845 = vmul.f32 %v1546, 1.442695
      %v1846 = vpow.pop %v1845
      %v1847 = vmul.f32 %v1547, 1.442695
      %v1848 = vpow.pop %v1847
      %v1849 = vmul.f32 %v1548, 1.442695
      %v1850 = vpow.pop %v1849
      %v1851 = vmul.f32 %v1549, 1.442695
      %v1852 = vpow.pop %v1851
      %v1853 = vmul.f32 %v1550, 1.442695
      %v1854 = vpow.pop %v1853
      %v1855 = vmul.f32 %v1551, 1.442695
      %v1856 = vpow.pop %v1855
      %v1857 = vmul.f32 %v1552, 1.442695
      %v1858 = vpow.pop %v1857
      %v1859 = vmul.f32 %v1553, 1.442695
      %v1860 = vpow.pop %v1859
      %v1861 = vmul.f32 %v1554, 1.442695
      %v1862 = vpow.pop %v1861
      %v1863 = vmul.f32 %v1555, 1.442695
      %v1864 = vpow.pop %v1863
      %v1865 = vmul.f32 %v1556, 1.442695
      %v1866 = vpow.pop %v1865
      %v1867 = vmul.f32 %v1557, 1.442695
      %v1868 = vpow.pop %v1867
      %v1869 = vmul.f32 %v1558, 1.442695
      %v1870 = vpow.pop %v1869
      %v1871 = vmul.f32 %v1559, 1.442695
      %v1872 = vpow.pop %v1871
      %v1873 = vmul.f32 %v1560, 1.442695
      %v1874 = vpow.pop %v1873
      %v1875 = vmul.f32 %v1561, 1.442695
      %v1876 = vpow.pop %v1875
      %v1877 = vmul.f32 %v1562, 1.442695
      %v1878 = vpow.pop %v1877
      %v1879 = vmul.f32 %v1563, 1.442695
      %v1880 = vpow.pop %v1879
      %v1881 = vmul.f32 %v1564, 1.442695
      %v1882 = vpow.pop %v1881
      %v1883 = vmul.f32 %v1565, 1.442695
      %v1884 = vpow.pop %v1883
      %v1885 = vmul.f32 %v1566, 1.442695
      %v1886 = vpow.pop %v1885
      %v1887 = vmul.f32 %v1567, 1.442695
      %v1888 = vpow.pop %v1887
      %v1889 = vmul.f32 %v1568, 1.442695
      %v1890 = vpow.pop %v1889
      %v1891 = vmul.f32 %v1569, 1.442695
      %v1892 = vpow.pop %v1891
      %v1893 = vmul.f32 %v1570, 1.442695
      %v1894 = vpow.pop %v1893
      %v1895 = vmul.f32 %v1571, 1.442695
      %v1896 = vpow.pop %v1895
      %v1897 = vmul.f32 %v1572, 1.442695
      %v1898 = vpow.pop %v1897
      %v1899 = vmul.f32 %v1573, 1.442695
      %v1900 = vpow.pop %v1899
      %v1901 = vmul.f32 %v1574, 1.442695
      %v1902 = vpow.pop %v1901
      %v1903 = vmul.f32 %v1575, 1.442695
      %v1904 = vpow.pop %v1903
      %v1905 = vmul.f32 %v1576, 1.442695
      %v1906 = vpow.pop %v1905
      %v1907 = vmul.f32 %v1577, 1.442695
      %v1908 = vpow.pop %v1907
      %v1909 = vmul.f32 %v1578, 1.442695
      %v1910 = vpow.pop %v1909
      %v1911 = vmul.f32 %v1579, 1.442695
      %v1912 = vpow.pop %v1911
      %v1913 = vmul.f32 %v1580, 1.442695
      %v1914 = vpow.pop %v1913
      %v1915 = vmul.f32 %v1581, 1.442695
      %v1916 = vpow.pop %v1915
      %v1917 = vmul.f32 %v1582, 1.442695
      %v1918 = vpow.pop %v1917
      %v1919 = vmul.f32 %v1583, 1.442695
      %v1920 = vpow.pop %v1919
      %v1921 = vmul.f32 %v1584, 1.442695
      %v1922 = vpow.pop %v1921
      %v1923 = vmul.f32 %v1585, 1.442695
      %v1924 = vpow.pop %v1923
      %v1925 = vmul.f32 %v1586, 1.442695
      %v1926 = vpow.pop %v1925
      %v1927 = vmul.f32 %v1587, 1.442695
      %v1928 = vpow.pop %v1927
      %v1929 = vmul.f32 %v1588, 1.442695
      %v1930 = vpow.pop %v1929
      %v1931 = vmul.f32 %v1589, 1.442695
      %v1932 = vpow.pop %v1931
      %v1933 = vmul.f32 %v1590, 1.442695
      %v1934 = vpow.pop %v1933
      %v1935 = vmul.f32 %v1591, 1.442695
      %v1936 = vpow.pop %v1935
      %v1937 = vmul.f32 %v1592, 1.442695
      %v1938 = vpow.pop %v1937
      %v1939 = vmul.f32 %v1593, 1.442695
      %v1940 = vpow.pop %v1939
      %v1941 = vmul.f32 %v1594, 1.442695
      %v1942 = vpow.pop %v1941
      %v1943 = vmul.f32 %v1595, 1.442695
      %v1944 = vpow.pop %v1943
      %v1945 = vmul.f32 %v1596, 1.442695
      %v1946 = vpow.pop %v1945
      %v1947 = vmul.f32 %v1597, 1.442695
      %v1948 = vpow.pop %v1947
      %v1949 = vmul.f32 %v1598, 1.442695
      %v1950 = vpow.pop %v1949
      %v1951 = vmul.f32 %v1599, 1.442695
      %v1952 = vpow.pop %v1951
      %v1953 = vmul.f32 %v1600, 1.442695
      %v1954 = vpow.pop %v1953
      %v1955 = vmul.f32 %v1601, 1.442695
      %v1956 = vpow.pop %v1955
      %v1957 = vmul.f32 %v1602, 1.442695
      %v1958 = vpow.pop %v1957
      %v1959 = vmul.f32 %v1603, 1.442695
      %v1960 = vpow.pop %v1959
      %v1961 = vmul.f32 %v1604, 1.442695
      %v1962 = vpow.pop %v1961
      %v1963 = vmul.f32 %v1605, 1.442695
      %v1964 = vpow.pop %v1963
      %v1965 = vmul.f32 %v1606, 1.442695
      %v1966 = vpow.pop %v1965
      %v1967 = vmul.f32 %v1607, 1.442695
      %v1968 = vpow.pop %v1967
      %v1969 = vmul.f32 %v1608, 1.442695
      %v1970 = vpow.pop %v1969
      %v1971 = vmul.f32 %v1609, 1.442695
      %v1972 = vpow.pop %v1971
      %v1973 = vmul.f32 %v1610, 1.442695
      %v1974 = vpow.pop %v1973
      %v1975 = vmul.f32 %v1611, 1.442695
      %v1976 = vpow.pop %v1975
      %v1977 = vmul.f32 %v1612, 1.442695
      %v1978 = vpow.pop %v1977
      %v1979 = vmul.f32 %v1613, 1.442695
      %v1980 = vpow.pop %v1979
      %v1981 = vmul.f32 %v1614, 1.442695
      %v1982 = vpow.pop %v1981
      %v1983 = vmul.f32 %v1615, 1.442695
      %v1984 = vpow.pop %v1983
      %v1985 = vmul.f32 %v1616, 1.442695
      %v1986 = vpow.pop %v1985
      %v1987 = vmul.f32 %v1617, 1.442695
      %v1988 = vpow.pop %v1987
      %v1989 = vmul.f32 %v1618, 1.442695
      %v1990 = vpow.pop %v1989
      %v1991 = vmul.f32 %v1619, 1.442695
      %v1992 = vpow.pop %v1991
      %v1993 = vmul.f32 %v1620, 1.442695
      %v1994 = vpow.pop %v1993
      %v1995 = vmul.f32 %v1621, 1.442695
      %v1996 = vpow.pop %v1995
      %v1997 = vmul.f32 %v1622, 1.442695
      %v1998 = vpow.pop %v1997
      %v1999 = vmul.f32 %v1623, 1.442695
      %v2000 = vpow.pop %v1999
      %v2001 = vmul.f32 %v1624, 1.442695
      %v2002 = vpow.pop %v2001
      %v2003 = vmul.f32 %v1625, 1.442695
      %v2004 = vpow.pop %v2003
      %v2005 = vmul.f32 %v1626, 1.442695
      %v2006 = vpow.pop %v2005
      %v2007 = vmul.f32 %v1627, 1.442695
      %v2008 = vpow.pop %v2007
      %v2009 = vmul.f32 %v1628, 1.442695
      %v2010 = vpow.pop %v2009
      %v2011 = vmul.f32 %v1629, 1.442695
      %v2012 = vpow.pop %v2011
      %v2013 = vmul.f32 %v1630, 1.442695
      %v2014 = vpow.pop %v2013
      %v2015 = vmul.f32 %v1631, 1.442695
      %v2016 = vpow.pop %v2015
      %v2017 = vmul.f32 %v1632, 1.442695
      %v2018 = vpow.pop %v2017
      %v2019 = vmul.f32 %v1633, 1.442695
      %v2020 = vpow.pop %v2019
      %v2021 = vmul.f32 %v1634, 1.442695
      %v2022 = vpow.pop %v2021
      %v2023 = vmul.f32 %v1635, 1.442695
      %v2024 = vpow.pop %v2023
      %v2025 = vmul.f32 %v1636, 1.442695
      %v2026 = vpow.pop %v2025
      %v2027 = vmul.f32 %v1637, 1.442695
      %v2028 = vpow.pop %v2027
      %v2029 = vmul.f32 %v1638, 1.442695
      %v2030 = vpow.pop %v2029
      %v2031 = vmul.f32 %v1639, 1.442695
      %v2032 = vpow.pop %v2031
      %v2033 = vmul.f32 %v1640, 1.442695
      %v2034 = vpow.pop %v2033
      %v2035 = vmul.f32 %v1641, 1.442695
      %v2036 = vpow.pop %v2035
      %v2037 = vmul.f32 %v1642, 1.442695
      %v2038 = vpow.pop %v2037
      %v2039 = vmul.f32 %v1643, 1.442695
      %v2040 = vpow.pop %v2039
      %v2041 = vmul.f32 %v1644, 1.442695
      %v2042 = vpow.pop %v2041
      %v2043 = vmul.f32 %v1645, 1.442695
      %v2044 = vpow.pop %v2043
      %v2045 = vmul.f32 %v1646, 1.442695
      %v2046 = vpow.pop %v2045
      %v2047 = vmul.f32 %v1647, 1.442695
      %v2048 = vpow.pop %v2047
      %v2049 = vmul.f32 %v1648, 1.442695
      %v2050 = vpow.pop %v2049
      %v2051 = vmul.f32 %v1649, 1.442695
      %v2052 = vpow.pop %v2051
      %v2053 = vmul.f32 %v1650, 1.442695
      %v2054 = vpow.pop %v2053
      %v2055 = vmul.f32 %v1651, 1.442695
      %v2056 = vpow.pop %v2055
      %v2057 = vmul.f32 %v1652, 1.442695
      %v2058 = vpow.pop %v2057
      %v2059 = vmul.f32 %v1653, 1.442695
      %v2060 = vpow.pop %v2059
      %v2061 = vmul.f32 %v1654, 1.442695
      %v2062 = vpow.pop %v2061
      %v2063 = vmul.f32 %v1655, 1.442695
      %v2064 = vpow.pop %v2063
      %v2065 = vmul.f32 %v1656, 1.442695
      %v2066 = vpow.pop %v2065
      %v2067 = vmul.f32 %v1657, 1.442695
      %v2068 = vpow.pop %v2067
      %v2069 = vmul.f32 %v1658, 1.442695
      %v2070 = vpow.pop %v2069
      %v2071 = vmul.f32 %v1659, 1.442695
      %v2072 = vpow.pop %v2071
      %v2073 = vmul.f32 %v1660, 1.442695
      %v2074 = vpow.pop %v2073
      %v2075 = vmul.f32 %v1661, 1.442695
      %v2076 = vpow.pop %v2075
      %v2077 = vmul.f32 %v1662, 1.442695
      %v2078 = vpow.pop %v2077
      %v2079 = vmul.f32 %v1663, 1.442695
      %v2080 = vpow.pop %v2079
      %v2081 = vmul.f32 %v1664, 1.442695
      %v2082 = vpow.pop %v2081
      %v2083 = vmul.f32 %v1665, 1.442695
      %v2084 = vpow.pop %v2083
      %v2085 = vmul.f32 %v1666, 1.442695
      %v2086 = vpow.pop %v2085
      %v2087 = vmul.f32 %v1667, 1.442695
      %v2088 = vpow.pop %v2087
      %v2089 = vmul.f32 %v1668, 1.442695
      %v2090 = vpow.pop %v2089
      %v2091 = vmul.f32 %v1669, 1.442695
      %v2092 = vpow.pop %v2091
      %v2093 = vmul.f32 %v1670, 1.442695
      %v2094 = vpow.pop %v2093
      %v2095 = vmul.f32 %v1671, 1.442695
      %v2096 = vpow.pop %v2095
      %v2097 = vmul.f32 %v1672, 1.442695
      %v2098 = vpow.pop %v2097
      %v2099 = vmul.f32 %v1673, 1.442695
      %v2100 = vpow.pop %v2099
      %v2101 = vmul.f32 %v1674, 1.442695
      %v2102 = vpow.pop %v2101
      %v2103 = vmul.f32 %v1675, 1.442695
      %v2104 = vpow.pop %v2103
      %v2105 = vmul.f32 %v1676, 1.442695
      %v2106 = vpow.pop %v2105
      %v2107 = vmul.f32 %v1677, 1.442695
      %v2108 = vpow.pop %v2107
      %v2109 = vmul.f32 %v1678, 1.442695
      %v2110 = vpow.pop %v2109
      %v2111 = vmul.f32 %v1679, 1.442695
      %v2112 = vpow.pop %v2111
      %v2113 = vmul.f32 %v1680, 1.442695
      %v2114 = vpow.pop %v2113
      %v2115 = vmul.f32 %v1681, 1.442695
      %v2116 = vpow.pop %v2115
      %v2117 = vmul.f32 %v1682, 1.442695
      %v2118 = vpow.pop %v2117
      %v2119 = vmul.f32 %v1683, 1.442695
      %v2120 = vpow.pop %v2119
      %v2121 = vmul.f32 %v1684, 1.442695
      %v2122 = vpow.pop %v2121
      %v2123 = vmul.f32 %v1685, 1.442695
      %v2124 = vpow.pop %v2123
      %v2125 = vmul.f32 %v1686, 1.442695
      %v2126 = vpow.pop %v2125
      %v2127 = vmul.f32 %v1687, 1.442695
      %v2128 = vpow.pop %v2127
      %v2129 = vmul.f32 %v1688, 1.442695
      %v2130 = vpow.pop %v2129
      %v2131 = vmul.f32 %v1689, 1.442695
      %v2132 = vpow.pop %v2131
      %v2133 = vmul.f32 %v1690, 1.442695
      %v2134 = vpow.pop %v2133
      %v2135 = vmul.f32 %v1691, 1.442695
      %v2136 = vpow.pop %v2135
      %v2137 = vmul.f32 %v1692, 1.442695
      %v2138 = vpow.pop %v2137
      %v2139 = vmul.f32 %v1693, 1.442695
      %v2140 = vpow.pop %v2139
      %v2141 = vmul.f32 %v1694, 1.442695
      %v2142 = vpow.pop %v2141
      %v2143 = vmul.f32 %v1695, 1.442695
      %v2144 = vpow.pop %v2143
      %v2145 = vmul.f32 %v1696, 1.442695
      %v2146 = vpow.pop %v2145
      %v2147 = vmul.f32 %v1697, 1.442695
      %v2148 = vpow.pop %v2147
      %v2149 = vmul.f32 %v1698, 1.442695
      %v2150 = vpow.pop %v2149
      %v2151 = vmul.f32 %v1699, 1.442695
      %v2152 = vpow.pop %v2151
      %v2153 = vmul.f32 %v1700, 1.442695
      %v2154 = vpow.pop %v2153
      %v2155 = vmul.f32 %v1701, 1.442695
      %v2156 = vpow.pop %v2155
      %v2157 = vmul.f32 %v1702, 1.442695
      %v2158 = vpow.pop %v2157
      %v2159 = vmul.f32 %v1703, 1.442695
      %v2160 = vpow.pop %v2159
      %v2161 = vmul.f32 %v1704, 1.442695
      %v2162 = vpow.pop %v2161
      %v2163 = vmul.f32 %v1705, 1.442695
      %v2164 = vpow.pop %v2163
      %v2165 = vmul.f32 %v1706, 1.442695
      %v2166 = vpow.pop %v2165
      %v2167 = vmul.f32 %v1707, 1.442695
      %v2168 = vpow.pop %v2167
      %v2169 = vmul.f32 %v1708, 1.442695
      %v2170 = vpow.pop %v2169
      %v2171 = vmul.f32 %v1709, 1.442695
      %v2172 = vpow.pop %v2171
      %v2173 = vmul.f32 %v1710, 1.442695
      %v2174 = vpow.pop %v2173
      %v2175 = vmul.f32 %v1711, 1.442695
      %v2176 = vpow.pop %v2175
      %v2177 = vmul.f32 %v1712, 1.442695
      %v2178 = vpow.pop %v2177
      %v2179 = vmul.f32 %v1713, 1.442695
      %v2180 = vpow.pop %v2179
      %v2181 = vmul.f32 %v1714, 1.442695
      %v2182 = vpow.pop %v2181
      %v2183 = vmul.f32 %v1715, 1.442695
      %v2184 = vpow.pop %v2183
      %v2185 = vmul.f32 %v1716, 1.442695
      %v2186 = vpow.pop %v2185
      %v2187 = vmul.f32 %v1717, 1.442695
      %v2188 = vpow.pop %v2187
      %v2189 = vmul.f32 %v1718, 1.442695
      %v2190 = vpow.pop %v2189
      %v2191 = vmul.f32 %v1719, 1.442695
      %v2192 = vpow.pop %v2191
      %v2193 = vmul.f32 %v1720, 1.442695
      %v2194 = vpow.pop %v2193
      %v2195 = vmul.f32 %v1721, 1.442695
      %v2196 = vpow.pop %v2195
      %v2197 = vmul.f32 %v1722, 1.442695
      %v2198 = vpow.pop %v2197
      %v2199 = vmul.f32 %v1723, 1.442695
      %v2200 = vpow.pop %v2199
      %v2201 = vmul.f32 %v1724, 1.442695
      %v2202 = vpow.pop %v2201
      %v2203 = vmul.f32 %v1725, 1.442695
      %v2204 = vpow.pop %v2203
      %v2205 = vmul.f32 %v1726, 1.442695
      %v2206 = vpow.pop %v2205
      %v2207 = vmul.f32 %v1727, 1.442695
      %v2208 = vpow.pop %v2207
      %v2209 = vmul.f32 %v1728, 1.442695
      %v2210 = vpow.pop %v2209
      %v2211 = vmul.f32 %v1729, 1.442695
      %v2212 = vpow.pop %v2211
      %v2213 = vmul.f32 %v1730, 1.442695
      %v2214 = vpow.pop %v2213
      %v2215 = vmul.f32 %v1731, 1.442695
      %v2216 = vpow.pop %v2215
      %v2217 = vmul.f32 %v1732, 1.442695
      %v2218 = vpow.pop %v2217
      %v2219 = vmul.f32 %v1733, 1.442695
      %v2220 = vpow.pop %v2219
      %v2221 = vmul.f32 %v1734, 1.442695
      %v2222 = vpow.pop %v2221
      %v2223 = vmul.f32 %v1735, 1.442695
      %v2224 = vpow.pop %v2223
      %v2225 = vmul.f32 %v1736, 1.442695
      %v2226 = vpow.pop %v2225
      %v2227 = vmul.f32 %v1737, 1.442695
      %v2228 = vpow.pop %v2227
      %v2229 = vmul.f32 %v1738, 1.442695
      %v2230 = vpow.pop %v2229
      %v2231 = vmul.f32 %v1739, 1.442695
      %v2232 = vpow.pop %v2231
      %v2233 = vmul.f32 %v1740, 1.442695
      %v2234 = vpow.pop %v2233
      %v2235 = vmul.f32 %v1741, 1.442695
      %v2236 = vpow.pop %v2235
      %v2237 = vmul.f32 %v1742, 1.442695
      %v2238 = vpow.pop %v2237
      %v2239 = vmul.f32 %v1743, 1.442695
      %v2240 = vpow.pop %v2239
      %v2241 = vmul.f32 %v1744, 1.442695
      %v2242 = vpow.pop %v2241
      %v2243 = vmul.f32 %v1745, 1.442695
      %v2244 = vpow.pop %v2243
      %v2245 = vmul.f32 %v1746, 1.442695
      %v2246 = vpow.pop %v2245
      %v2247 = vmul.f32 %v1747, 1.442695
      %v2248 = vpow.pop %v2247
      %v2249 = vmul.f32 %v1748, 1.442695
      %v2250 = vpow.pop %v2249
      %v2251 = vmul.f32 %v1749, 1.442695
      %v2252 = vpow.pop %v2251
      %v2253 = vmul.f32 %v1750, 1.442695
      %v2254 = vpow.pop %v2253
      %v2255 = vmul.f32 %v1751, 1.442695
      %v2256 = vpow.pop %v2255
      %v2257 = vmul.f32 %v1752, 1.442695
      %v2258 = vpow.pop %v2257
      %v2259 = vmul.f32 %v1753, 1.442695
      %v2260 = vpow.pop %v2259
      %v2261 = vmul.f32 %v1754, 1.442695
      %v2262 = vpow.pop %v2261
      %v2263 = vmul.f32 %v1755, 1.442695
      %v2264 = vpow.pop %v2263
      %v2265 = vmul.f32 %v1756, 1.442695
      %v2266 = vpow.pop %v2265
      %v2267 = vmul.f32 %v1757, 1.442695
      %v2268 = vpow.pop %v2267
      %v2269 = vmul.f32 %v1758, 1.442695
      %v2270 = vpow.pop %v2269
      %v2271 = vadd.f32 %v1760, %v1762
      %v2272 = vadd.f32 %v2271, %v1764
      %v2273 = vadd.f32 %v2272, %v1766
      %2274 = vadd.xlane.f32.xlu0 %v2273
      %v2275 = vpop.xlane.xlu0 %2274
      %v2276 = vadd.f32 %v1768, %v1770
      %v2277 = vadd.f32 %v2276, %v1772
      %v2278 = vadd.f32 %v2277, %v1774
      %2279 = vadd.xlane.f32.xlu0 %v2278
      %v2280 = vpop.xlane.xlu0 %2279
      %v2281 = vadd.f32 %v1776, %v1778
      %v2282 = vadd.f32 %v2281, %v1780
      %v2283 = vadd.f32 %v2282, %v1782
      %2284 = vadd.xlane.f32.xlu0 %v2283
      %v2285 = vpop.xlane.xlu0 %2284
      %v2286 = vadd.f32 %v1784, %v1786
      %v2287 = vadd.f32 %v2286, %v1788
      %v2288 = vadd.f32 %v2287, %v1790
      %2289 = vadd.xlane.f32.xlu0 %v2288
      %v2290 = vpop.xlane.xlu0 %2289
      %v2291 = vadd.f32 %v1792, %v1794
      %v2292 = vadd.f32 %v2291, %v1796
      %v2293 = vadd.f32 %v2292, %v1798
      %2294 = vadd.xlane.f32.xlu0 %v2293
      %v2295 = vpop.xlane.xlu0 %2294
      %v2296 = vadd.f32 %v1800, %v1802
      %v2297 = vadd.f32 %v2296, %v1804
      %v2298 = vadd.f32 %v2297, %v1806
      %2299 = vadd.xlane.f32.xlu0 %v2298
      %v2300 = vpop.xlane.xlu0 %2299
      %v2301 = vadd.f32 %v1808, %v1810
      %v2302 = vadd.f32 %v2301, %v1812
      %v2303 = vadd.f32 %v2302, %v1814
      %2304 = vadd.xlane.f32.xlu0 %v2303
      %v2305 = vpop.xlane.xlu0 %2304
      %v2306 = vadd.f32 %v1816, %v1818
      %v2307 = vadd.f32 %v2306, %v1820
      %v2308 = vadd.f32 %v2307, %v1822
      %2309 = vadd.xlane.f32.xlu0 %v2308
      %v2310 = vpop.xlane.xlu0 %2309
      %v2311 = vadd.f32 %v1824, %v1826
      %v2312 = vadd.f32 %v2311, %v1828
      %v2313 = vadd.f32 %v2312, %v1830
      %2314 = vadd.xlane.f32.xlu0 %v2313
      %v2315 = vpop.xlane.xlu0 %2314
      %v2316 = vadd.f32 %v1832, %v1834
      %v2317 = vadd.f32 %v2316, %v1836
      %v2318 = vadd.f32 %v2317, %v1838
      %2319 = vadd.xlane.f32.xlu0 %v2318
      %v2320 = vpop.xlane.xlu0 %2319
      %v2321 = vadd.f32 %v1840, %v1842
      %v2322 = vadd.f32 %v2321, %v1844
      %v2323 = vadd.f32 %v2322, %v1846
      %2324 = vadd.xlane.f32.xlu0 %v2323
      %v2325 = vpop.xlane.xlu0 %2324
      %v2326 = vadd.f32 %v1848, %v1850
      %v2327 = vadd.f32 %v2326, %v1852
      %v2328 = vadd.f32 %v2327, %v1854
      %2329 = vadd.xlane.f32.xlu0 %v2328
      %v2330 = vpop.xlane.xlu0 %2329
      %v2331 = vadd.f32 %v1856, %v1858
      %v2332 = vadd.f32 %v2331, %v1860
      %v2333 = vadd.f32 %v2332, %v1862
      %2334 = vadd.xlane.f32.xlu0 %v2333
      %v2335 = vpop.xlane.xlu0 %2334
      %v2336 = vadd.f32 %v1864, %v1866
      %v2337 = vadd.f32 %v2336, %v1868
      %v2338 = vadd.f32 %v2337, %v1870
      %2339 = vadd.xlane.f32.xlu0 %v2338
      %v2340 = vpop.xlane.xlu0 %2339
      %v2341 = vadd.f32 %v1872, %v1874
      %v2342 = vadd.f32 %v2341, %v1876
      %v2343 = vadd.f32 %v2342, %v1878
      %2344 = vadd.xlane.f32.xlu0 %v2343
      %v2345 = vpop.xlane.xlu0 %2344
      %v2346 = vadd.f32 %v1880, %v1882
      %v2347 = vadd.f32 %v2346, %v1884
      %v2348 = vadd.f32 %v2347, %v1886
      %2349 = vadd.xlane.f32.xlu0 %v2348
      %v2350 = vpop.xlane.xlu0 %2349
      %v2351 = vadd.f32 %v1888, %v1890
      %v2352 = vadd.f32 %v2351, %v1892
      %v2353 = vadd.f32 %v2352, %v1894
      %2354 = vadd.xlane.f32.xlu0 %v2353
      %v2355 = vpop.xlane.xlu0 %2354
      %v2356 = vadd.f32 %v1896, %v1898
      %v2357 = vadd.f32 %v2356, %v1900
      %v2358 = vadd.f32 %v2357, %v1902
      %2359 = vadd.xlane.f32.xlu0 %v2358
      %v2360 = vpop.xlane.xlu0 %2359
      %v2361 = vadd.f32 %v1904, %v1906
      %v2362 = vadd.f32 %v2361, %v1908
      %v2363 = vadd.f32 %v2362, %v1910
      %2364 = vadd.xlane.f32.xlu0 %v2363
      %v2365 = vpop.xlane.xlu0 %2364
      %v2366 = vadd.f32 %v1912, %v1914
      %v2367 = vadd.f32 %v2366, %v1916
      %v2368 = vadd.f32 %v2367, %v1918
      %2369 = vadd.xlane.f32.xlu0 %v2368
      %v2370 = vpop.xlane.xlu0 %2369
      %v2371 = vadd.f32 %v1920, %v1922
      %v2372 = vadd.f32 %v2371, %v1924
      %v2373 = vadd.f32 %v2372, %v1926
      %2374 = vadd.xlane.f32.xlu0 %v2373
      %v2375 = vpop.xlane.xlu0 %2374
      %v2376 = vadd.f32 %v1928, %v1930
      %v2377 = vadd.f32 %v2376, %v1932
      %v2378 = vadd.f32 %v2377, %v1934
      %2379 = vadd.xlane.f32.xlu0 %v2378
      %v2380 = vpop.xlane.xlu0 %2379
      %v2381 = vadd.f32 %v1936, %v1938
      %v2382 = vadd.f32 %v2381, %v1940
      %v2383 = vadd.f32 %v2382, %v1942
      %2384 = vadd.xlane.f32.xlu0 %v2383
      %v2385 = vpop.xlane.xlu0 %2384
      %v2386 = vadd.f32 %v1944, %v1946
      %v2387 = vadd.f32 %v2386, %v1948
      %v2388 = vadd.f32 %v2387, %v1950
      %2389 = vadd.xlane.f32.xlu0 %v2388
      %v2390 = vpop.xlane.xlu0 %2389
      %v2391 = vadd.f32 %v1952, %v1954
      %v2392 = vadd.f32 %v2391, %v1956
      %v2393 = vadd.f32 %v2392, %v1958
      %2394 = vadd.xlane.f32.xlu0 %v2393
      %v2395 = vpop.xlane.xlu0 %2394
      %v2396 = vadd.f32 %v1960, %v1962
      %v2397 = vadd.f32 %v2396, %v1964
      %v2398 = vadd.f32 %v2397, %v1966
      %2399 = vadd.xlane.f32.xlu0 %v2398
      %v2400 = vpop.xlane.xlu0 %2399
      %v2401 = vadd.f32 %v1968, %v1970
      %v2402 = vadd.f32 %v2401, %v1972
      %v2403 = vadd.f32 %v2402, %v1974
      %2404 = vadd.xlane.f32.xlu0 %v2403
      %v2405 = vpop.xlane.xlu0 %2404
      %v2406 = vadd.f32 %v1976, %v1978
      %v2407 = vadd.f32 %v2406, %v1980
      %v2408 = vadd.f32 %v2407, %v1982
      %2409 = vadd.xlane.f32.xlu0 %v2408
      %v2410 = vpop.xlane.xlu0 %2409
      %v2411 = vadd.f32 %v1984, %v1986
      %v2412 = vadd.f32 %v2411, %v1988
      %v2413 = vadd.f32 %v2412, %v1990
      %2414 = vadd.xlane.f32.xlu0 %v2413
      %v2415 = vpop.xlane.xlu0 %2414
      %v2416 = vadd.f32 %v1992, %v1994
      %v2417 = vadd.f32 %v2416, %v1996
      %v2418 = vadd.f32 %v2417, %v1998
      %2419 = vadd.xlane.f32.xlu0 %v2418
      %v2420 = vpop.xlane.xlu0 %2419
      %v2421 = vadd.f32 %v2000, %v2002
      %v2422 = vadd.f32 %v2421, %v2004
      %v2423 = vadd.f32 %v2422, %v2006
      %2424 = vadd.xlane.f32.xlu0 %v2423
      %v2425 = vpop.xlane.xlu0 %2424
      %v2426 = vadd.f32 %v2008, %v2010
      %v2427 = vadd.f32 %v2426, %v2012
      %v2428 = vadd.f32 %v2427, %v2014
      %2429 = vadd.xlane.f32.xlu0 %v2428
      %v2430 = vpop.xlane.xlu0 %2429
      %v2431 = vadd.f32 %v2016, %v2018
      %v2432 = vadd.f32 %v2431, %v2020
      %v2433 = vadd.f32 %v2432, %v2022
      %2434 = vadd.xlane.f32.xlu0 %v2433
      %v2435 = vpop.xlane.xlu0 %2434
      %v2436 = vadd.f32 %v2024, %v2026
      %v2437 = vadd.f32 %v2436, %v2028
      %v2438 = vadd.f32 %v2437, %v2030
      %2439 = vadd.xlane.f32.xlu0 %v2438
      %v2440 = vpop.xlane.xlu0 %2439
      %v2441 = vadd.f32 %v2032, %v2034
      %v2442 = vadd.f32 %v2441, %v2036
      %v2443 = vadd.f32 %v2442, %v2038
      %2444 = vadd.xlane.f32.xlu0 %v2443
      %v2445 = vpop.xlane.xlu0 %2444
      %v2446 = vadd.f32 %v2040, %v2042
      %v2447 = vadd.f32 %v2446, %v2044
      %v2448 = vadd.f32 %v2447, %v2046
      %2449 = vadd.xlane.f32.xlu0 %v2448
      %v2450 = vpop.xlane.xlu0 %2449
      %v2451 = vadd.f32 %v2048, %v2050
      %v2452 = vadd.f32 %v2451, %v2052
      %v2453 = vadd.f32 %v2452, %v2054
      %2454 = vadd.xlane.f32.xlu0 %v2453
      %v2455 = vpop.xlane.xlu0 %2454
      %v2456 = vadd.f32 %v2056, %v2058
      %v2457 = vadd.f32 %v2456, %v2060
      %v2458 = vadd.f32 %v2457, %v2062
      %2459 = vadd.xlane.f32.xlu0 %v2458
      %v2460 = vpop.xlane.xlu0 %2459
      %v2461 = vadd.f32 %v2064, %v2066
      %v2462 = vadd.f32 %v2461, %v2068
      %v2463 = vadd.f32 %v2462, %v2070
      %2464 = vadd.xlane.f32.xlu0 %v2463
      %v2465 = vpop.xlane.xlu0 %2464
      %v2466 = vadd.f32 %v2072, %v2074
      %v2467 = vadd.f32 %v2466, %v2076
      %v2468 = vadd.f32 %v2467, %v2078
      %2469 = vadd.xlane.f32.xlu0 %v2468
      %v2470 = vpop.xlane.xlu0 %2469
      %v2471 = vadd.f32 %v2080, %v2082
      %v2472 = vadd.f32 %v2471, %v2084
      %v2473 = vadd.f32 %v2472, %v2086
      %2474 = vadd.xlane.f32.xlu0 %v2473
      %v2475 = vpop.xlane.xlu0 %2474
      %v2476 = vadd.f32 %v2088, %v2090
      %v2477 = vadd.f32 %v2476, %v2092
      %v2478 = vadd.f32 %v2477, %v2094
      %2479 = vadd.xlane.f32.xlu0 %v2478
      %v2480 = vpop.xlane.xlu0 %2479
      %v2481 = vadd.f32 %v2096, %v2098
      %v2482 = vadd.f32 %v2481, %v2100
      %v2483 = vadd.f32 %v2482, %v2102
      %2484 = vadd.xlane.f32.xlu0 %v2483
      %v2485 = vpop.xlane.xlu0 %2484
      %v2486 = vadd.f32 %v2104, %v2106
      %v2487 = vadd.f32 %v2486, %v2108
      %v2488 = vadd.f32 %v2487, %v2110
      %2489 = vadd.xlane.f32.xlu0 %v2488
      %v2490 = vpop.xlane.xlu0 %2489
      %v2491 = vadd.f32 %v2112, %v2114
      %v2492 = vadd.f32 %v2491, %v2116
      %v2493 = vadd.f32 %v2492, %v2118
      %2494 = vadd.xlane.f32.xlu0 %v2493
      %v2495 = vpop.xlane.xlu0 %2494
      %v2496 = vadd.f32 %v2120, %v2122
      %v2497 = vadd.f32 %v2496, %v2124
      %v2498 = vadd.f32 %v2497, %v2126
      %2499 = vadd.xlane.f32.xlu0 %v2498
      %v2500 = vpop.xlane.xlu0 %2499
      %v2501 = vadd.f32 %v2128, %v2130
      %v2502 = vadd.f32 %v2501, %v2132
      %v2503 = vadd.f32 %v2502, %v2134
      %2504 = vadd.xlane.f32.xlu0 %v2503
      %v2505 = vpop.xlane.xlu0 %2504
      %v2506 = vadd.f32 %v2136, %v2138
      %v2507 = vadd.f32 %v2506, %v2140
      %v2508 = vadd.f32 %v2507, %v2142
      %2509 = vadd.xlane.f32.xlu0 %v2508
      %v2510 = vpop.xlane.xlu0 %2509
      %v2511 = vadd.f32 %v2144, %v2146
      %v2512 = vadd.f32 %v2511, %v2148
      %v2513 = vadd.f32 %v2512, %v2150
      %2514 = vadd.xlane.f32.xlu0 %v2513
      %v2515 = vpop.xlane.xlu0 %2514
      %v2516 = vadd.f32 %v2152, %v2154
      %v2517 = vadd.f32 %v2516, %v2156
      %v2518 = vadd.f32 %v2517, %v2158
      %2519 = vadd.xlane.f32.xlu0 %v2518
      %v2520 = vpop.xlane.xlu0 %2519
      %v2521 = vadd.f32 %v2160, %v2162
      %v2522 = vadd.f32 %v2521, %v2164
      %v2523 = vadd.f32 %v2522, %v2166
      %2524 = vadd.xlane.f32.xlu0 %v2523
      %v2525 = vpop.xlane.xlu0 %2524
      %v2526 = vadd.f32 %v2168, %v2170
      %v2527 = vadd.f32 %v2526, %v2172
      %v2528 = vadd.f32 %v2527, %v2174
      %2529 = vadd.xlane.f32.xlu0 %v2528
      %v2530 = vpop.xlane.xlu0 %2529
      %v2531 = vadd.f32 %v2176, %v2178
      %v2532 = vadd.f32 %v2531, %v2180
      %v2533 = vadd.f32 %v2532, %v2182
      %2534 = vadd.xlane.f32.xlu0 %v2533
      %v2535 = vpop.xlane.xlu0 %2534
      %v2536 = vadd.f32 %v2184, %v2186
      %v2537 = vadd.f32 %v2536, %v2188
      %v2538 = vadd.f32 %v2537, %v2190
      %2539 = vadd.xlane.f32.xlu0 %v2538
      %v2540 = vpop.xlane.xlu0 %2539
      %v2541 = vadd.f32 %v2192, %v2194
      %v2542 = vadd.f32 %v2541, %v2196
      %v2543 = vadd.f32 %v2542, %v2198
      %2544 = vadd.xlane.f32.xlu0 %v2543
      %v2545 = vpop.xlane.xlu0 %2544
      %v2546 = vadd.f32 %v2200, %v2202
      %v2547 = vadd.f32 %v2546, %v2204
      %v2548 = vadd.f32 %v2547, %v2206
      %2549 = vadd.xlane.f32.xlu0 %v2548
      %v2550 = vpop.xlane.xlu0 %2549
      %v2551 = vadd.f32 %v2208, %v2210
      %v2552 = vadd.f32 %v2551, %v2212
      %v2553 = vadd.f32 %v2552, %v2214
      %2554 = vadd.xlane.f32.xlu0 %v2553
      %v2555 = vpop.xlane.xlu0 %2554
      %v2556 = vadd.f32 %v2216, %v2218
      %v2557 = vadd.f32 %v2556, %v2220
      %v2558 = vadd.f32 %v2557, %v2222
      %2559 = vadd.xlane.f32.xlu0 %v2558
      %v2560 = vpop.xlane.xlu0 %2559
      %v2561 = vadd.f32 %v2224, %v2226
      %v2562 = vadd.f32 %v2561, %v2228
      %v2563 = vadd.f32 %v2562, %v2230
      %2564 = vadd.xlane.f32.xlu0 %v2563
      %v2565 = vpop.xlane.xlu0 %2564
      %v2566 = vadd.f32 %v2232, %v2234
      %v2567 = vadd.f32 %v2566, %v2236
      %v2568 = vadd.f32 %v2567, %v2238
      %2569 = vadd.xlane.f32.xlu0 %v2568
      %v2570 = vpop.xlane.xlu0 %2569
      %v2571 = vadd.f32 %v2240, %v2242
      %v2572 = vadd.f32 %v2571, %v2244
      %v2573 = vadd.f32 %v2572, %v2246
      %2574 = vadd.xlane.f32.xlu0 %v2573
      %v2575 = vpop.xlane.xlu0 %2574
      %v2576 = vadd.f32 %v2248, %v2250
      %v2577 = vadd.f32 %v2576, %v2252
      %v2578 = vadd.f32 %v2577, %v2254
      %2579 = vadd.xlane.f32.xlu0 %v2578
      %v2580 = vpop.xlane.xlu0 %2579
      %v2581 = vadd.f32 %v2256, %v2258
      %v2582 = vadd.f32 %v2581, %v2260
      %v2583 = vadd.f32 %v2582, %v2262
      %2584 = vadd.xlane.f32.xlu0 %v2583
      %v2585 = vpop.xlane.xlu0 %2584
      %v2586 = vadd.f32 %v2264, %v2266
      %v2587 = vadd.f32 %v2586, %v2268
      %v2588 = vadd.f32 %v2587, %v2270
      %2589 = vadd.xlane.f32.xlu0 %v2588
      %v2590 = vpop.xlane.xlu0 %2589
      %v2591 = vrcp.pop %v2275
      %v2592 = vmul.f32 %v2275, %v2591
      %v2593 = vsub.f32 1.0, %v2592
      %v2594 = vmul.f32 %v2591, %v2593
      %v2595 = vadd.f32 %v2591, %v2594
      %vm2596 = vweird.f32 %v2275
      %vm2597 = vweird.f32 %v2591
      %vm2598 = vmor %vm2596, %vm2597
      %v2599 = vsel %vm2598, %v2591, %v2595
      %v2600 = vand.u32 2147483647, %v2275
      %vm2601 = vcmp.eq.f32.partialorder %v2600, 8.507059e+37
      %v2602 = vand.u32 %v2275, 2147483648
      %v2603 = vor.u32 1.1754944e-38, %v2602
      %v2604 = vsel %vm2601, %v2603, %v2599
      %v2605 = vrcp.pop %v2280
      %v2606 = vmul.f32 %v2280, %v2605
      %v2607 = vsub.f32 1.0, %v2606
      %v2608 = vmul.f32 %v2605, %v2607
      %v2609 = vadd.f32 %v2605, %v2608
      %vm2610 = vweird.f32 %v2280
      %vm2611 = vweird.f32 %v2605
      %vm2612 = vmor %vm2610, %vm2611
      %v2613 = vsel %vm2612, %v2605, %v2609
      %v2614 = vand.u32 2147483647, %v2280
      %vm2615 = vcmp.eq.f32.partialorder %v2614, 8.507059e+37
      %v2616 = vand.u32 %v2280, 2147483648
      %v2617 = vor.u32 1.1754944e-38, %v2616
      %v2618 = vsel %vm2615, %v2617, %v2613
      %v2619 = vrcp.pop %v2285
      %v2620 = vmul.f32 %v2285, %v2619
      %v2621 = vsub.f32 1.0, %v2620
      %v2622 = vmul.f32 %v2619, %v2621
      %v2623 = vadd.f32 %v2619, %v2622
      %vm2624 = vweird.f32 %v2285
      %vm2625 = vweird.f32 %v2619
      %vm2626 = vmor %vm2624, %vm2625
      %v2627 = vsel %vm2626, %v2619, %v2623
      %v2628 = vand.u32 2147483647, %v2285
      %vm2629 = vcmp.eq.f32.partialorder %v2628, 8.507059e+37
      %v2630 = vand.u32 %v2285, 2147483648
      %v2631 = vor.u32 1.1754944e-38, %v2630
      %v2632 = vsel %vm2629, %v2631, %v2627
      %v2633 = vrcp.pop %v2290
      %v2634 = vmul.f32 %v2290, %v2633
      %v2635 = vsub.f32 1.0, %v2634
      %v2636 = vmul.f32 %v2633, %v2635
      %v2637 = vadd.f32 %v2633, %v2636
      %vm2638 = vweird.f32 %v2290
      %vm2639 = vweird.f32 %v2633
      %vm2640 = vmor %vm2638, %vm2639
      %v2641 = vsel %vm2640, %v2633, %v2637
      %v2642 = vand.u32 2147483647, %v2290
      %vm2643 = vcmp.eq.f32.partialorder %v2642, 8.507059e+37
      %v2644 = vand.u32 %v2290, 2147483648
      %v2645 = vor.u32 1.1754944e-38, %v2644
      %v2646 = vsel %vm2643, %v2645, %v2641
      %v2647 = vrcp.pop %v2295
      %v2648 = vmul.f32 %v2295, %v2647
      %v2649 = vsub.f32 1.0, %v2648
      %v2650 = vmul.f32 %v2647, %v2649
      %v2651 = vadd.f32 %v2647, %v2650
      %vm2652 = vweird.f32 %v2295
      %vm2653 = vweird.f32 %v2647
      %vm2654 = vmor %vm2652, %vm2653
      %v2655 = vsel %vm2654, %v2647, %v2651
      %v2656 = vand.u32 2147483647, %v2295
      %vm2657 = vcmp.eq.f32.partialorder %v2656, 8.507059e+37
      %v2658 = vand.u32 %v2295, 2147483648
      %v2659 = vor.u32 1.1754944e-38, %v2658
      %v2660 = vsel %vm2657, %v2659, %v2655
      %v2661 = vrcp.pop %v2300
      %v2662 = vmul.f32 %v2300, %v2661
      %v2663 = vsub.f32 1.0, %v2662
      %v2664 = vmul.f32 %v2661, %v2663
      %v2665 = vadd.f32 %v2661, %v2664
      %vm2666 = vweird.f32 %v2300
      %vm2667 = vweird.f32 %v2661
      %vm2668 = vmor %vm2666, %vm2667
      %v2669 = vsel %vm2668, %v2661, %v2665
      %v2670 = vand.u32 2147483647, %v2300
      %vm2671 = vcmp.eq.f32.partialorder %v2670, 8.507059e+37
      %v2672 = vand.u32 %v2300, 2147483648
      %v2673 = vor.u32 1.1754944e-38, %v2672
      %v2674 = vsel %vm2671, %v2673, %v2669
      %v2675 = vrcp.pop %v2305
      %v2676 = vmul.f32 %v2305, %v2675
      %v2677 = vsub.f32 1.0, %v2676
      %v2678 = vmul.f32 %v2675, %v2677
      %v2679 = vadd.f32 %v2675, %v2678
      %vm2680 = vweird.f32 %v2305
      %vm2681 = vweird.f32 %v2675
      %vm2682 = vmor %vm2680, %vm2681
      %v2683 = vsel %vm2682, %v2675, %v2679
      %v2684 = vand.u32 2147483647, %v2305
      %vm2685 = vcmp.eq.f32.partialorder %v2684, 8.507059e+37
      %v2686 = vand.u32 %v2305, 2147483648
      %v2687 = vor.u32 1.1754944e-38, %v2686
      %v2688 = vsel %vm2685, %v2687, %v2683
      %v2689 = vrcp.pop %v2310
      %v2690 = vmul.f32 %v2310, %v2689
      %v2691 = vsub.f32 1.0, %v2690
      %v2692 = vmul.f32 %v2689, %v2691
      %v2693 = vadd.f32 %v2689, %v2692
      %vm2694 = vweird.f32 %v2310
      %vm2695 = vweird.f32 %v2689
      %vm2696 = vmor %vm2694, %vm2695
      %v2697 = vsel %vm2696, %v2689, %v2693
      %v2698 = vand.u32 2147483647, %v2310
      %vm2699 = vcmp.eq.f32.partialorder %v2698, 8.507059e+37
      %v2700 = vand.u32 %v2310, 2147483648
      %v2701 = vor.u32 1.1754944e-38, %v2700
      %v2702 = vsel %vm2699, %v2701, %v2697
      %v2703 = vrcp.pop %v2315
      %v2704 = vmul.f32 %v2315, %v2703
      %v2705 = vsub.f32 1.0, %v2704
      %v2706 = vmul.f32 %v2703, %v2705
      %v2707 = vadd.f32 %v2703, %v2706
      %vm2708 = vweird.f32 %v2315
      %vm2709 = vweird.f32 %v2703
      %vm2710 = vmor %vm2708, %vm2709
      %v2711 = vsel %vm2710, %v2703, %v2707
      %v2712 = vand.u32 2147483647, %v2315
      %vm2713 = vcmp.eq.f32.partialorder %v2712, 8.507059e+37
      %v2714 = vand.u32 %v2315, 2147483648
      %v2715 = vor.u32 1.1754944e-38, %v2714
      %v2716 = vsel %vm2713, %v2715, %v2711
      %v2717 = vrcp.pop %v2320
      %v2718 = vmul.f32 %v2320, %v2717
      %v2719 = vsub.f32 1.0, %v2718
      %v2720 = vmul.f32 %v2717, %v2719
      %v2721 = vadd.f32 %v2717, %v2720
      %vm2722 = vweird.f32 %v2320
      %vm2723 = vweird.f32 %v2717
      %vm2724 = vmor %vm2722, %vm2723
      %v2725 = vsel %vm2724, %v2717, %v2721
      %v2726 = vand.u32 2147483647, %v2320
      %vm2727 = vcmp.eq.f32.partialorder %v2726, 8.507059e+37
      %v2728 = vand.u32 %v2320, 2147483648
      %v2729 = vor.u32 1.1754944e-38, %v2728
      %v2730 = vsel %vm2727, %v2729, %v2725
      %v2731 = vrcp.pop %v2325
      %v2732 = vmul.f32 %v2325, %v2731
      %v2733 = vsub.f32 1.0, %v2732
      %v2734 = vmul.f32 %v2731, %v2733
      %v2735 = vadd.f32 %v2731, %v2734
      %vm2736 = vweird.f32 %v2325
      %vm2737 = vweird.f32 %v2731
      %vm2738 = vmor %vm2736, %vm2737
      %v2739 = vsel %vm2738, %v2731, %v2735
      %v2740 = vand.u32 2147483647, %v2325
      %vm2741 = vcmp.eq.f32.partialorder %v2740, 8.507059e+37
      %v2742 = vand.u32 %v2325, 2147483648
      %v2743 = vor.u32 1.1754944e-38, %v2742
      %v2744 = vsel %vm2741, %v2743, %v2739
      %v2745 = vrcp.pop %v2330
      %v2746 = vmul.f32 %v2330, %v2745
      %v2747 = vsub.f32 1.0, %v2746
      %v2748 = vmul.f32 %v2745, %v2747
      %v2749 = vadd.f32 %v2745, %v2748
      %vm2750 = vweird.f32 %v2330
      %vm2751 = vweird.f32 %v2745
      %vm2752 = vmor %vm2750, %vm2751
      %v2753 = vsel %vm2752, %v2745, %v2749
      %v2754 = vand.u32 2147483647, %v2330
      %vm2755 = vcmp.eq.f32.partialorder %v2754, 8.507059e+37
      %v2756 = vand.u32 %v2330, 2147483648
      %v2757 = vor.u32 1.1754944e-38, %v2756
      %v2758 = vsel %vm2755, %v2757, %v2753
      %v2759 = vrcp.pop %v2335
      %v2760 = vmul.f32 %v2335, %v2759
      %v2761 = vsub.f32 1.0, %v2760
      %v2762 = vmul.f32 %v2759, %v2761
      %v2763 = vadd.f32 %v2759, %v2762
      %vm2764 = vweird.f32 %v2335
      %vm2765 = vweird.f32 %v2759
      %vm2766 = vmor %vm2764, %vm2765
      %v2767 = vsel %vm2766, %v2759, %v2763
      %v2768 = vand.u32 2147483647, %v2335
      %vm2769 = vcmp.eq.f32.partialorder %v2768, 8.507059e+37
      %v2770 = vand.u32 %v2335, 2147483648
      %v2771 = vor.u32 1.1754944e-38, %v2770
      %v2772 = vsel %vm2769, %v2771, %v2767
      %v2773 = vrcp.pop %v2340
      %v2774 = vmul.f32 %v2340, %v2773
      %v2775 = vsub.f32 1.0, %v2774
      %v2776 = vmul.f32 %v2773, %v2775
      %v2777 = vadd.f32 %v2773, %v2776
      %vm2778 = vweird.f32 %v2340
      %vm2779 = vweird.f32 %v2773
      %vm2780 = vmor %vm2778, %vm2779
      %v2781 = vsel %vm2780, %v2773, %v2777
      %v2782 = vand.u32 2147483647, %v2340
      %vm2783 = vcmp.eq.f32.partialorder %v2782, 8.507059e+37
      %v2784 = vand.u32 %v2340, 2147483648
      %v2785 = vor.u32 1.1754944e-38, %v2784
      %v2786 = vsel %vm2783, %v2785, %v2781
      %v2787 = vrcp.pop %v2345
      %v2788 = vmul.f32 %v2345, %v2787
      %v2789 = vsub.f32 1.0, %v2788
      %v2790 = vmul.f32 %v2787, %v2789
      %v2791 = vadd.f32 %v2787, %v2790
      %vm2792 = vweird.f32 %v2345
      %vm2793 = vweird.f32 %v2787
      %vm2794 = vmor %vm2792, %vm2793
      %v2795 = vsel %vm2794, %v2787, %v2791
      %v2796 = vand.u32 2147483647, %v2345
      %vm2797 = vcmp.eq.f32.partialorder %v2796, 8.507059e+37
      %v2798 = vand.u32 %v2345, 2147483648
      %v2799 = vor.u32 1.1754944e-38, %v2798
      %v2800 = vsel %vm2797, %v2799, %v2795
      %v2801 = vrcp.pop %v2350
      %v2802 = vmul.f32 %v2350, %v2801
      %v2803 = vsub.f32 1.0, %v2802
      %v2804 = vmul.f32 %v2801, %v2803
      %v2805 = vadd.f32 %v2801, %v2804
      %vm2806 = vweird.f32 %v2350
      %vm2807 = vweird.f32 %v2801
      %vm2808 = vmor %vm2806, %vm2807
      %v2809 = vsel %vm2808, %v2801, %v2805
      %v2810 = vand.u32 2147483647, %v2350
      %vm2811 = vcmp.eq.f32.partialorder %v2810, 8.507059e+37
      %v2812 = vand.u32 %v2350, 2147483648
      %v2813 = vor.u32 1.1754944e-38, %v2812
      %v2814 = vsel %vm2811, %v2813, %v2809
      %v2815 = vrcp.pop %v2355
      %v2816 = vmul.f32 %v2355, %v2815
      %v2817 = vsub.f32 1.0, %v2816
      %v2818 = vmul.f32 %v2815, %v2817
      %v2819 = vadd.f32 %v2815, %v2818
      %vm2820 = vweird.f32 %v2355
      %vm2821 = vweird.f32 %v2815
      %vm2822 = vmor %vm2820, %vm2821
      %v2823 = vsel %vm2822, %v2815, %v2819
      %v2824 = vand.u32 2147483647, %v2355
      %vm2825 = vcmp.eq.f32.partialorder %v2824, 8.507059e+37
      %v2826 = vand.u32 %v2355, 2147483648
      %v2827 = vor.u32 1.1754944e-38, %v2826
      %v2828 = vsel %vm2825, %v2827, %v2823
      %v2829 = vrcp.pop %v2360
      %v2830 = vmul.f32 %v2360, %v2829
      %v2831 = vsub.f32 1.0, %v2830
      %v2832 = vmul.f32 %v2829, %v2831
      %v2833 = vadd.f32 %v2829, %v2832
      %vm2834 = vweird.f32 %v2360
      %vm2835 = vweird.f32 %v2829
      %vm2836 = vmor %vm2834, %vm2835
      %v2837 = vsel %vm2836, %v2829, %v2833
      %v2838 = vand.u32 2147483647, %v2360
      %vm2839 = vcmp.eq.f32.partialorder %v2838, 8.507059e+37
      %v2840 = vand.u32 %v2360, 2147483648
      %v2841 = vor.u32 1.1754944e-38, %v2840
      %v2842 = vsel %vm2839, %v2841, %v2837
      %v2843 = vrcp.pop %v2365
      %v2844 = vmul.f32 %v2365, %v2843
      %v2845 = vsub.f32 1.0, %v2844
      %v2846 = vmul.f32 %v2843, %v2845
      %v2847 = vadd.f32 %v2843, %v2846
      %vm2848 = vweird.f32 %v2365
      %vm2849 = vweird.f32 %v2843
      %vm2850 = vmor %vm2848, %vm2849
      %v2851 = vsel %vm2850, %v2843, %v2847
      %v2852 = vand.u32 2147483647, %v2365
      %vm2853 = vcmp.eq.f32.partialorder %v2852, 8.507059e+37
      %v2854 = vand.u32 %v2365, 2147483648
      %v2855 = vor.u32 1.1754944e-38, %v2854
      %v2856 = vsel %vm2853, %v2855, %v2851
      %v2857 = vrcp.pop %v2370
      %v2858 = vmul.f32 %v2370, %v2857
      %v2859 = vsub.f32 1.0, %v2858
      %v2860 = vmul.f32 %v2857, %v2859
      %v2861 = vadd.f32 %v2857, %v2860
      %vm2862 = vweird.f32 %v2370
      %vm2863 = vweird.f32 %v2857
      %vm2864 = vmor %vm2862, %vm2863
      %v2865 = vsel %vm2864, %v2857, %v2861
      %v2866 = vand.u32 2147483647, %v2370
      %vm2867 = vcmp.eq.f32.partialorder %v2866, 8.507059e+37
      %v2868 = vand.u32 %v2370, 2147483648
      %v2869 = vor.u32 1.1754944e-38, %v2868
      %v2870 = vsel %vm2867, %v2869, %v2865
      %v2871 = vrcp.pop %v2375
      %v2872 = vmul.f32 %v2375, %v2871
      %v2873 = vsub.f32 1.0, %v2872
      %v2874 = vmul.f32 %v2871, %v2873
      %v2875 = vadd.f32 %v2871, %v2874
      %vm2876 = vweird.f32 %v2375
      %vm2877 = vweird.f32 %v2871
      %vm2878 = vmor %vm2876, %vm2877
      %v2879 = vsel %vm2878, %v2871, %v2875
      %v2880 = vand.u32 2147483647, %v2375
      %vm2881 = vcmp.eq.f32.partialorder %v2880, 8.507059e+37
      %v2882 = vand.u32 %v2375, 2147483648
      %v2883 = vor.u32 1.1754944e-38, %v2882
      %v2884 = vsel %vm2881, %v2883, %v2879
      %v2885 = vrcp.pop %v2380
      %v2886 = vmul.f32 %v2380, %v2885
      %v2887 = vsub.f32 1.0, %v2886
      %v2888 = vmul.f32 %v2885, %v2887
      %v2889 = vadd.f32 %v2885, %v2888
      %vm2890 = vweird.f32 %v2380
      %vm2891 = vweird.f32 %v2885
      %vm2892 = vmor %vm2890, %vm2891
      %v2893 = vsel %vm2892, %v2885, %v2889
      %v2894 = vand.u32 2147483647, %v2380
      %vm2895 = vcmp.eq.f32.partialorder %v2894, 8.507059e+37
      %v2896 = vand.u32 %v2380, 2147483648
      %v2897 = vor.u32 1.1754944e-38, %v2896
      %v2898 = vsel %vm2895, %v2897, %v2893
      %v2899 = vrcp.pop %v2385
      %v2900 = vmul.f32 %v2385, %v2899
      %v2901 = vsub.f32 1.0, %v2900
      %v2902 = vmul.f32 %v2899, %v2901
      %v2903 = vadd.f32 %v2899, %v2902
      %vm2904 = vweird.f32 %v2385
      %vm2905 = vweird.f32 %v2899
      %vm2906 = vmor %vm2904, %vm2905
      %v2907 = vsel %vm2906, %v2899, %v2903
      %v2908 = vand.u32 2147483647, %v2385
      %vm2909 = vcmp.eq.f32.partialorder %v2908, 8.507059e+37
      %v2910 = vand.u32 %v2385, 2147483648
      %v2911 = vor.u32 1.1754944e-38, %v2910
      %v2912 = vsel %vm2909, %v2911, %v2907
      %v2913 = vrcp.pop %v2390
      %v2914 = vmul.f32 %v2390, %v2913
      %v2915 = vsub.f32 1.0, %v2914
      %v2916 = vmul.f32 %v2913, %v2915
      %v2917 = vadd.f32 %v2913, %v2916
      %vm2918 = vweird.f32 %v2390
      %vm2919 = vweird.f32 %v2913
      %vm2920 = vmor %vm2918, %vm2919
      %v2921 = vsel %vm2920, %v2913, %v2917
      %v2922 = vand.u32 2147483647, %v2390
      %vm2923 = vcmp.eq.f32.partialorder %v2922, 8.507059e+37
      %v2924 = vand.u32 %v2390, 2147483648
      %v2925 = vor.u32 1.1754944e-38, %v2924
      %v2926 = vsel %vm2923, %v2925, %v2921
      %v2927 = vrcp.pop %v2395
      %v2928 = vmul.f32 %v2395, %v2927
      %v2929 = vsub.f32 1.0, %v2928
      %v2930 = vmul.f32 %v2927, %v2929
      %v2931 = vadd.f32 %v2927, %v2930
      %vm2932 = vweird.f32 %v2395
      %vm2933 = vweird.f32 %v2927
      %vm2934 = vmor %vm2932, %vm2933
      %v2935 = vsel %vm2934, %v2927, %v2931
      %v2936 = vand.u32 2147483647, %v2395
      %vm2937 = vcmp.eq.f32.partialorder %v2936, 8.507059e+37
      %v2938 = vand.u32 %v2395, 2147483648
      %v2939 = vor.u32 1.1754944e-38, %v2938
      %v2940 = vsel %vm2937, %v2939, %v2935
      %v2941 = vrcp.pop %v2400
      %v2942 = vmul.f32 %v2400, %v2941
      %v2943 = vsub.f32 1.0, %v2942
      %v2944 = vmul.f32 %v2941, %v2943
      %v2945 = vadd.f32 %v2941, %v2944
      %vm2946 = vweird.f32 %v2400
      %vm2947 = vweird.f32 %v2941
      %vm2948 = vmor %vm2946, %vm2947
      %v2949 = vsel %vm2948, %v2941, %v2945
      %v2950 = vand.u32 2147483647, %v2400
      %vm2951 = vcmp.eq.f32.partialorder %v2950, 8.507059e+37
      %v2952 = vand.u32 %v2400, 2147483648
      %v2953 = vor.u32 1.1754944e-38, %v2952
      %v2954 = vsel %vm2951, %v2953, %v2949
      %v2955 = vrcp.pop %v2405
      %v2956 = vmul.f32 %v2405, %v2955
      %v2957 = vsub.f32 1.0, %v2956
      %v2958 = vmul.f32 %v2955, %v2957
      %v2959 = vadd.f32 %v2955, %v2958
      %vm2960 = vweird.f32 %v2405
      %vm2961 = vweird.f32 %v2955
      %vm2962 = vmor %vm2960, %vm2961
      %v2963 = vsel %vm2962, %v2955, %v2959
      %v2964 = vand.u32 2147483647, %v2405
      %vm2965 = vcmp.eq.f32.partialorder %v2964, 8.507059e+37
      %v2966 = vand.u32 %v2405, 2147483648
      %v2967 = vor.u32 1.1754944e-38, %v2966
      %v2968 = vsel %vm2965, %v2967, %v2963
      %v2969 = vrcp.pop %v2410
      %v2970 = vmul.f32 %v2410, %v2969
      %v2971 = vsub.f32 1.0, %v2970
      %v2972 = vmul.f32 %v2969, %v2971
      %v2973 = vadd.f32 %v2969, %v2972
      %vm2974 = vweird.f32 %v2410
      %vm2975 = vweird.f32 %v2969
      %vm2976 = vmor %vm2974, %vm2975
      %v2977 = vsel %vm2976, %v2969, %v2973
      %v2978 = vand.u32 2147483647, %v2410
      %vm2979 = vcmp.eq.f32.partialorder %v2978, 8.507059e+37
      %v2980 = vand.u32 %v2410, 2147483648
      %v2981 = vor.u32 1.1754944e-38, %v2980
      %v2982 = vsel %vm2979, %v2981, %v2977
      %v2983 = vrcp.pop %v2415
      %v2984 = vmul.f32 %v2415, %v2983
      %v2985 = vsub.f32 1.0, %v2984
      %v2986 = vmul.f32 %v2983, %v2985
      %v2987 = vadd.f32 %v2983, %v2986
      %vm2988 = vweird.f32 %v2415
      %vm2989 = vweird.f32 %v2983
      %vm2990 = vmor %vm2988, %vm2989
      %v2991 = vsel %vm2990, %v2983, %v2987
      %v2992 = vand.u32 2147483647, %v2415
      %vm2993 = vcmp.eq.f32.partialorder %v2992, 8.507059e+37
      %v2994 = vand.u32 %v2415, 2147483648
      %v2995 = vor.u32 1.1754944e-38, %v2994
      %v2996 = vsel %vm2993, %v2995, %v2991
      %v2997 = vrcp.pop %v2420
      %v2998 = vmul.f32 %v2420, %v2997
      %v2999 = vsub.f32 1.0, %v2998
      %v3000 = vmul.f32 %v2997, %v2999
      %v3001 = vadd.f32 %v2997, %v3000
      %vm3002 = vweird.f32 %v2420
      %vm3003 = vweird.f32 %v2997
      %vm3004 = vmor %vm3002, %vm3003
      %v3005 = vsel %vm3004, %v2997, %v3001
      %v3006 = vand.u32 2147483647, %v2420
      %vm3007 = vcmp.eq.f32.partialorder %v3006, 8.507059e+37
      %v3008 = vand.u32 %v2420, 2147483648
      %v3009 = vor.u32 1.1754944e-38, %v3008
      %v3010 = vsel %vm3007, %v3009, %v3005
      %v3011 = vrcp.pop %v2425
      %v3012 = vmul.f32 %v2425, %v3011
      %v3013 = vsub.f32 1.0, %v3012
      %v3014 = vmul.f32 %v3011, %v3013
      %v3015 = vadd.f32 %v3011, %v3014
      %vm3016 = vweird.f32 %v2425
      %vm3017 = vweird.f32 %v3011
      %vm3018 = vmor %vm3016, %vm3017
      %v3019 = vsel %vm3018, %v3011, %v3015
      %v3020 = vand.u32 2147483647, %v2425
      %vm3021 = vcmp.eq.f32.partialorder %v3020, 8.507059e+37
      %v3022 = vand.u32 %v2425, 2147483648
      %v3023 = vor.u32 1.1754944e-38, %v3022
      %v3024 = vsel %vm3021, %v3023, %v3019
      %v3025 = vrcp.pop %v2430
      %v3026 = vmul.f32 %v2430, %v3025
      %v3027 = vsub.f32 1.0, %v3026
      %v3028 = vmul.f32 %v3025, %v3027
      %v3029 = vadd.f32 %v3025, %v3028
      %vm3030 = vweird.f32 %v2430
      %vm3031 = vweird.f32 %v3025
      %vm3032 = vmor %vm3030, %vm3031
      %v3033 = vsel %vm3032, %v3025, %v3029
      %v3034 = vand.u32 2147483647, %v2430
      %vm3035 = vcmp.eq.f32.partialorder %v3034, 8.507059e+37
      %v3036 = vand.u32 %v2430, 2147483648
      %v3037 = vor.u32 1.1754944e-38, %v3036
      %v3038 = vsel %vm3035, %v3037, %v3033
      %v3039 = vrcp.pop %v2435
      %v3040 = vmul.f32 %v2435, %v3039
      %v3041 = vsub.f32 1.0, %v3040
      %v3042 = vmul.f32 %v3039, %v3041
      %v3043 = vadd.f32 %v3039, %v3042
      %vm3044 = vweird.f32 %v2435
      %vm3045 = vweird.f32 %v3039
      %vm3046 = vmor %vm3044, %vm3045
      %v3047 = vsel %vm3046, %v3039, %v3043
      %v3048 = vand.u32 2147483647, %v2435
      %vm3049 = vcmp.eq.f32.partialorder %v3048, 8.507059e+37
      %v3050 = vand.u32 %v2435, 2147483648
      %v3051 = vor.u32 1.1754944e-38, %v3050
      %v3052 = vsel %vm3049, %v3051, %v3047
      %v3053 = vrcp.pop %v2440
      %v3054 = vmul.f32 %v2440, %v3053
      %v3055 = vsub.f32 1.0, %v3054
      %v3056 = vmul.f32 %v3053, %v3055
      %v3057 = vadd.f32 %v3053, %v3056
      %vm3058 = vweird.f32 %v2440
      %vm3059 = vweird.f32 %v3053
      %vm3060 = vmor %vm3058, %vm3059
      %v3061 = vsel %vm3060, %v3053, %v3057
      %v3062 = vand.u32 2147483647, %v2440
      %vm3063 = vcmp.eq.f32.partialorder %v3062, 8.507059e+37
      %v3064 = vand.u32 %v2440, 2147483648
      %v3065 = vor.u32 1.1754944e-38, %v3064
      %v3066 = vsel %vm3063, %v3065, %v3061
      %v3067 = vrcp.pop %v2445
      %v3068 = vmul.f32 %v2445, %v3067
      %v3069 = vsub.f32 1.0, %v3068
      %v3070 = vmul.f32 %v3067, %v3069
      %v3071 = vadd.f32 %v3067, %v3070
      %vm3072 = vweird.f32 %v2445
      %vm3073 = vweird.f32 %v3067
      %vm3074 = vmor %vm3072, %vm3073
      %v3075 = vsel %vm3074, %v3067, %v3071
      %v3076 = vand.u32 2147483647, %v2445
      %vm3077 = vcmp.eq.f32.partialorder %v3076, 8.507059e+37
      %v3078 = vand.u32 %v2445, 2147483648
      %v3079 = vor.u32 1.1754944e-38, %v3078
      %v3080 = vsel %vm3077, %v3079, %v3075
      %v3081 = vrcp.pop %v2450
      %v3082 = vmul.f32 %v2450, %v3081
      %v3083 = vsub.f32 1.0, %v3082
      %v3084 = vmul.f32 %v3081, %v3083
      %v3085 = vadd.f32 %v3081, %v3084
      %vm3086 = vweird.f32 %v2450
      %vm3087 = vweird.f32 %v3081
      %vm3088 = vmor %vm3086, %vm3087
      %v3089 = vsel %vm3088, %v3081, %v3085
      %v3090 = vand.u32 2147483647, %v2450
      %vm3091 = vcmp.eq.f32.partialorder %v3090, 8.507059e+37
      %v3092 = vand.u32 %v2450, 2147483648
      %v3093 = vor.u32 1.1754944e-38, %v3092
      %v3094 = vsel %vm3091, %v3093, %v3089
      %v3095 = vrcp.pop %v2455
      %v3096 = vmul.f32 %v2455, %v3095
      %v3097 = vsub.f32 1.0, %v3096
      %v3098 = vmul.f32 %v3095, %v3097
      %v3099 = vadd.f32 %v3095, %v3098
      %vm3100 = vweird.f32 %v2455
      %vm3101 = vweird.f32 %v3095
      %vm3102 = vmor %vm3100, %vm3101
      %v3103 = vsel %vm3102, %v3095, %v3099
      %v3104 = vand.u32 2147483647, %v2455
      %vm3105 = vcmp.eq.f32.partialorder %v3104, 8.507059e+37
      %v3106 = vand.u32 %v2455, 2147483648
      %v3107 = vor.u32 1.1754944e-38, %v3106
      %v3108 = vsel %vm3105, %v3107, %v3103
      %v3109 = vrcp.pop %v2460
      %v3110 = vmul.f32 %v2460, %v3109
      %v3111 = vsub.f32 1.0, %v3110
      %v3112 = vmul.f32 %v3109, %v3111
      %v3113 = vadd.f32 %v3109, %v3112
      %vm3114 = vweird.f32 %v2460
      %vm3115 = vweird.f32 %v3109
      %vm3116 = vmor %vm3114, %vm3115
      %v3117 = vsel %vm3116, %v3109, %v3113
      %v3118 = vand.u32 2147483647, %v2460
      %vm3119 = vcmp.eq.f32.partialorder %v3118, 8.507059e+37
      %v3120 = vand.u32 %v2460, 2147483648
      %v3121 = vor.u32 1.1754944e-38, %v3120
      %v3122 = vsel %vm3119, %v3121, %v3117
      %v3123 = vrcp.pop %v2465
      %v3124 = vmul.f32 %v2465, %v3123
      %v3125 = vsub.f32 1.0, %v3124
      %v3126 = vmul.f32 %v3123, %v3125
      %v3127 = vadd.f32 %v3123, %v3126
      %vm3128 = vweird.f32 %v2465
      %vm3129 = vweird.f32 %v3123
      %vm3130 = vmor %vm3128, %vm3129
      %v3131 = vsel %vm3130, %v3123, %v3127
      %v3132 = vand.u32 2147483647, %v2465
      %vm3133 = vcmp.eq.f32.partialorder %v3132, 8.507059e+37
      %v3134 = vand.u32 %v2465, 2147483648
      %v3135 = vor.u32 1.1754944e-38, %v3134
      %v3136 = vsel %vm3133, %v3135, %v3131
      %v3137 = vrcp.pop %v2470
      %v3138 = vmul.f32 %v2470, %v3137
      %v3139 = vsub.f32 1.0, %v3138
      %v3140 = vmul.f32 %v3137, %v3139
      %v3141 = vadd.f32 %v3137, %v3140
      %vm3142 = vweird.f32 %v2470
      %vm3143 = vweird.f32 %v3137
      %vm3144 = vmor %vm3142, %vm3143
      %v3145 = vsel %vm3144, %v3137, %v3141
      %v3146 = vand.u32 2147483647, %v2470
      %vm3147 = vcmp.eq.f32.partialorder %v3146, 8.507059e+37
      %v3148 = vand.u32 %v2470, 2147483648
      %v3149 = vor.u32 1.1754944e-38, %v3148
      %v3150 = vsel %vm3147, %v3149, %v3145
      %v3151 = vrcp.pop %v2475
      %v3152 = vmul.f32 %v2475, %v3151
      %v3153 = vsub.f32 1.0, %v3152
      %v3154 = vmul.f32 %v3151, %v3153
      %v3155 = vadd.f32 %v3151, %v3154
      %vm3156 = vweird.f32 %v2475
      %vm3157 = vweird.f32 %v3151
      %vm3158 = vmor %vm3156, %vm3157
      %v3159 = vsel %vm3158, %v3151, %v3155
      %v3160 = vand.u32 2147483647, %v2475
      %vm3161 = vcmp.eq.f32.partialorder %v3160, 8.507059e+37
      %v3162 = vand.u32 %v2475, 2147483648
      %v3163 = vor.u32 1.1754944e-38, %v3162
      %v3164 = vsel %vm3161, %v3163, %v3159
      %v3165 = vrcp.pop %v2480
      %v3166 = vmul.f32 %v2480, %v3165
      %v3167 = vsub.f32 1.0, %v3166
      %v3168 = vmul.f32 %v3165, %v3167
      %v3169 = vadd.f32 %v3165, %v3168
      %vm3170 = vweird.f32 %v2480
      %vm3171 = vweird.f32 %v3165
      %vm3172 = vmor %vm3170, %vm3171
      %v3173 = vsel %vm3172, %v3165, %v3169
      %v3174 = vand.u32 2147483647, %v2480
      %vm3175 = vcmp.eq.f32.partialorder %v3174, 8.507059e+37
      %v3176 = vand.u32 %v2480, 2147483648
      %v3177 = vor.u32 1.1754944e-38, %v3176
      %v3178 = vsel %vm3175, %v3177, %v3173
      %v3179 = vrcp.pop %v2485
      %v3180 = vmul.f32 %v2485, %v3179
      %v3181 = vsub.f32 1.0, %v3180
      %v3182 = vmul.f32 %v3179, %v3181
      %v3183 = vadd.f32 %v3179, %v3182
      %vm3184 = vweird.f32 %v2485
      %vm3185 = vweird.f32 %v3179
      %vm3186 = vmor %vm3184, %vm3185
      %v3187 = vsel %vm3186, %v3179, %v3183
      %v3188 = vand.u32 2147483647, %v2485
      %vm3189 = vcmp.eq.f32.partialorder %v3188, 8.507059e+37
      %v3190 = vand.u32 %v2485, 2147483648
      %v3191 = vor.u32 1.1754944e-38, %v3190
      %v3192 = vsel %vm3189, %v3191, %v3187
      %v3193 = vrcp.pop %v2490
      %v3194 = vmul.f32 %v2490, %v3193
      %v3195 = vsub.f32 1.0, %v3194
      %v3196 = vmul.f32 %v3193, %v3195
      %v3197 = vadd.f32 %v3193, %v3196
      %vm3198 = vweird.f32 %v2490
      %vm3199 = vweird.f32 %v3193
      %vm3200 = vmor %vm3198, %vm3199
      %v3201 = vsel %vm3200, %v3193, %v3197
      %v3202 = vand.u32 2147483647, %v2490
      %vm3203 = vcmp.eq.f32.partialorder %v3202, 8.507059e+37
      %v3204 = vand.u32 %v2490, 2147483648
      %v3205 = vor.u32 1.1754944e-38, %v3204
      %v3206 = vsel %vm3203, %v3205, %v3201
      %v3207 = vrcp.pop %v2495
      %v3208 = vmul.f32 %v2495, %v3207
      %v3209 = vsub.f32 1.0, %v3208
      %v3210 = vmul.f32 %v3207, %v3209
      %v3211 = vadd.f32 %v3207, %v3210
      %vm3212 = vweird.f32 %v2495
      %vm3213 = vweird.f32 %v3207
      %vm3214 = vmor %vm3212, %vm3213
      %v3215 = vsel %vm3214, %v3207, %v3211
      %v3216 = vand.u32 2147483647, %v2495
      %vm3217 = vcmp.eq.f32.partialorder %v3216, 8.507059e+37
      %v3218 = vand.u32 %v2495, 2147483648
      %v3219 = vor.u32 1.1754944e-38, %v3218
      %v3220 = vsel %vm3217, %v3219, %v3215
      %v3221 = vrcp.pop %v2500
      %v3222 = vmul.f32 %v2500, %v3221
      %v3223 = vsub.f32 1.0, %v3222
      %v3224 = vmul.f32 %v3221, %v3223
      %v3225 = vadd.f32 %v3221, %v3224
      %vm3226 = vweird.f32 %v2500
      %vm3227 = vweird.f32 %v3221
      %vm3228 = vmor %vm3226, %vm3227
      %v3229 = vsel %vm3228, %v3221, %v3225
      %v3230 = vand.u32 2147483647, %v2500
      %vm3231 = vcmp.eq.f32.partialorder %v3230, 8.507059e+37
      %v3232 = vand.u32 %v2500, 2147483648
      %v3233 = vor.u32 1.1754944e-38, %v3232
      %v3234 = vsel %vm3231, %v3233, %v3229
      %v3235 = vrcp.pop %v2505
      %v3236 = vmul.f32 %v2505, %v3235
      %v3237 = vsub.f32 1.0, %v3236
      %v3238 = vmul.f32 %v3235, %v3237
      %v3239 = vadd.f32 %v3235, %v3238
      %vm3240 = vweird.f32 %v2505
      %vm3241 = vweird.f32 %v3235
      %vm3242 = vmor %vm3240, %vm3241
      %v3243 = vsel %vm3242, %v3235, %v3239
      %v3244 = vand.u32 2147483647, %v2505
      %vm3245 = vcmp.eq.f32.partialorder %v3244, 8.507059e+37
      %v3246 = vand.u32 %v2505, 2147483648
      %v3247 = vor.u32 1.1754944e-38, %v3246
      %v3248 = vsel %vm3245, %v3247, %v3243
      %v3249 = vrcp.pop %v2510
      %v3250 = vmul.f32 %v2510, %v3249
      %v3251 = vsub.f32 1.0, %v3250
      %v3252 = vmul.f32 %v3249, %v3251
      %v3253 = vadd.f32 %v3249, %v3252
      %vm3254 = vweird.f32 %v2510
      %vm3255 = vweird.f32 %v3249
      %vm3256 = vmor %vm3254, %vm3255
      %v3257 = vsel %vm3256, %v3249, %v3253
      %v3258 = vand.u32 2147483647, %v2510
      %vm3259 = vcmp.eq.f32.partialorder %v3258, 8.507059e+37
      %v3260 = vand.u32 %v2510, 2147483648
      %v3261 = vor.u32 1.1754944e-38, %v3260
      %v3262 = vsel %vm3259, %v3261, %v3257
      %v3263 = vrcp.pop %v2515
      %v3264 = vmul.f32 %v2515, %v3263
      %v3265 = vsub.f32 1.0, %v3264
      %v3266 = vmul.f32 %v3263, %v3265
      %v3267 = vadd.f32 %v3263, %v3266
      %vm3268 = vweird.f32 %v2515
      %vm3269 = vweird.f32 %v3263
      %vm3270 = vmor %vm3268, %vm3269
      %v3271 = vsel %vm3270, %v3263, %v3267
      %v3272 = vand.u32 2147483647, %v2515
      %vm3273 = vcmp.eq.f32.partialorder %v3272, 8.507059e+37
      %v3274 = vand.u32 %v2515, 2147483648
      %v3275 = vor.u32 1.1754944e-38, %v3274
      %v3276 = vsel %vm3273, %v3275, %v3271
      %v3277 = vrcp.pop %v2520
      %v3278 = vmul.f32 %v2520, %v3277
      %v3279 = vsub.f32 1.0, %v3278
      %v3280 = vmul.f32 %v3277, %v3279
      %v3281 = vadd.f32 %v3277, %v3280
      %vm3282 = vweird.f32 %v2520
      %vm3283 = vweird.f32 %v3277
      %vm3284 = vmor %vm3282, %vm3283
      %v3285 = vsel %vm3284, %v3277, %v3281
      %v3286 = vand.u32 2147483647, %v2520
      %vm3287 = vcmp.eq.f32.partialorder %v3286, 8.507059e+37
      %v3288 = vand.u32 %v2520, 2147483648
      %v3289 = vor.u32 1.1754944e-38, %v3288
      %v3290 = vsel %vm3287, %v3289, %v3285
      %v3291 = vrcp.pop %v2525
      %v3292 = vmul.f32 %v2525, %v3291
      %v3293 = vsub.f32 1.0, %v3292
      %v3294 = vmul.f32 %v3291, %v3293
      %v3295 = vadd.f32 %v3291, %v3294
      %vm3296 = vweird.f32 %v2525
      %vm3297 = vweird.f32 %v3291
      %vm3298 = vmor %vm3296, %vm3297
      %v3299 = vsel %vm3298, %v3291, %v3295
      %v3300 = vand.u32 2147483647, %v2525
      %vm3301 = vcmp.eq.f32.partialorder %v3300, 8.507059e+37
      %v3302 = vand.u32 %v2525, 2147483648
      %v3303 = vor.u32 1.1754944e-38, %v3302
      %v3304 = vsel %vm3301, %v3303, %v3299
      %v3305 = vrcp.pop %v2530
      %v3306 = vmul.f32 %v2530, %v3305
      %v3307 = vsub.f32 1.0, %v3306
      %v3308 = vmul.f32 %v3305, %v3307
      %v3309 = vadd.f32 %v3305, %v3308
      %vm3310 = vweird.f32 %v2530
      %vm3311 = vweird.f32 %v3305
      %vm3312 = vmor %vm3310, %vm3311
      %v3313 = vsel %vm3312, %v3305, %v3309
      %v3314 = vand.u32 2147483647, %v2530
      %vm3315 = vcmp.eq.f32.partialorder %v3314, 8.507059e+37
      %v3316 = vand.u32 %v2530, 2147483648
      %v3317 = vor.u32 1.1754944e-38, %v3316
      %v3318 = vsel %vm3315, %v3317, %v3313
      %v3319 = vrcp.pop %v2535
      %v3320 = vmul.f32 %v2535, %v3319
      %v3321 = vsub.f32 1.0, %v3320
      %v3322 = vmul.f32 %v3319, %v3321
      %v3323 = vadd.f32 %v3319, %v3322
      %vm3324 = vweird.f32 %v2535
      %vm3325 = vweird.f32 %v3319
      %vm3326 = vmor %vm3324, %vm3325
      %v3327 = vsel %vm3326, %v3319, %v3323
      %v3328 = vand.u32 2147483647, %v2535
      %vm3329 = vcmp.eq.f32.partialorder %v3328, 8.507059e+37
      %v3330 = vand.u32 %v2535, 2147483648
      %v3331 = vor.u32 1.1754944e-38, %v3330
      %v3332 = vsel %vm3329, %v3331, %v3327
      %v3333 = vrcp.pop %v2540
      %v3334 = vmul.f32 %v2540, %v3333
      %v3335 = vsub.f32 1.0, %v3334
      %v3336 = vmul.f32 %v3333, %v3335
      %v3337 = vadd.f32 %v3333, %v3336
      %vm3338 = vweird.f32 %v2540
      %vm3339 = vweird.f32 %v3333
      %vm3340 = vmor %vm3338, %vm3339
      %v3341 = vsel %vm3340, %v3333, %v3337
      %v3342 = vand.u32 2147483647, %v2540
      %vm3343 = vcmp.eq.f32.partialorder %v3342, 8.507059e+37
      %v3344 = vand.u32 %v2540, 2147483648
      %v3345 = vor.u32 1.1754944e-38, %v3344
      %v3346 = vsel %vm3343, %v3345, %v3341
      %v3347 = vrcp.pop %v2545
      %v3348 = vmul.f32 %v2545, %v3347
      %v3349 = vsub.f32 1.0, %v3348
      %v3350 = vmul.f32 %v3347, %v3349
      %v3351 = vadd.f32 %v3347, %v3350
      %vm3352 = vweird.f32 %v2545
      %vm3353 = vweird.f32 %v3347
      %vm3354 = vmor %vm3352, %vm3353
      %v3355 = vsel %vm3354, %v3347, %v3351
      %v3356 = vand.u32 2147483647, %v2545
      %vm3357 = vcmp.eq.f32.partialorder %v3356, 8.507059e+37
      %v3358 = vand.u32 %v2545, 2147483648
      %v3359 = vor.u32 1.1754944e-38, %v3358
      %v3360 = vsel %vm3357, %v3359, %v3355
      %v3361 = vrcp.pop %v2550
      %v3362 = vmul.f32 %v2550, %v3361
      %v3363 = vsub.f32 1.0, %v3362
      %v3364 = vmul.f32 %v3361, %v3363
      %v3365 = vadd.f32 %v3361, %v3364
      %vm3366 = vweird.f32 %v2550
      %vm3367 = vweird.f32 %v3361
      %vm3368 = vmor %vm3366, %vm3367
      %v3369 = vsel %vm3368, %v3361, %v3365
      %v3370 = vand.u32 2147483647, %v2550
      %vm3371 = vcmp.eq.f32.partialorder %v3370, 8.507059e+37
      %v3372 = vand.u32 %v2550, 2147483648
      %v3373 = vor.u32 1.1754944e-38, %v3372
      %v3374 = vsel %vm3371, %v3373, %v3369
      %v3375 = vrcp.pop %v2555
      %v3376 = vmul.f32 %v2555, %v3375
      %v3377 = vsub.f32 1.0, %v3376
      %v3378 = vmul.f32 %v3375, %v3377
      %v3379 = vadd.f32 %v3375, %v3378
      %vm3380 = vweird.f32 %v2555
      %vm3381 = vweird.f32 %v3375
      %vm3382 = vmor %vm3380, %vm3381
      %v3383 = vsel %vm3382, %v3375, %v3379
      %v3384 = vand.u32 2147483647, %v2555
      %vm3385 = vcmp.eq.f32.partialorder %v3384, 8.507059e+37
      %v3386 = vand.u32 %v2555, 2147483648
      %v3387 = vor.u32 1.1754944e-38, %v3386
      %v3388 = vsel %vm3385, %v3387, %v3383
      %v3389 = vrcp.pop %v2560
      %v3390 = vmul.f32 %v2560, %v3389
      %v3391 = vsub.f32 1.0, %v3390
      %v3392 = vmul.f32 %v3389, %v3391
      %v3393 = vadd.f32 %v3389, %v3392
      %vm3394 = vweird.f32 %v2560
      %vm3395 = vweird.f32 %v3389
      %vm3396 = vmor %vm3394, %vm3395
      %v3397 = vsel %vm3396, %v3389, %v3393
      %v3398 = vand.u32 2147483647, %v2560
      %vm3399 = vcmp.eq.f32.partialorder %v3398, 8.507059e+37
      %v3400 = vand.u32 %v2560, 2147483648
      %v3401 = vor.u32 1.1754944e-38, %v3400
      %v3402 = vsel %vm3399, %v3401, %v3397
      %v3403 = vrcp.pop %v2565
      %v3404 = vmul.f32 %v2565, %v3403
      %v3405 = vsub.f32 1.0, %v3404
      %v3406 = vmul.f32 %v3403, %v3405
      %v3407 = vadd.f32 %v3403, %v3406
      %vm3408 = vweird.f32 %v2565
      %vm3409 = vweird.f32 %v3403
      %vm3410 = vmor %vm3408, %vm3409
      %v3411 = vsel %vm3410, %v3403, %v3407
      %v3412 = vand.u32 2147483647, %v2565
      %vm3413 = vcmp.eq.f32.partialorder %v3412, 8.507059e+37
      %v3414 = vand.u32 %v2565, 2147483648
      %v3415 = vor.u32 1.1754944e-38, %v3414
      %v3416 = vsel %vm3413, %v3415, %v3411
      %v3417 = vrcp.pop %v2570
      %v3418 = vmul.f32 %v2570, %v3417
      %v3419 = vsub.f32 1.0, %v3418
      %v3420 = vmul.f32 %v3417, %v3419
      %v3421 = vadd.f32 %v3417, %v3420
      %vm3422 = vweird.f32 %v2570
      %vm3423 = vweird.f32 %v3417
      %vm3424 = vmor %vm3422, %vm3423
      %v3425 = vsel %vm3424, %v3417, %v3421
      %v3426 = vand.u32 2147483647, %v2570
      %vm3427 = vcmp.eq.f32.partialorder %v3426, 8.507059e+37
      %v3428 = vand.u32 %v2570, 2147483648
      %v3429 = vor.u32 1.1754944e-38, %v3428
      %v3430 = vsel %vm3427, %v3429, %v3425
      %v3431 = vrcp.pop %v2575
      %v3432 = vmul.f32 %v2575, %v3431
      %v3433 = vsub.f32 1.0, %v3432
      %v3434 = vmul.f32 %v3431, %v3433
      %v3435 = vadd.f32 %v3431, %v3434
      %vm3436 = vweird.f32 %v2575
      %vm3437 = vweird.f32 %v3431
      %vm3438 = vmor %vm3436, %vm3437
      %v3439 = vsel %vm3438, %v3431, %v3435
      %v3440 = vand.u32 2147483647, %v2575
      %vm3441 = vcmp.eq.f32.partialorder %v3440, 8.507059e+37
      %v3442 = vand.u32 %v2575, 2147483648
      %v3443 = vor.u32 1.1754944e-38, %v3442
      %v3444 = vsel %vm3441, %v3443, %v3439
      %v3445 = vrcp.pop %v2580
      %v3446 = vmul.f32 %v2580, %v3445
      %v3447 = vsub.f32 1.0, %v3446
      %v3448 = vmul.f32 %v3445, %v3447
      %v3449 = vadd.f32 %v3445, %v3448
      %vm3450 = vweird.f32 %v2580
      %vm3451 = vweird.f32 %v3445
      %vm3452 = vmor %vm3450, %vm3451
      %v3453 = vsel %vm3452, %v3445, %v3449
      %v3454 = vand.u32 2147483647, %v2580
      %vm3455 = vcmp.eq.f32.partialorder %v3454, 8.507059e+37
      %v3456 = vand.u32 %v2580, 2147483648
      %v3457 = vor.u32 1.1754944e-38, %v3456
      %v3458 = vsel %vm3455, %v3457, %v3453
      %v3459 = vrcp.pop %v2585
      %v3460 = vmul.f32 %v2585, %v3459
      %v3461 = vsub.f32 1.0, %v3460
      %v3462 = vmul.f32 %v3459, %v3461
      %v3463 = vadd.f32 %v3459, %v3462
      %vm3464 = vweird.f32 %v2585
      %vm3465 = vweird.f32 %v3459
      %vm3466 = vmor %vm3464, %vm3465
      %v3467 = vsel %vm3466, %v3459, %v3463
      %v3468 = vand.u32 2147483647, %v2585
      %vm3469 = vcmp.eq.f32.partialorder %v3468, 8.507059e+37
      %v3470 = vand.u32 %v2585, 2147483648
      %v3471 = vor.u32 1.1754944e-38, %v3470
      %v3472 = vsel %vm3469, %v3471, %v3467
      %v3473 = vrcp.pop %v2590
      %v3474 = vmul.f32 %v2590, %v3473
      %v3475 = vsub.f32 1.0, %v3474
      %v3476 = vmul.f32 %v3473, %v3475
      %v3477 = vadd.f32 %v3473, %v3476
      %vm3478 = vweird.f32 %v2590
      %vm3479 = vweird.f32 %v3473
      %vm3480 = vmor %vm3478, %vm3479
      %v3481 = vsel %vm3480, %v3473, %v3477
      %v3482 = vand.u32 2147483647, %v2590
      %vm3483 = vcmp.eq.f32.partialorder %v3482, 8.507059e+37
      %v3484 = vand.u32 %v2590, 2147483648
      %v3485 = vor.u32 1.1754944e-38, %v3484
      %v3486 = vsel %vm3483, %v3485, %v3481
      %v3487 = vmul.f32 %v1760, %v2604
      %v3488 = vmul.f32 %v1762, %v2604
      %v3489 = vmul.f32 %v1764, %v2604
      %v3490 = vmul.f32 %v1766, %v2604
      %v3491 = vmul.f32 %v1768, %v2618
      %v3492 = vmul.f32 %v1770, %v2618
      %v3493 = vmul.f32 %v1772, %v2618
      %v3494 = vmul.f32 %v1774, %v2618
      %v3495 = vmul.f32 %v1776, %v2632
      %v3496 = vmul.f32 %v1778, %v2632
      %v3497 = vmul.f32 %v1780, %v2632
      %v3498 = vmul.f32 %v1782, %v2632
      %v3499 = vmul.f32 %v1784, %v2646
      %v3500 = vmul.f32 %v1786, %v2646
      %v3501 = vmul.f32 %v1788, %v2646
      %v3502 = vmul.f32 %v1790, %v2646
      %v3503 = vmul.f32 %v1792, %v2660
      %v3504 = vmul.f32 %v1794, %v2660
      %v3505 = vmul.f32 %v1796, %v2660
      %v3506 = vmul.f32 %v1798, %v2660
      %v3507 = vmul.f32 %v1800, %v2674
      %v3508 = vmul.f32 %v1802, %v2674
      %v3509 = vmul.f32 %v1804, %v2674
      %v3510 = vmul.f32 %v1806, %v2674
      %v3511 = vmul.f32 %v1808, %v2688
      %v3512 = vmul.f32 %v1810, %v2688
      %v3513 = vmul.f32 %v1812, %v2688
      %v3514 = vmul.f32 %v1814, %v2688
      %v3515 = vmul.f32 %v1816, %v2702
      %v3516 = vmul.f32 %v1818, %v2702
      %v3517 = vmul.f32 %v1820, %v2702
      %v3518 = vmul.f32 %v1822, %v2702
      %v3519 = vmul.f32 %v1824, %v2716
      %v3520 = vmul.f32 %v1826, %v2716
      %v3521 = vmul.f32 %v1828, %v2716
      %v3522 = vmul.f32 %v1830, %v2716
      %v3523 = vmul.f32 %v1832, %v2730
      %v3524 = vmul.f32 %v1834, %v2730
      %v3525 = vmul.f32 %v1836, %v2730
      %v3526 = vmul.f32 %v1838, %v2730
      %v3527 = vmul.f32 %v1840, %v2744
      %v3528 = vmul.f32 %v1842, %v2744
      %v3529 = vmul.f32 %v1844, %v2744
      %v3530 = vmul.f32 %v1846, %v2744
      %v3531 = vmul.f32 %v1848, %v2758
      %v3532 = vmul.f32 %v1850, %v2758
      %v3533 = vmul.f32 %v1852, %v2758
      %v3534 = vmul.f32 %v1854, %v2758
      %v3535 = vmul.f32 %v1856, %v2772
      %v3536 = vmul.f32 %v1858, %v2772
      %v3537 = vmul.f32 %v1860, %v2772
      %v3538 = vmul.f32 %v1862, %v2772
      %v3539 = vmul.f32 %v1864, %v2786
      %v3540 = vmul.f32 %v1866, %v2786
      %v3541 = vmul.f32 %v1868, %v2786
      %v3542 = vmul.f32 %v1870, %v2786
      %v3543 = vmul.f32 %v1872, %v2800
      %v3544 = vmul.f32 %v1874, %v2800
      %v3545 = vmul.f32 %v1876, %v2800
      %v3546 = vmul.f32 %v1878, %v2800
      %v3547 = vmul.f32 %v1880, %v2814
      %v3548 = vmul.f32 %v1882, %v2814
      %v3549 = vmul.f32 %v1884, %v2814
      %v3550 = vmul.f32 %v1886, %v2814
      %v3551 = vmul.f32 %v1888, %v2828
      %v3552 = vmul.f32 %v1890, %v2828
      %v3553 = vmul.f32 %v1892, %v2828
      %v3554 = vmul.f32 %v1894, %v2828
      %v3555 = vmul.f32 %v1896, %v2842
      %v3556 = vmul.f32 %v1898, %v2842
      %v3557 = vmul.f32 %v1900, %v2842
      %v3558 = vmul.f32 %v1902, %v2842
      %v3559 = vmul.f32 %v1904, %v2856
      %v3560 = vmul.f32 %v1906, %v2856
      %v3561 = vmul.f32 %v1908, %v2856
      %v3562 = vmul.f32 %v1910, %v2856
      %v3563 = vmul.f32 %v1912, %v2870
      %v3564 = vmul.f32 %v1914, %v2870
      %v3565 = vmul.f32 %v1916, %v2870
      %v3566 = vmul.f32 %v1918, %v2870
      %v3567 = vmul.f32 %v1920, %v2884
      %v3568 = vmul.f32 %v1922, %v2884
      %v3569 = vmul.f32 %v1924, %v2884
      %v3570 = vmul.f32 %v1926, %v2884
      %v3571 = vmul.f32 %v1928, %v2898
      %v3572 = vmul.f32 %v1930, %v2898
      %v3573 = vmul.f32 %v1932, %v2898
      %v3574 = vmul.f32 %v1934, %v2898
      %v3575 = vmul.f32 %v1936, %v2912
      %v3576 = vmul.f32 %v1938, %v2912
      %v3577 = vmul.f32 %v1940, %v2912
      %v3578 = vmul.f32 %v1942, %v2912
      %v3579 = vmul.f32 %v1944, %v2926
      %v3580 = vmul.f32 %v1946, %v2926
      %v3581 = vmul.f32 %v1948, %v2926
      %v3582 = vmul.f32 %v1950, %v2926
      %v3583 = vmul.f32 %v1952, %v2940
      %v3584 = vmul.f32 %v1954, %v2940
      %v3585 = vmul.f32 %v1956, %v2940
      %v3586 = vmul.f32 %v1958, %v2940
      %v3587 = vmul.f32 %v1960, %v2954
      %v3588 = vmul.f32 %v1962, %v2954
      %v3589 = vmul.f32 %v1964, %v2954
      %v3590 = vmul.f32 %v1966, %v2954
      %v3591 = vmul.f32 %v1968, %v2968
      %v3592 = vmul.f32 %v1970, %v2968
      %v3593 = vmul.f32 %v1972, %v2968
      %v3594 = vmul.f32 %v1974, %v2968
      %v3595 = vmul.f32 %v1976, %v2982
      %v3596 = vmul.f32 %v1978, %v2982
      %v3597 = vmul.f32 %v1980, %v2982
      %v3598 = vmul.f32 %v1982, %v2982
      %v3599 = vmul.f32 %v1984, %v2996
      %v3600 = vmul.f32 %v1986, %v2996
      %v3601 = vmul.f32 %v1988, %v2996
      %v3602 = vmul.f32 %v1990, %v2996
      %v3603 = vmul.f32 %v1992, %v3010
      %v3604 = vmul.f32 %v1994, %v3010
      %v3605 = vmul.f32 %v1996, %v3010
      %v3606 = vmul.f32 %v1998, %v3010
      %v3607 = vmul.f32 %v2000, %v3024
      %v3608 = vmul.f32 %v2002, %v3024
      %v3609 = vmul.f32 %v2004, %v3024
      %v3610 = vmul.f32 %v2006, %v3024
      %v3611 = vmul.f32 %v2008, %v3038
      %v3612 = vmul.f32 %v2010, %v3038
      %v3613 = vmul.f32 %v2012, %v3038
      %v3614 = vmul.f32 %v2014, %v3038
      %v3615 = vmul.f32 %v2016, %v3052
      %v3616 = vmul.f32 %v2018, %v3052
      %v3617 = vmul.f32 %v2020, %v3052
      %v3618 = vmul.f32 %v2022, %v3052
      %v3619 = vmul.f32 %v2024, %v3066
      %v3620 = vmul.f32 %v2026, %v3066
      %v3621 = vmul.f32 %v2028, %v3066
      %v3622 = vmul.f32 %v2030, %v3066
      %v3623 = vmul.f32 %v2032, %v3080
      %v3624 = vmul.f32 %v2034, %v3080
      %v3625 = vmul.f32 %v2036, %v3080
      %v3626 = vmul.f32 %v2038, %v3080
      %v3627 = vmul.f32 %v2040, %v3094
      %v3628 = vmul.f32 %v2042, %v3094
      %v3629 = vmul.f32 %v2044, %v3094
      %v3630 = vmul.f32 %v2046, %v3094
      %v3631 = vmul.f32 %v2048, %v3108
      %v3632 = vmul.f32 %v2050, %v3108
      %v3633 = vmul.f32 %v2052, %v3108
      %v3634 = vmul.f32 %v2054, %v3108
      %v3635 = vmul.f32 %v2056, %v3122
      %v3636 = vmul.f32 %v2058, %v3122
      %v3637 = vmul.f32 %v2060, %v3122
      %v3638 = vmul.f32 %v2062, %v3122
      %v3639 = vmul.f32 %v2064, %v3136
      %v3640 = vmul.f32 %v2066, %v3136
      %v3641 = vmul.f32 %v2068, %v3136
      %v3642 = vmul.f32 %v2070, %v3136
      %v3643 = vmul.f32 %v2072, %v3150
      %v3644 = vmul.f32 %v2074, %v3150
      %v3645 = vmul.f32 %v2076, %v3150
      %v3646 = vmul.f32 %v2078, %v3150
      %v3647 = vmul.f32 %v2080, %v3164
      %v3648 = vmul.f32 %v2082, %v3164
      %v3649 = vmul.f32 %v2084, %v3164
      %v3650 = vmul.f32 %v2086, %v3164
      %v3651 = vmul.f32 %v2088, %v3178
      %v3652 = vmul.f32 %v2090, %v3178
      %v3653 = vmul.f32 %v2092, %v3178
      %v3654 = vmul.f32 %v2094, %v3178
      %v3655 = vmul.f32 %v2096, %v3192
      %v3656 = vmul.f32 %v2098, %v3192
      %v3657 = vmul.f32 %v2100, %v3192
      %v3658 = vmul.f32 %v2102, %v3192
      %v3659 = vmul.f32 %v2104, %v3206
      %v3660 = vmul.f32 %v2106, %v3206
      %v3661 = vmul.f32 %v2108, %v3206
      %v3662 = vmul.f32 %v2110, %v3206
      %v3663 = vmul.f32 %v2112, %v3220
      %v3664 = vmul.f32 %v2114, %v3220
      %v3665 = vmul.f32 %v2116, %v3220
      %v3666 = vmul.f32 %v2118, %v3220
      %v3667 = vmul.f32 %v2120, %v3234
      %v3668 = vmul.f32 %v2122, %v3234
      %v3669 = vmul.f32 %v2124, %v3234
      %v3670 = vmul.f32 %v2126, %v3234
      %v3671 = vmul.f32 %v2128, %v3248
      %v3672 = vmul.f32 %v2130, %v3248
      %v3673 = vmul.f32 %v2132, %v3248
      %v3674 = vmul.f32 %v2134, %v3248
      %v3675 = vmul.f32 %v2136, %v3262
      %v3676 = vmul.f32 %v2138, %v3262
      %v3677 = vmul.f32 %v2140, %v3262
      %v3678 = vmul.f32 %v2142, %v3262
      %v3679 = vmul.f32 %v2144, %v3276
      %v3680 = vmul.f32 %v2146, %v3276
      %v3681 = vmul.f32 %v2148, %v3276
      %v3682 = vmul.f32 %v2150, %v3276
      %v3683 = vmul.f32 %v2152, %v3290
      %v3684 = vmul.f32 %v2154, %v3290
      %v3685 = vmul.f32 %v2156, %v3290
      %v3686 = vmul.f32 %v2158, %v3290
      %v3687 = vmul.f32 %v2160, %v3304
      %v3688 = vmul.f32 %v2162, %v3304
      %v3689 = vmul.f32 %v2164, %v3304
      %v3690 = vmul.f32 %v2166, %v3304
      %v3691 = vmul.f32 %v2168, %v3318
      %v3692 = vmul.f32 %v2170, %v3318
      %v3693 = vmul.f32 %v2172, %v3318
      %v3694 = vmul.f32 %v2174, %v3318
      %v3695 = vmul.f32 %v2176, %v3332
      %v3696 = vmul.f32 %v2178, %v3332
      %v3697 = vmul.f32 %v2180, %v3332
      %v3698 = vmul.f32 %v2182, %v3332
      %v3699 = vmul.f32 %v2184, %v3346
      %v3700 = vmul.f32 %v2186, %v3346
      %v3701 = vmul.f32 %v2188, %v3346
      %v3702 = vmul.f32 %v2190, %v3346
      %v3703 = vmul.f32 %v2192, %v3360
      %v3704 = vmul.f32 %v2194, %v3360
      %v3705 = vmul.f32 %v2196, %v3360
      %v3706 = vmul.f32 %v2198, %v3360
      %v3707 = vmul.f32 %v2200, %v3374
      %v3708 = vmul.f32 %v2202, %v3374
      %v3709 = vmul.f32 %v2204, %v3374
      %v3710 = vmul.f32 %v2206, %v3374
      %v3711 = vmul.f32 %v2208, %v3388
      %v3712 = vmul.f32 %v2210, %v3388
      %v3713 = vmul.f32 %v2212, %v3388
      %v3714 = vmul.f32 %v2214, %v3388
      %v3715 = vmul.f32 %v2216, %v3402
      %v3716 = vmul.f32 %v2218, %v3402
      %v3717 = vmul.f32 %v2220, %v3402
      %v3718 = vmul.f32 %v2222, %v3402
      %v3719 = vmul.f32 %v2224, %v3416
      %v3720 = vmul.f32 %v2226, %v3416
      %v3721 = vmul.f32 %v2228, %v3416
      %v3722 = vmul.f32 %v2230, %v3416
      %v3723 = vmul.f32 %v2232, %v3430
      %v3724 = vmul.f32 %v2234, %v3430
      %v3725 = vmul.f32 %v2236, %v3430
      %v3726 = vmul.f32 %v2238, %v3430
      %v3727 = vmul.f32 %v2240, %v3444
      %v3728 = vmul.f32 %v2242, %v3444
      %v3729 = vmul.f32 %v2244, %v3444
      %v3730 = vmul.f32 %v2246, %v3444
      %v3731 = vmul.f32 %v2248, %v3458
      %v3732 = vmul.f32 %v2250, %v3458
      %v3733 = vmul.f32 %v2252, %v3458
      %v3734 = vmul.f32 %v2254, %v3458
      %v3735 = vmul.f32 %v2256, %v3472
      %v3736 = vmul.f32 %v2258, %v3472
      %v3737 = vmul.f32 %v2260, %v3472
      %v3738 = vmul.f32 %v2262, %v3472
      %v3739 = vmul.f32 %v2264, %v3486
      %v3740 = vmul.f32 %v2266, %v3486
      %v3741 = vmul.f32 %v2268, %v3486
      %v3742 = vmul.f32 %v2270, %v3486
      %v3743 = vpack.c.bf16 %v3491, %v3487
      %v3744 = vpack.c.bf16 %v3492, %v3488
      %v3745 = vpack.c.bf16 %v3493, %v3489
      %v3746 = vpack.c.bf16 %v3494, %v3490
      %v3747 = vpack.c.bf16 %v3499, %v3495
      %v3748 = vpack.c.bf16 %v3500, %v3496
      %v3749 = vpack.c.bf16 %v3501, %v3497
      %v3750 = vpack.c.bf16 %v3502, %v3498
      %v3751 = vpack.c.bf16 %v3507, %v3503
      %v3752 = vpack.c.bf16 %v3508, %v3504
      %v3753 = vpack.c.bf16 %v3509, %v3505
      %v3754 = vpack.c.bf16 %v3510, %v3506
      %v3755 = vpack.c.bf16 %v3515, %v3511
      %v3756 = vpack.c.bf16 %v3516, %v3512
      %v3757 = vpack.c.bf16 %v3517, %v3513
      %v3758 = vpack.c.bf16 %v3518, %v3514
      %v3759 = vpack.c.bf16 %v3523, %v3519
      %v3760 = vpack.c.bf16 %v3524, %v3520
      %v3761 = vpack.c.bf16 %v3525, %v3521
      %v3762 = vpack.c.bf16 %v3526, %v3522
      %v3763 = vpack.c.bf16 %v3531, %v3527
      %v3764 = vpack.c.bf16 %v3532, %v3528
      %v3765 = vpack.c.bf16 %v3533, %v3529
      %v3766 = vpack.c.bf16 %v3534, %v3530
      %v3767 = vpack.c.bf16 %v3539, %v3535
      %v3768 = vpack.c.bf16 %v3540, %v3536
      %v3769 = vpack.c.bf16 %v3541, %v3537
      %v3770 = vpack.c.bf16 %v3542, %v3538
      %v3771 = vpack.c.bf16 %v3547, %v3543
      %v3772 = vpack.c.bf16 %v3548, %v3544
      %v3773 = vpack.c.bf16 %v3549, %v3545
      %v3774 = vpack.c.bf16 %v3550, %v3546
      %v3775 = vpack.c.bf16 %v3555, %v3551
      %v3776 = vpack.c.bf16 %v3556, %v3552
      %v3777 = vpack.c.bf16 %v3557, %v3553
      %v3778 = vpack.c.bf16 %v3558, %v3554
      %v3779 = vpack.c.bf16 %v3563, %v3559
      %v3780 = vpack.c.bf16 %v3564, %v3560
      %v3781 = vpack.c.bf16 %v3565, %v3561
      %v3782 = vpack.c.bf16 %v3566, %v3562
      %v3783 = vpack.c.bf16 %v3571, %v3567
      %v3784 = vpack.c.bf16 %v3572, %v3568
      %v3785 = vpack.c.bf16 %v3573, %v3569
      %v3786 = vpack.c.bf16 %v3574, %v3570
      %v3787 = vpack.c.bf16 %v3579, %v3575
      %v3788 = vpack.c.bf16 %v3580, %v3576
      %v3789 = vpack.c.bf16 %v3581, %v3577
      %v3790 = vpack.c.bf16 %v3582, %v3578
      %v3791 = vpack.c.bf16 %v3587, %v3583
      %v3792 = vpack.c.bf16 %v3588, %v3584
      %v3793 = vpack.c.bf16 %v3589, %v3585
      %v3794 = vpack.c.bf16 %v3590, %v3586
      %v3795 = vpack.c.bf16 %v3595, %v3591
      %v3796 = vpack.c.bf16 %v3596, %v3592
      %v3797 = vpack.c.bf16 %v3597, %v3593
      %v3798 = vpack.c.bf16 %v3598, %v3594
      %v3799 = vpack.c.bf16 %v3603, %v3599
      %v3800 = vpack.c.bf16 %v3604, %v3600
      %v3801 = vpack.c.bf16 %v3605, %v3601
      %v3802 = vpack.c.bf16 %v3606, %v3602
      %v3803 = vpack.c.bf16 %v3611, %v3607
      %v3804 = vpack.c.bf16 %v3612, %v3608
      %v3805 = vpack.c.bf16 %v3613, %v3609
      %v3806 = vpack.c.bf16 %v3614, %v3610
      %v3807 = vpack.c.bf16 %v3619, %v3615
      %v3808 = vpack.c.bf16 %v3620, %v3616
      %v3809 = vpack.c.bf16 %v3621, %v3617
      %v3810 = vpack.c.bf16 %v3622, %v3618
      %v3811 = vpack.c.bf16 %v3627, %v3623
      %v3812 = vpack.c.bf16 %v3628, %v3624
      %v3813 = vpack.c.bf16 %v3629, %v3625
      %v3814 = vpack.c.bf16 %v3630, %v3626
      %v3815 = vpack.c.bf16 %v3635, %v3631
      %v3816 = vpack.c.bf16 %v3636, %v3632
      %v3817 = vpack.c.bf16 %v3637, %v3633
      %v3818 = vpack.c.bf16 %v3638, %v3634
      %v3819 = vpack.c.bf16 %v3643, %v3639
      %v3820 = vpack.c.bf16 %v3644, %v3640
      %v3821 = vpack.c.bf16 %v3645, %v3641
      %v3822 = vpack.c.bf16 %v3646, %v3642
      %v3823 = vpack.c.bf16 %v3651, %v3647
      %v3824 = vpack.c.bf16 %v3652, %v3648
      %v3825 = vpack.c.bf16 %v3653, %v3649
      %v3826 = vpack.c.bf16 %v3654, %v3650
      %v3827 = vpack.c.bf16 %v3659, %v3655
      %v3828 = vpack.c.bf16 %v3660, %v3656
      %v3829 = vpack.c.bf16 %v3661, %v3657
      %v3830 = vpack.c.bf16 %v3662, %v3658
      %v3831 = vpack.c.bf16 %v3667, %v3663
      %v3832 = vpack.c.bf16 %v3668, %v3664
      %v3833 = vpack.c.bf16 %v3669, %v3665
      %v3834 = vpack.c.bf16 %v3670, %v3666
      %v3835 = vpack.c.bf16 %v3675, %v3671
      %v3836 = vpack.c.bf16 %v3676, %v3672
      %v3837 = vpack.c.bf16 %v3677, %v3673
      %v3838 = vpack.c.bf16 %v3678, %v3674
      %v3839 = vpack.c.bf16 %v3683, %v3679
      %v3840 = vpack.c.bf16 %v3684, %v3680
      %v3841 = vpack.c.bf16 %v3685, %v3681
      %v3842 = vpack.c.bf16 %v3686, %v3682
      %v3843 = vpack.c.bf16 %v3691, %v3687
      %v3844 = vpack.c.bf16 %v3692, %v3688
      %v3845 = vpack.c.bf16 %v3693, %v3689
      %v3846 = vpack.c.bf16 %v3694, %v3690
      %v3847 = vpack.c.bf16 %v3699, %v3695
      %v3848 = vpack.c.bf16 %v3700, %v3696
      %v3849 = vpack.c.bf16 %v3701, %v3697
      %v3850 = vpack.c.bf16 %v3702, %v3698
      %v3851 = vpack.c.bf16 %v3707, %v3703
      %v3852 = vpack.c.bf16 %v3708, %v3704
      %v3853 = vpack.c.bf16 %v3709, %v3705
      %v3854 = vpack.c.bf16 %v3710, %v3706
      %v3855 = vpack.c.bf16 %v3715, %v3711
      %v3856 = vpack.c.bf16 %v3716, %v3712
      %v3857 = vpack.c.bf16 %v3717, %v3713
      %v3858 = vpack.c.bf16 %v3718, %v3714
      %v3859 = vpack.c.bf16 %v3723, %v3719
      %v3860 = vpack.c.bf16 %v3724, %v3720
      %v3861 = vpack.c.bf16 %v3725, %v3721
      %v3862 = vpack.c.bf16 %v3726, %v3722
      %v3863 = vpack.c.bf16 %v3731, %v3727
      %v3864 = vpack.c.bf16 %v3732, %v3728
      %v3865 = vpack.c.bf16 %v3733, %v3729
      %v3866 = vpack.c.bf16 %v3734, %v3730
      %v3867 = vpack.c.bf16 %v3739, %v3735
      %v3868 = vpack.c.bf16 %v3740, %v3736
      %v3869 = vpack.c.bf16 %v3741, %v3737
      %v3870 = vpack.c.bf16 %v3742, %v3738
      %v3871 = vld [vmem:[%s166] sm:$0xff]
      %v3872 = vld [vmem:[%s166 + $0x8] sm:$0xff]
      %v3873 = vld [vmem:[%s166 + $0x10] sm:$0xff]
      %v3874 = vld [vmem:[%s166 + $0x18] sm:$0xff]
      %3875 = vmatpush.bf16.xpose.msra.mxu0 %v3771
      %3876 = vmatpush.bf16.xpose.msra.mxu0 %v3767
      %3877 = vmatpush.bf16.xpose.msra.mxu0 %v3763
      %3878 = vmatpush.bf16.xpose.msra.mxu0 %v3759
      %3879 = vmatpush.bf16.xpose.msra.mxu0 %v3755
      %3880 = vmatpush.bf16.xpose.msra.mxu0 %v3751
      %3881 = vmatpush.bf16.xpose.msra.mxu0 %v3747
      %3882 = vmatpush.bf16.xpose.msra.mxu0 %v3743
      %3883 = vmatmul.bf16.gmra.mxu0 %v346
      %v3884 = vpop.f32.mrf.mxu0
      %v3885 = vadd.f32 %v3871, %v3884
      %v3886 = vpop.f32.mrf.mxu0
      %3887 = vdwg.mxu0
      %3888 = vmatpush.bf16.xpose.msra.mxu0 %v3772
      %3889 = vmatpush.bf16.xpose.msra.mxu0 %v3768
      %3890 = vmatpush.bf16.xpose.msra.mxu0 %v3764
      %3891 = vmatpush.bf16.xpose.msra.mxu0 %v3760
      %3892 = vmatpush.bf16.xpose.msra.mxu0 %v3756
      %3893 = vmatpush.bf16.xpose.msra.mxu0 %v3752
      %3894 = vmatpush.bf16.xpose.msra.mxu0 %v3748
      %3895 = vmatpush.bf16.xpose.msra.mxu0 %v3744
      %3896 = vmatmul.bf16.gmra.mxu0 %v347
      %v3897 = vpop.f32.mrf.mxu0
      %v3898 = vadd.f32 %v3885, %v3897
      %v3899 = vpop.f32.mrf.mxu0
      %3900 = vdwg.mxu0
      %3901 = vmatpush.bf16.xpose.msra.mxu0 %v3773
      %3902 = vmatpush.bf16.xpose.msra.mxu0 %v3769
      %3903 = vmatpush.bf16.xpose.msra.mxu0 %v3765
      %3904 = vmatpush.bf16.xpose.msra.mxu0 %v3761
      %3905 = vmatpush.bf16.xpose.msra.mxu0 %v3757
      %3906 = vmatpush.bf16.xpose.msra.mxu0 %v3753
      %3907 = vmatpush.bf16.xpose.msra.mxu0 %v3749
      %3908 = vmatpush.bf16.xpose.msra.mxu0 %v3745
      %3909 = vmatmul.bf16.gmra.mxu0 %v348
      %v3910 = vpop.f32.mrf.mxu0
      %v3911 = vadd.f32 %v3898, %v3910
      %v3912 = vpop.f32.mrf.mxu0
      %3913 = vdwg.mxu0
      %3914 = vmatpush.bf16.xpose.msra.mxu0 %v3774
      %3915 = vmatpush.bf16.xpose.msra.mxu0 %v3770
      %3916 = vmatpush.bf16.xpose.msra.mxu0 %v3766
      %3917 = vmatpush.bf16.xpose.msra.mxu0 %v3762
      %3918 = vmatpush.bf16.xpose.msra.mxu0 %v3758
      %3919 = vmatpush.bf16.xpose.msra.mxu0 %v3754
      %3920 = vmatpush.bf16.xpose.msra.mxu0 %v3750
      %3921 = vmatpush.bf16.xpose.msra.mxu0 %v3746
      %3922 = vmatmul.bf16.gmra.mxu0 %v349
      %v3923 = vpop.f32.mrf.mxu0
      %v3924 = vadd.f32 %v3911, %v3923
      %v3925 = vpop.f32.mrf.mxu0
      %3926 = vdwg.mxu0
      %3927 = vmatpush.bf16.xpose.msra.mxu0 %v3803
      %3928 = vmatpush.bf16.xpose.msra.mxu0 %v3799
      %3929 = vmatpush.bf16.xpose.msra.mxu0 %v3795
      %3930 = vmatpush.bf16.xpose.msra.mxu0 %v3791
      %3931 = vmatpush.bf16.xpose.msra.mxu0 %v3787
      %3932 = vmatpush.bf16.xpose.msra.mxu0 %v3783
      %3933 = vmatpush.bf16.xpose.msra.mxu0 %v3779
      %3934 = vmatpush.bf16.xpose.msra.mxu0 %v3775
      %3935 = vmatmul.bf16.gmra.mxu0 %v346
      %v3936 = vpop.f32.mrf.mxu0
      %v3937 = vadd.f32 %v3872, %v3936
      %v3938 = vpop.f32.mrf.mxu0
      %3939 = vdwg.mxu0
      %3940 = vmatpush.bf16.xpose.msra.mxu0 %v3804
      %3941 = vmatpush.bf16.xpose.msra.mxu0 %v3800
      %3942 = vmatpush.bf16.xpose.msra.mxu0 %v3796
      %3943 = vmatpush.bf16.xpose.msra.mxu0 %v3792
      %3944 = vmatpush.bf16.xpose.msra.mxu0 %v3788
      %3945 = vmatpush.bf16.xpose.msra.mxu0 %v3784
      %3946 = vmatpush.bf16.xpose.msra.mxu0 %v3780
      %3947 = vmatpush.bf16.xpose.msra.mxu0 %v3776
      %3948 = vmatmul.bf16.gmra.mxu0 %v347
      %v3949 = vpop.f32.mrf.mxu0
      %v3950 = vadd.f32 %v3937, %v3949
      %v3951 = vpop.f32.mrf.mxu0
      %3952 = vdwg.mxu0
      %3953 = vmatpush.bf16.xpose.msra.mxu0 %v3805
      %3954 = vmatpush.bf16.xpose.msra.mxu0 %v3801
      %3955 = vmatpush.bf16.xpose.msra.mxu0 %v3797
      %3956 = vmatpush.bf16.xpose.msra.mxu0 %v3793
      %3957 = vmatpush.bf16.xpose.msra.mxu0 %v3789
      %3958 = vmatpush.bf16.xpose.msra.mxu0 %v3785
      %3959 = vmatpush.bf16.xpose.msra.mxu0 %v3781
      %3960 = vmatpush.bf16.xpose.msra.mxu0 %v3777
      %3961 = vmatmul.bf16.gmra.mxu0 %v348
      %v3962 = vpop.f32.mrf.mxu0
      %v3963 = vadd.f32 %v3950, %v3962
      %v3964 = vpop.f32.mrf.mxu0
      %3965 = vdwg.mxu0
      %3966 = vmatpush.bf16.xpose.msra.mxu0 %v3806
      %3967 = vmatpush.bf16.xpose.msra.mxu0 %v3802
      %3968 = vmatpush.bf16.xpose.msra.mxu0 %v3798
      %3969 = vmatpush.bf16.xpose.msra.mxu0 %v3794
      %3970 = vmatpush.bf16.xpose.msra.mxu0 %v3790
      %3971 = vmatpush.bf16.xpose.msra.mxu0 %v3786
      %3972 = vmatpush.bf16.xpose.msra.mxu0 %v3782
      %3973 = vmatpush.bf16.xpose.msra.mxu0 %v3778
      %3974 = vmatmul.bf16.gmra.mxu0 %v349
      %v3975 = vpop.f32.mrf.mxu0
      %v3976 = vadd.f32 %v3963, %v3975
      %v3977 = vpop.f32.mrf.mxu0
      %3978 = vdwg.mxu0
      %3979 = vmatpush.bf16.xpose.msra.mxu0 %v3835
      %3980 = vmatpush.bf16.xpose.msra.mxu0 %v3831
      %3981 = vmatpush.bf16.xpose.msra.mxu0 %v3827
      %3982 = vmatpush.bf16.xpose.msra.mxu0 %v3823
      %3983 = vmatpush.bf16.xpose.msra.mxu0 %v3819
      %3984 = vmatpush.bf16.xpose.msra.mxu0 %v3815
      %3985 = vmatpush.bf16.xpose.msra.mxu0 %v3811
      %3986 = vmatpush.bf16.xpose.msra.mxu0 %v3807
      %3987 = vmatmul.bf16.gmra.mxu0 %v346
      %v3988 = vpop.f32.mrf.mxu0
      %v3989 = vadd.f32 %v3873, %v3988
      %v3990 = vpop.f32.mrf.mxu0
      %3991 = vdwg.mxu0
      %3992 = vmatpush.bf16.xpose.msra.mxu0 %v3836
      %3993 = vmatpush.bf16.xpose.msra.mxu0 %v3832
      %3994 = vmatpush.bf16.xpose.msra.mxu0 %v3828
      %3995 = vmatpush.bf16.xpose.msra.mxu0 %v3824
      %3996 = vmatpush.bf16.xpose.msra.mxu0 %v3820
      %3997 = vmatpush.bf16.xpose.msra.mxu0 %v3816
      %3998 = vmatpush.bf16.xpose.msra.mxu0 %v3812
      %3999 = vmatpush.bf16.xpose.msra.mxu0 %v3808
      %4000 = vmatmul.bf16.gmra.mxu0 %v347
      %v4001 = vpop.f32.mrf.mxu0
      %v4002 = vadd.f32 %v3989, %v4001
      %v4003 = vpop.f32.mrf.mxu0
      %4004 = vdwg.mxu0
      %4005 = vmatpush.bf16.xpose.msra.mxu0 %v3837
      %4006 = vmatpush.bf16.xpose.msra.mxu0 %v3833
      %4007 = vmatpush.bf16.xpose.msra.mxu0 %v3829
      %4008 = vmatpush.bf16.xpose.msra.mxu0 %v3825
      %4009 = vmatpush.bf16.xpose.msra.mxu0 %v3821
      %4010 = vmatpush.bf16.xpose.msra.mxu0 %v3817
      %4011 = vmatpush.bf16.xpose.msra.mxu0 %v3813
      %4012 = vmatpush.bf16.xpose.msra.mxu0 %v3809
      %4013 = vmatmul.bf16.gmra.mxu0 %v348
      %v4014 = vpop.f32.mrf.mxu0
      %v4015 = vadd.f32 %v4002, %v4014
      %v4016 = vpop.f32.mrf.mxu0
      %4017 = vdwg.mxu0
      %4018 = vmatpush.bf16.xpose.msra.mxu0 %v3838
      %4019 = vmatpush.bf16.xpose.msra.mxu0 %v3834
      %4020 = vmatpush.bf16.xpose.msra.mxu0 %v3830
      %4021 = vmatpush.bf16.xpose.msra.mxu0 %v3826
      %4022 = vmatpush.bf16.xpose.msra.mxu0 %v3822
      %4023 = vmatpush.bf16.xpose.msra.mxu0 %v3818
      %4024 = vmatpush.bf16.xpose.msra.mxu0 %v3814
      %4025 = vmatpush.bf16.xpose.msra.mxu0 %v3810
      %4026 = vmatmul.bf16.gmra.mxu0 %v349
      %v4027 = vpop.f32.mrf.mxu0
      %v4028 = vadd.f32 %v4015, %v4027
      %v4029 = vpop.f32.mrf.mxu0
      %4030 = vdwg.mxu0
      %4031 = vmatpush.bf16.xpose.msra.mxu0 %v3867
      %4032 = vmatpush.bf16.xpose.msra.mxu0 %v3863
      %4033 = vmatpush.bf16.xpose.msra.mxu0 %v3859
      %4034 = vmatpush.bf16.xpose.msra.mxu0 %v3855
      %4035 = vmatpush.bf16.xpose.msra.mxu0 %v3851
      %4036 = vmatpush.bf16.xpose.msra.mxu0 %v3847
      %4037 = vmatpush.bf16.xpose.msra.mxu0 %v3843
      %4038 = vmatpush.bf16.xpose.msra.mxu0 %v3839
      %4039 = vmatmul.bf16.gmra.mxu0 %v346
      %v4040 = vpop.f32.mrf.mxu0
      %v4041 = vadd.f32 %v3874, %v4040
      %v4042 = vpop.f32.mrf.mxu0
      %4043 = vdwg.mxu0
      %4044 = vmatpush.bf16.xpose.msra.mxu0 %v3868
      %4045 = vmatpush.bf16.xpose.msra.mxu0 %v3864
      %4046 = vmatpush.bf16.xpose.msra.mxu0 %v3860
      %4047 = vmatpush.bf16.xpose.msra.mxu0 %v3856
      %4048 = vmatpush.bf16.xpose.msra.mxu0 %v3852
      %4049 = vmatpush.bf16.xpose.msra.mxu0 %v3848
      %4050 = vmatpush.bf16.xpose.msra.mxu0 %v3844
      %4051 = vmatpush.bf16.xpose.msra.mxu0 %v3840
      %4052 = vmatmul.bf16.gmra.mxu0 %v347
      %v4053 = vpop.f32.mrf.mxu0
      %v4054 = vadd.f32 %v4041, %v4053
      %v4055 = vpop.f32.mrf.mxu0
      %4056 = vdwg.mxu0
      %4057 = vmatpush.bf16.xpose.msra.mxu0 %v3869
      %4058 = vmatpush.bf16.xpose.msra.mxu0 %v3865
      %4059 = vmatpush.bf16.xpose.msra.mxu0 %v3861
      %4060 = vmatpush.bf16.xpose.msra.mxu0 %v3857
      %4061 = vmatpush.bf16.xpose.msra.mxu0 %v3853
      %4062 = vmatpush.bf16.xpose.msra.mxu0 %v3849
      %4063 = vmatpush.bf16.xpose.msra.mxu0 %v3845
      %4064 = vmatpush.bf16.xpose.msra.mxu0 %v3841
      %4065 = vmatmul.bf16.gmra.mxu0 %v348
      %v4066 = vpop.f32.mrf.mxu0
      %v4067 = vadd.f32 %v4054, %v4066
      %v4068 = vpop.f32.mrf.mxu0
      %4069 = vdwg.mxu0
      %4070 = vmatpush.bf16.xpose.msra.mxu0 %v3870
      %4071 = vmatpush.bf16.xpose.msra.mxu0 %v3866
      %4072 = vmatpush.bf16.xpose.msra.mxu0 %v3862
      %4073 = vmatpush.bf16.xpose.msra.mxu0 %v3858
      %4074 = vmatpush.bf16.xpose.msra.mxu0 %v3854
      %4075 = vmatpush.bf16.xpose.msra.mxu0 %v3850
      %4076 = vmatpush.bf16.xpose.msra.mxu0 %v3846
      %4077 = vmatpush.bf16.xpose.msra.mxu0 %v3842
      %4078 = vmatmul.bf16.gmra.mxu0 %v349
      %v4079 = vpop.f32.mrf.mxu0
      %v4080 = vadd.f32 %v4067, %v4079
      %v4081 = vpop.f32.mrf.mxu0
      %4082 = vdwg.mxu0
      %4083 = vst [vmem:[%s172] sm:$0xff] %v3924
      %4084 = vst [vmem:[%s172 + $0x8] sm:$0xff] %v3976
      %4085 = vst [vmem:[%s172 + $0x10] sm:$0xff] %v4028
      %4086 = vst [vmem:[%s172 + $0x18] sm:$0xff] %v4080
      %s4087 = smul.u32 4, %s14
      %p4088 = scmp.lt.s32.totalorder %s4087, 7
      %s4089 = scalar_select %p4088, %s4087, 7
      %s4090 = smul.addr %s4089, 8
      %s4091 = scalar_lea.vmem %s3, %s4090
      // Predicated region
      $region33: #{seblock_forward.1} parent=31 // pred_check
        %p4092 = pneg %p100
      $region34: #{seblock_forward.1} parent=31 // pred_check_branch
        %4094 = sbr.rel (%p4092) target = $region36
      $region35: #{seblock_forward.1} parent=31 // pred_region
        %s4095 = smul.u32 4, %s14
      $region36: #{seblock_forward.1} parent=31 // pred_fallthru
        _
    $region32: #{seblock_forward.1} parent=5 // pred_fallthru
      _
    %p4096 = scmp.le.s32.totalorder 2, %s9
    // Predicated region
    $region37: #{seblock_forward.1} parent=5 // pred_check
      %p4097 = pneg %p4096
    $region38: #{seblock_forward.1} parent=5 // pred_check_branch
      %4099 = sbr.rel (%p4097) target = $region40
    $region39: #{seblock_forward.1} parent=5 // pred_region
      %s4100 = ssub.s32 %s9, 2
      // Predicated region
      $region41: #{seblock_forward.1} parent=39 // pred_check
        %p4101 = pneg %p106
      $region42: #{seblock_forward.1} parent=39 // pred_check_branch
        %4103 = sbr.rel (%p4101) target = $region44
      $region43: #{seblock_forward.1} parent=39 // pred_region
        %s4104 = smul.u32 4, %s15
        %p4105 = scmp.lt.s32.totalorder %s4104, 7
        %s4106 = scalar_select %p4105, %s4104, 7
        %s4107 = smul.addr %s4106, 8
        %s4108 = scalar_lea.vmem %s3, %s4107
      $region44: #{seblock_forward.1} parent=39 // pred_fallthru
        _
    $region40: #{seblock_forward.1} parent=5 // pred_fallthru
      _
  $region6: #{seblock_forward.1} parent=0 // loop_footer
    %s13 = sadd.s32 1, %s9
  $region7: #{seblock_forward.1} parent=0 // loop_footer_branch
    %8 = sbr.rel target = $region3
  $region8: #{seblock_forward.1} parent=0 // loop_exit
    _

</llo_original>
